<compile_context>
chip_gen: v7x
topology: tpu7x:2x2x1
jax: 0.10.0
libtpu: 0.0.40
codegen_flags: <defaults>
</compile_context>

<pallas_src>
import functools
import numpy as np

import jax
import jax.numpy as jnp
from jax.experimental import pallas as pl
from jax.experimental.pallas import tpu as pltpu

# ----------------------- synthetic "args" (small shapes) -----------------------
BZ = 2
IN_H, IN_W = 18, 24             # args.inheight / args.inwidth (divisible by 3)
RATIO = 3
FH, FW = IN_H // RATIO, IN_W // RATIO
HW = FH * FW                    # 48 feature pixels
HWP = 128                       # feature pixels padded to one full lane vector
CIN = 3                         # RGB input
CFEA = 4                        # feature channels (stand-in for newFeature)
CMAT = 8                        # hidden width of the synthetic matching head
NEDGES = 8                      # args.num_deges
MAXINS = 4                      # args.maxinsnum
MIN_DEPTH, MAX_DEPTH = 1.0, 100.0
KIM2COL = CIN * 9               # 3x3 stride-3 conv -> 27-wide im2col contraction
NHEADCOL = 2 * CFEA + 3         # wa | wb | bm1 | wm2 | bm2


# ------------------------------- fused kernel ----------------------------------
def _lea_kernel(p12_ref, ins_ref, pmat_ref, pts_ref, feaw_ref, head_ref, reld_ref,
                out_ref, *, fh, fw, hw, hwp, nedges, maxins, cfea, cmat, kim2col):
    # ---- feature extraction: BOTH images in one 256-lane MXU matmul -----------
    feaw = feaw_ref[...]                                    # [CFEA, K+1] f32
    wfea = feaw[:, :kim2col].astype(jnp.bfloat16)           # [CFEA, K]
    bfea = feaw[:, kim2col:kim2col + 1]                     # [CFEA, 1]
    f12 = jnp.dot(wfea, p12_ref[0],
                  preferred_element_type=jnp.float32) + bfea
    f12 = jnp.maximum(f12, 0.0)                             # [CFEA, 2*HWP]
    f1 = f12[:, :hwp]                                       # image-1 features
    f2 = f12[:, hwp:]                                       # image-2 features
    # NOTE: lanes [hw, hwp) are padding.  They stay finite through the whole
    # pipeline (|d| clamped to 1e-20, ix/iy clipped before floor) and every op
    # below is per-lane, so padded-lane garbage can never leak into valid
    # lanes; the host wrapper slices lanes [0, hw) off the output.

    # ---- eppcore_inflation: 4 full-vreg selects on a [16, HWP] tensor ----------
    ins = ins_ref[0]                                        # [1, HWP] int32
    pe = jnp.zeros((16, hwp), jnp.float32)
    for i in range(maxins):
        # pmat_ref[0, i] is the 12 (padded to 16) P-matrix entries of instance i
        # already broadcast across all lanes by the host.
        pe = jnp.where(ins == i, pmat_ref[0, i], pe)        # [16, HWP]

    # ---- project pts3d = [x*e, y*e, e, 1] with the per-pixel P -----------------
    ptsx = pts_ref[:nedges, :]                              # x * edge   [E, HWP]
    ptsy = pts_ref[nedges:2 * nedges, :]                    # y * edge
    ptsz = pts_ref[2 * nedges:, :]                          # edge
    px = pe[0:1] * ptsx + pe[1:2] * ptsy + pe[2:3] * ptsz + pe[3:4]
    py = pe[4:5] * ptsx + pe[5:6] * ptsy + pe[6:7] * ptsz + pe[7:8]
    d = pe[8:9] * ptsx + pe[9:10] * ptsy + pe[10:11] * ptsz + pe[11:12]

    # torch: sign = d.sign(); sign[sign == 0] = 1
    sign = jnp.where(d < 0.0, -1.0, 1.0)
    d = jnp.maximum(jnp.abs(d), 1e-20) * sign
    inv_d = 1.0 / d
    sx = px * inv_d * (1.0 / 3.0)
    sy = py * inv_d * (1.0 / 3.0)
    gx = (sx / fw - 0.5) * 2.0
    gy = (sy / fh - 0.5) * 2.0

    # ---- F.grid_sample(bilinear, align_corners=False, padding=zeros) taps ------
    # Clamp far-out-of-range samples to 2 px outside the image before floor();
    # exact, because every tap of such a sample is zeroed by the validity mask.
    ix = jnp.clip(((gx + 1.0) * fw - 1.0) * 0.5, -2.0, fw + 1.0)
    iy = jnp.clip(((gy + 1.0) * fh - 1.0) * 0.5, -2.0, fh + 1.0)
    x0 = jnp.floor(ix)
    y0 = jnp.floor(iy)
    wx1 = ix - x0
    wy1 = iy - y0
    corners = ((x0, y0, (1.0 - wx1) * (1.0 - wy1)),
               (x0 + 1.0, y0, wx1 * (1.0 - wy1)),
               (x0, y0 + 1.0, (1.0 - wx1) * wy1),
               (x0 + 1.0, y0 + 1.0, wx1 * wy1))
    tap_idx, tap_wv = [], []
    for cxf, cyf, w in corners:
        valid = ((cxf >= 0.0) & (cxf <= fw - 1.0)
                 & (cyf >= 0.0) & (cyf <= fh - 1.0))
        xi = jnp.clip(cxf, 0.0, fw - 1.0).astype(jnp.int32)
        yi = jnp.clip(cyf, 0.0, fh - 1.0).astype(jnp.int32)
        tap_idx.append(yi * fw + xi)                        # [E, HWP] in [0, hw)
        tap_wv.append(jnp.where(valid, w, 0.0))             # [E, HWP]

    # ---- synthetic matching head: MXU for the linear layers --------------------
    head = head_ref[...]                                    # [CMAT, 2*CFEA+3]
    wa = head[:, :cfea].astype(jnp.bfloat16)                # feature-1 weights
    wb = head[:, cfea:2 * cfea].astype(jnp.bfloat16)        # feature-2 weights
    b1 = head[:, 2 * cfea:2 * cfea + 1]                     # [CMAT, 1]
    w2 = head[:, 2 * cfea + 1:2 * cfea + 2]                 # [CMAT, 1]
    bm2 = head[0:1, 2 * cfea + 2:2 * cfea + 3]              # [1, 1]

    # Edge-invariant halves.  Bilinear resampling is linear, so
    # W1b @ grid_sample(f2) == grid_sample(W1b @ f2): project f2 once, then
    # resample the CMAT-dim projection per edge on the MXU.
    ha = jnp.dot(wa, f1.astype(jnp.bfloat16),
                 preferred_element_type=jnp.float32) + b1   # [CMAT, HWP]
    g2 = jnp.dot(wb, f2.astype(jnp.bfloat16),
                 preferred_element_type=jnp.float32)        # [CMAT, HWP]
    g2b = g2.astype(jnp.bfloat16)

    # ---- per-edge: bilinear one-hot slab -> MXU resample -> cost row -----------
    # Only one [HWP, HWP] slab is live at a time (consumed immediately), so no
    # [NEDGES,128,128] materialization / vreg spills.
    siota = jax.lax.broadcasted_iota(jnp.int32, (hwp, hwp), 0)   # source-pixel id
    cost_rows = []
    for e in range(nedges):
        w_e = jnp.zeros((hwp, hwp), jnp.float32)            # [src, dst] weights
        for t in range(4):
            w_e = w_e + jnp.where(siota == tap_idx[t][e:e + 1, :],
                                  tap_wv[t][e:e + 1, :], 0.0)
        hb = jnp.dot(g2b, w_e.astype(jnp.bfloat16),
                     preferred_element_type=jnp.float32)    # [CMAT, HWP]
        h = jnp.maximum(ha + hb, 0.0)
        cost_rows.append(jnp.sum(h * w2, axis=0, keepdims=True))   # XLU reduce
    cost = jnp.concatenate(cost_rows, axis=0) + bm2         # [E, HWP]

    # ---- Disp: softmax over depth edges + expectation against reld_edges -------
    reld = reld_ref[...]                                    # [E, 1]
    mmax = jnp.max(cost, axis=0, keepdims=True)
    pexp = jnp.exp(cost - mmax)
    num = jnp.sum(pexp * reld, axis=0, keepdims=True)       # full-vreg mul + XLU
    den = jnp.sum(pexp, axis=0, keepdims=True)
    out_ref[0] = num / den                                  # [1, HWP] lane-dense


# --------------------------------- wrapper --------------------------------------
def _im2col_1of3(x):
    """x: [B, CIN, H, W] -> stride-3 3x3 im2col patches [B, CIN*9, HWP] (f32)."""
    bsz = x.shape[0]
    cols = []
    for di in range(RATIO):
        for dj in range(RATIO):
            cols.append(x[:, :, di::RATIO, dj::RATIO])      # [B, CIN, FH, FW]
    p = jnp.stack(cols, axis=2).reshape(bsz, KIM2COL, HW)
    return jnp.pad(p, ((0, 0), (0, 0), (0, HWP - HW)))


def build_forward():
    kern = functools.partial(
        _lea_kernel, fh=FH, fw=FW, hw=HW, hwp=HWP, nedges=NEDGES,
        maxins=MAXINS, cfea=CFEA, cmat=CMAT, kim2col=KIM2COL)

    flops = BZ * (2 * CFEA * KIM2COL * 2 * HWP                       # fused conv
                  + 2 * (2 * CMAT * CFEA * HWP)                      # head dots
                  + NEDGES * (4 * 3 * HWP * HWP                      # one-hot slabs
                              + 2 * CMAT * HWP * HWP                 # resample dots
                              + 4 * CMAT * HWP)                      # relu/reduce
                  + 80 * NEDGES * HWP)                               # proj/sample math
    bytes_accessed = (BZ * (KIM2COL * 2 * HWP * 2 + HWP * 4
                            + MAXINS * 16 * HWP * 4 + HWP * 4)
                      + 3 * NEDGES * HWP * 4 + CFEA * (KIM2COL + 1) * 4
                      + CMAT * NHEADCOL * 4 + NEDGES * 4)
    transcendentals = BZ * NEDGES * HWP

    fused = pl.pallas_call(
        kern,
        out_shape=jax.ShapeDtypeStruct((BZ, 1, HWP), jnp.float32),
        grid=(BZ,),
        in_specs=[
            pl.BlockSpec((1, KIM2COL, 2 * HWP), lambda b: (b, 0, 0)),    # p1||p2 (bf16)
            pl.BlockSpec((1, 1, HWP), lambda b: (b, 0, 0)),              # instance map
            pl.BlockSpec((1, MAXINS, 16, HWP), lambda b: (b, 0, 0, 0)),  # P per instance
            pl.BlockSpec((3 * NEDGES, HWP), lambda b: (0, 0)),           # x*e | y*e | e
            pl.BlockSpec((CFEA, KIM2COL + 1), lambda b: (0, 0)),         # conv W | b
            pl.BlockSpec((CMAT, NHEADCOL), lambda b: (0, 0)),            # head params
            pl.BlockSpec((NEDGES, 1), lambda b: (0, 0)),                 # reld_edges
        ],
        out_specs=pl.BlockSpec((1, 1, HWP), lambda b: (b, 0, 0)),
        compiler_params=pltpu.CompilerParams(
            dimension_semantics=("parallel",)),      # one batch element per TC on v7x
        cost_estimate=pl.CostEstimate(
            flops=int(flops), transcendentals=int(transcendentals),
            bytes_accessed=int(bytes_accessed)),
    )

    def forward(params, x, y, insmap, intrinsic, pose):
        p1 = _im2col_1of3(x)
        p2 = _im2col_1of3(y)
        p12 = jnp.concatenate([p1, p2], axis=2).astype(jnp.bfloat16)   # [B, 27, 256]

        # P = K @ pose @ K^{-1} per instance (tiny 4x4 algebra stays in XLA).
        k_inv = jnp.linalg.inv(intrinsic)
        P = jnp.einsum("bij,bnjk,bkl->bnil", intrinsic, pose, k_inv)   # [B, I, 4, 4]
        pmat = P[:, :, :3, :].reshape(BZ, MAXINS, 12)
        pmat = jnp.pad(pmat, ((0, 0), (0, 0), (0, 4)))                 # 12 -> 16 rows
        pmat_bc = jnp.broadcast_to(pmat[..., None], (BZ, MAXINS, 16, HWP))

        # nearest 1/3 downsample of the sample grid == ::3 subsampling.
        ins = insmap[:, 0, ::RATIO, ::RATIO].reshape(BZ, 1, HW).astype(jnp.int32)
        ins = jnp.pad(ins, ((0, 0), (0, 0), (0, HWP - HW)))

        disp_c = fused(p12, ins, pmat_bc,
                       params["pts"], params["feaw"], params["head"], params["reld"])
        disp_feat = disp_c[:, :, :HW].reshape(BZ, 1, FH, FW)
        # TODO(synk): exact Disp module (trilinear cost-volume upsample before the
        # softmax) is not in the provided source; the expected-depth map is
        # bilinearly upsampled to the input resolution instead.
        return jax.image.resize(disp_feat, (BZ, 1, IN_H, IN_W), method="bilinear")

    return jax.jit(forward)


# ----------------------------- parameters / buffers ------------------------------
def make_params(key):
    k1, k2, k3 = jax.random.split(key, 3)
    wfeaT = 0.1 * jax.random.normal(k1, (CFEA, KIM2COL), jnp.float32)
    bfea = jnp.zeros((CFEA, 1), jnp.float32)
    feaw = jnp.concatenate([wfeaT, bfea], axis=1)                      # [CFEA, K+1]

    wm1 = 0.2 * jax.random.normal(k2, (2 * CFEA, CMAT), jnp.float32)
    wm2 = 0.2 * jax.random.normal(k3, (1, CMAT), jnp.float32)
    head = jnp.zeros((CMAT, NHEADCOL), jnp.float32)
    head = head.at[:, :CFEA].set(wm1[:CFEA].T)                         # wa
    head = head.at[:, CFEA:2 * CFEA].set(wm1[CFEA:].T)                 # wb
    head = head.at[:, 2 * CFEA].set(jnp.zeros((CMAT,), jnp.float32))   # bm1
    head = head.at[:, 2 * CFEA + 1].set(wm2[0])                        # wm2
    head = head.at[0, 2 * CFEA + 2].set(0.0)                           # bm2

    # reld_edges / pts3d buffers, exactly as in __init__ (the nearest 1/3 downsample
    # in get_samplecoords selects the ::3 full-resolution coordinates).
    edges = np.exp(np.linspace(np.log(MIN_DEPTH), np.log(MAX_DEPTH),
                               NEDGES)).astype(np.float32)
    xx, yy = np.meshgrid(range(IN_W), range(IN_H), indexing="xy")
    xs = xx[::RATIO, ::RATIO].astype(np.float32).reshape(-1)           # [HW]
    ys = yy[::RATIO, ::RATIO].astype(np.float32).reshape(-1)
    pts = np.zeros((3 * NEDGES, HWP), np.float32)
    pts[:NEDGES, :HW] = edges[:, None] * xs[None, :]
    pts[NEDGES:2 * NEDGES, :HW] = edges[:, None] * ys[None, :]
    pts[2 * NEDGES:, :HW] = edges[:, None]

    return {
        "feaw": feaw,
        "head": head,
        "pts": jnp.asarray(pts),
        "reld": jnp.asarray(edges).reshape(NEDGES, 1),
    }


# ------------------------------------ main ---------------------------------------
if __name__ == "__main__":
    key = jax.random.PRNGKey(0)
    kp, kx, ky, ki, kt = jax.random.split(key, 5)
    params = make_params(kp)

    x = jax.random.normal(kx, (BZ, CIN, IN_H, IN_W), jnp.float32)
    y = jax.random.normal(ky, (BZ, CIN, IN_H, IN_W), jnp.float32)
    insmap = jax.random.randint(ki, (BZ, 1, IN_H, IN_W), 0, MAXINS, jnp.int32)

    fx = fy = 20.0
    cx, cy = IN_W / 2.0, IN_H / 2.0
    intrinsic = jnp.broadcast_to(
        jnp.array([[fx, 0.0, cx, 0.0],
                   [0.0, fy, cy, 0.0],
                   [0.0, 0.0, 1.0, 0.0],
                   [0.0, 0.0, 0.0, 1.0]], jnp.float32),
        (BZ, 4, 4))
    pose = jnp.tile(jnp.eye(4, dtype=jnp.float32)[None, None], (BZ, MAXINS, 1, 1))
    trans = 0.05 * jax.random.normal(kt, (BZ, MAXINS, 3), jnp.float32)
    pose = pose.at[:, :, 0:3, 3].add(trans)

    forward = build_forward()
    disp = jax.block_until_ready(forward(params, x, y, insmap, intrinsic, pose))

    assert disp.shape == (BZ, 1, IN_H, IN_W)
    assert bool(jnp.all(jnp.isfinite(disp)))
    print("KERNEL_OK")
</pallas_src>

<mosaic_0001>
module attributes {stable_mosaic.version = 11 : i64} {
  func.func @_lea_kernel(%arg0: i32, %arg1: memref<1x27x256xbf16, #tpu.memory_space<vmem>>, %arg2: memref<1x1x128xi32, #tpu.memory_space<vmem>>, %arg3: memref<1x4x16x128xf32, #tpu.memory_space<vmem>>, %arg4: memref<24x128xf32, #tpu.memory_space<vmem>>, %arg5: memref<4x28xf32, #tpu.memory_space<vmem>>, %arg6: memref<8x11xf32, #tpu.memory_space<vmem>>, %arg7: memref<8x1xf32, #tpu.memory_space<vmem>>, %arg8: memref<1x1x128xf32, #tpu.memory_space<vmem>>) attributes {dimension_semantics = [#tpu.dimension_semantics<parallel>], iteration_bounds = array<i64: 2>, scalar_prefetch = 0 : i64, scratch_operands = 0 : i64, tpu.core_type = #tpu.core_type<tc>, window_params = [{transform_indices = @transform_0, window_bounds = array<i64: 1, 27, 256>}, {transform_indices = @transform_1, window_bounds = array<i64: 1, 1, 128>}, {transform_indices = @transform_2, window_bounds = array<i64: 1, 4, 16, 128>}, {pipeline_mode = #tpu.pipeline_mode<synchronous>, transform_indices = @transform_3, window_bounds = array<i64: 24, 128>}, {pipeline_mode = #tpu.pipeline_mode<synchronous>, transform_indices = @transform_4, window_bounds = array<i64: 4, 28>}, {pipeline_mode = #tpu.pipeline_mode<synchronous>, transform_indices = @transform_5, window_bounds = array<i64: 8, 11>}, {pipeline_mode = #tpu.pipeline_mode<synchronous>, transform_indices = @transform_6, window_bounds = array<i64: 8, 1>}, {transform_indices = @transform_7, window_bounds = array<i64: 1, 1, 128>}]} {
    %c0 = arith.constant 0 : index
    %c0_0 = arith.constant 0 : index
    %0 = vector.load %arg5[%c0, %c0_0] : memref<4x28xf32, #tpu.memory_space<vmem>>, vector<4x28xf32>
    %1 = vector.extract_strided_slice %0 {offsets = [0, 0], sizes = [4, 27], strides = [1, 1]} : vector<4x28xf32> to vector<4x27xf32>
    %2 = arith.truncf %1 : vector<4x27xf32> to vector<4x27xbf16>
    %3 = vector.extract_strided_slice %0 {offsets = [0, 27], sizes = [4, 1], strides = [1, 1]} : vector<4x28xf32> to vector<4x1xf32>
    %c0_1 = arith.constant 0 : index
    %c0_2 = arith.constant 0 : index
    %c0_3 = arith.constant 0 : index
    %4 = vector.load %arg1[%c0_1, %c0_2, %c0_3] : memref<1x27x256xbf16, #tpu.memory_space<vmem>>, vector<1x27x256xbf16>
    %5 = vector.shape_cast %4 : vector<1x27x256xbf16> to vector<27x256xbf16>
    %cst = arith.constant dense<0.000000e+00> : vector<4x256xf32>
    %6 = tpu.matmul %2, %5, %cst {dimension_numbers = #tpu.dot_dimension_numbers<[1], [0], [0], [1], [0, 0, 1, 1], [], []>} : vector<4x27xbf16>, vector<27x256xbf16>, vector<4x256xf32> -> vector<4x256xf32>
    %7 = vector.broadcast %3 : vector<4x1xf32> to vector<4x256xf32>
    %8 = arith.addf %6, %7 : vector<4x256xf32>
    %cst_4 = arith.constant 0.000000e+00 : f32
    %9 = vector.broadcast %cst_4 : f32 to vector<4x256xf32>
    %10 = arith.maximumf %8, %9 : vector<4x256xf32>
    %11 = vector.extract_strided_slice %10 {offsets = [0, 0], sizes = [4, 128], strides = [1, 1]} : vector<4x256xf32> to vector<4x128xf32>
    %12 = vector.extract_strided_slice %10 {offsets = [0, 128], sizes = [4, 128], strides = [1, 1]} : vector<4x256xf32> to vector<4x128xf32>
    %c0_5 = arith.constant 0 : index
    %c0_6 = arith.constant 0 : index
    %c0_7 = arith.constant 0 : index
    %13 = vector.load %arg2[%c0_5, %c0_6, %c0_7] : memref<1x1x128xi32, #tpu.memory_space<vmem>>, vector<1x1x128xi32>
    %14 = vector.shape_cast %13 : vector<1x1x128xi32> to vector<1x128xi32>
    %cst_8 = arith.constant 0.000000e+00 : f32
    %15 = vector.broadcast %cst_8 : f32 to vector<16x128xf32>
    %c0_i32 = arith.constant 0 : i32
    %16 = vector.broadcast %c0_i32 : i32 to vector<1x128xi32>
    %17 = arith.cmpi eq, %14, %16 : vector<1x128xi32>
    %c0_9 = arith.constant 0 : index
    %c0_10 = arith.constant 0 : index
    %c0_11 = arith.constant 0 : index
    %c0_12 = arith.constant 0 : index
    %18 = vector.load %arg3[%c0_9, %c0_10, %c0_11, %c0_12] : memref<1x4x16x128xf32, #tpu.memory_space<vmem>>, vector<1x1x16x128xf32>
    %19 = vector.shape_cast %18 : vector<1x1x16x128xf32> to vector<16x128xf32>
    %20 = vector.shape_cast %17 : vector<1x128xi1> to vector<1x128xi1>
    %21 = vector.broadcast %20 : vector<1x128xi1> to vector<16x128xi1>
    %22 = arith.select %21, %19, %15 : vector<16x128xi1>, vector<16x128xf32>
    %c1_i32 = arith.constant 1 : i32
    %23 = vector.broadcast %c1_i32 : i32 to vector<1x128xi32>
    %24 = arith.cmpi eq, %14, %23 : vector<1x128xi32>
    %c0_13 = arith.constant 0 : index
    %c1 = arith.constant 1 : index
    %c0_14 = arith.constant 0 : index
    %c0_15 = arith.constant 0 : index
    %25 = vector.load %arg3[%c0_13, %c1, %c0_14, %c0_15] : memref<1x4x16x128xf32, #tpu.memory_space<vmem>>, vector<1x1x16x128xf32>
    %26 = vector.shape_cast %25 : vector<1x1x16x128xf32> to vector<16x128xf32>
    %27 = vector.shape_cast %24 : vector<1x128xi1> to vector<1x128xi1>
    %28 = vector.broadcast %27 : vector<1x128xi1> to vector<16x128xi1>
    %29 = arith.select %28, %26, %22 : vector<16x128xi1>, vector<16x128xf32>
    %c2_i32 = arith.constant 2 : i32
    %30 = vector.broadcast %c2_i32 : i32 to vector<1x128xi32>
    %31 = arith.cmpi eq, %14, %30 : vector<1x128xi32>
    %c0_16 = arith.constant 0 : index
    %c2 = arith.constant 2 : index
    %c0_17 = arith.constant 0 : index
    %c0_18 = arith.constant 0 : index
    %32 = vector.load %arg3[%c0_16, %c2, %c0_17, %c0_18] : memref<1x4x16x128xf32, #tpu.memory_space<vmem>>, vector<1x1x16x128xf32>
    %33 = vector.shape_cast %32 : vector<1x1x16x128xf32> to vector<16x128xf32>
    %34 = vector.shape_cast %31 : vector<1x128xi1> to vector<1x128xi1>
    %35 = vector.broadcast %34 : vector<1x128xi1> to vector<16x128xi1>
    %36 = arith.select %35, %33, %29 : vector<16x128xi1>, vector<16x128xf32>
    %c3_i32 = arith.constant 3 : i32
    %37 = vector.broadcast %c3_i32 : i32 to vector<1x128xi32>
    %38 = arith.cmpi eq, %14, %37 : vector<1x128xi32>
    %c0_19 = arith.constant 0 : index
    %c3 = arith.constant 3 : index
    %c0_20 = arith.constant 0 : index
    %c0_21 = arith.constant 0 : index
    %39 = vector.load %arg3[%c0_19, %c3, %c0_20, %c0_21] : memref<1x4x16x128xf32, #tpu.memory_space<vmem>>, vector<1x1x16x128xf32>
    %40 = vector.shape_cast %39 : vector<1x1x16x128xf32> to vector<16x128xf32>
    %41 = vector.shape_cast %38 : vector<1x128xi1> to vector<1x128xi1>
    %42 = vector.broadcast %41 : vector<1x128xi1> to vector<16x128xi1>
    %43 = arith.select %42, %40, %36 : vector<16x128xi1>, vector<16x128xf32>
    %c0_22 = arith.constant 0 : index
    %c0_23 = arith.constant 0 : index
    %44 = vector.load %arg4[%c0_22, %c0_23] : memref<24x128xf32, #tpu.memory_space<vmem>>, vector<8x128xf32>
    %c8 = arith.constant 8 : index
    %c0_24 = arith.constant 0 : index
    %45 = vector.load %arg4[%c8, %c0_24] : memref<24x128xf32, #tpu.memory_space<vmem>>, vector<8x128xf32>
    %c16 = arith.constant 16 : index
    %c0_25 = arith.constant 0 : index
    %46 = vector.load %arg4[%c16, %c0_25] : memref<24x128xf32, #tpu.memory_space<vmem>>, vector<8x128xf32>
    %47 = vector.extract_strided_slice %43 {offsets = [0, 0], sizes = [1, 128], strides = [1, 1]} : vector<16x128xf32> to vector<1x128xf32>
    %48 = vector.broadcast %47 : vector<1x128xf32> to vector<8x128xf32>
    %49 = arith.mulf %48, %44 : vector<8x128xf32>
    %50 = vector.extract_strided_slice %43 {offsets = [1, 0], sizes = [1, 128], strides = [1, 1]} : vector<16x128xf32> to vector<1x128xf32>
    %51 = vector.broadcast %50 : vector<1x128xf32> to vector<8x128xf32>
    %52 = arith.mulf %51, %45 : vector<8x128xf32>
    %53 = arith.addf %49, %52 : vector<8x128xf32>
    %54 = vector.extract_strided_slice %43 {offsets = [2, 0], sizes = [1, 128], strides = [1, 1]} : vector<16x128xf32> to vector<1x128xf32>
    %55 = vector.broadcast %54 : vector<1x128xf32> to vector<8x128xf32>
    %56 = arith.mulf %55, %46 : vector<8x128xf32>
    %57 = arith.addf %53, %56 : vector<8x128xf32>
    %58 = vector.extract_strided_slice %43 {offsets = [3, 0], sizes = [1, 128], strides = [1, 1]} : vector<16x128xf32> to vector<1x128xf32>
    %59 = vector.broadcast %58 : vector<1x128xf32> to vector<8x128xf32>
    %60 = arith.addf %57, %59 : vector<8x128xf32>
    %61 = vector.extract_strided_slice %43 {offsets = [4, 0], sizes = [1, 128], strides = [1, 1]} : vector<16x128xf32> to vector<1x128xf32>
    %62 = vector.broadcast %61 : vector<1x128xf32> to vector<8x128xf32>
    %63 = arith.mulf %62, %44 : vector<8x128xf32>
    %64 = vector.extract_strided_slice %43 {offsets = [5, 0], sizes = [1, 128], strides = [1, 1]} : vector<16x128xf32> to vector<1x128xf32>
    %65 = vector.broadcast %64 : vector<1x128xf32> to vector<8x128xf32>
    %66 = arith.mulf %65, %45 : vector<8x128xf32>
    %67 = arith.addf %63, %66 : vector<8x128xf32>
    %68 = vector.extract_strided_slice %43 {offsets = [6, 0], sizes = [1, 128], strides = [1, 1]} : vector<16x128xf32> to vector<1x128xf32>
    %69 = vector.broadcast %68 : vector<1x128xf32> to vector<8x128xf32>
    %70 = arith.mulf %69, %46 : vector<8x128xf32>
    %71 = arith.addf %67, %70 : vector<8x128xf32>
    %72 = vector.extract_strided_slice %43 {offsets = [7, 0], sizes = [1, 128], strides = [1, 1]} : vector<16x128xf32> to vector<1x128xf32>
    %73 = vector.broadcast %72 : vector<1x128xf32> to vector<8x128xf32>
    %74 = arith.addf %71, %73 : vector<8x128xf32>
    %75 = vector.extract_strided_slice %43 {offsets = [8, 0], sizes = [1, 128], strides = [1, 1]} : vector<16x128xf32> to vector<1x128xf32>
    %76 = vector.broadcast %75 : vector<1x128xf32> to vector<8x128xf32>
    %77 = arith.mulf %76, %44 : vector<8x128xf32>
    %78 = vector.extract_strided_slice %43 {offsets = [9, 0], sizes = [1, 128], strides = [1, 1]} : vector<16x128xf32> to vector<1x128xf32>
    %79 = vector.broadcast %78 : vector<1x128xf32> to vector<8x128xf32>
    %80 = arith.mulf %79, %45 : vector<8x128xf32>
    %81 = arith.addf %77, %80 : vector<8x128xf32>
    %82 = vector.extract_strided_slice %43 {offsets = [10, 0], sizes = [1, 128], strides = [1, 1]} : vector<16x128xf32> to vector<1x128xf32>
    %83 = vector.broadcast %82 : vector<1x128xf32> to vector<8x128xf32>
    %84 = arith.mulf %83, %46 : vector<8x128xf32>
    %85 = arith.addf %81, %84 : vector<8x128xf32>
    %86 = vector.extract_strided_slice %43 {offsets = [11, 0], sizes = [1, 128], strides = [1, 1]} : vector<16x128xf32> to vector<1x128xf32>
    %87 = vector.broadcast %86 : vector<1x128xf32> to vector<8x128xf32>
    %88 = arith.addf %85, %87 : vector<8x128xf32>
    %cst_26 = arith.constant 0.000000e+00 : f32
    %89 = vector.broadcast %cst_26 : f32 to vector<8x128xf32>
    %90 = arith.cmpf olt, %88, %89 : vector<8x128xf32>
    %cst_27 = arith.constant -1.000000e+00 : f32
    %cst_28 = arith.constant 1.000000e+00 : f32
    %91 = vector.broadcast %cst_27 : f32 to vector<8x128xf32>
    %92 = vector.broadcast %cst_28 : f32 to vector<8x128xf32>
    %93 = arith.select %90, %91, %92 : vector<8x128xi1>, vector<8x128xf32>
    %94 = math.absf %88 : vector<8x128xf32>
    %cst_29 = arith.constant 9.99999968E-21 : f32
    %95 = vector.broadcast %cst_29 : f32 to vector<8x128xf32>
    %96 = arith.maximumf %94, %95 : vector<8x128xf32>
    %97 = arith.mulf %96, %93 : vector<8x128xf32>
    %cst_30 = arith.constant 1.000000e+00 : f32
    %98 = vector.broadcast %cst_30 : f32 to vector<8x128xf32>
    %99 = arith.divf %98, %97 : vector<8x128xf32>
    %100 = arith.mulf %60, %99 : vector<8x128xf32>
    %cst_31 = arith.constant 0.333333343 : f32
    %101 = vector.broadcast %cst_31 : f32 to vector<8x128xf32>
    %102 = arith.mulf %100, %101 : vector<8x128xf32>
    %103 = arith.mulf %74, %99 : vector<8x128xf32>
    %cst_32 = arith.constant 0.333333343 : f32
    %104 = vector.broadcast %cst_32 : f32 to vector<8x128xf32>
    %105 = arith.mulf %103, %104 : vector<8x128xf32>
    %cst_33 = arith.constant 8.000000e+00 : f32
    %106 = vector.broadcast %cst_33 : f32 to vector<8x128xf32>
    %107 = arith.divf %102, %106 : vector<8x128xf32>
    %cst_34 = arith.constant 5.000000e-01 : f32
    %108 = vector.broadcast %cst_34 : f32 to vector<8x128xf32>
    %109 = arith.subf %107, %108 : vector<8x128xf32>
    %cst_35 = arith.constant 2.000000e+00 : f32
    %110 = vector.broadcast %cst_35 : f32 to vector<8x128xf32>
    %111 = arith.mulf %109, %110 : vector<8x128xf32>
    %cst_36 = arith.constant 6.000000e+00 : f32
    %112 = vector.broadcast %cst_36 : f32 to vector<8x128xf32>
    %113 = arith.divf %105, %112 : vector<8x128xf32>
    %cst_37 = arith.constant 5.000000e-01 : f32
    %114 = vector.broadcast %cst_37 : f32 to vector<8x128xf32>
    %115 = arith.subf %113, %114 : vector<8x128xf32>
    %cst_38 = arith.constant 2.000000e+00 : f32
    %116 = vector.broadcast %cst_38 : f32 to vector<8x128xf32>
    %117 = arith.mulf %115, %116 : vector<8x128xf32>
    %cst_39 = arith.constant 1.000000e+00 : f32
    %118 = vector.broadcast %cst_39 : f32 to vector<8x128xf32>
    %119 = arith.addf %111, %118 : vector<8x128xf32>
    %cst_40 = arith.constant 8.000000e+00 : f32
    %120 = vector.broadcast %cst_40 : f32 to vector<8x128xf32>
    %121 = arith.mulf %119, %120 : vector<8x128xf32>
    %cst_41 = arith.constant 1.000000e+00 : f32
    %122 = vector.broadcast %cst_41 : f32 to vector<8x128xf32>
    %123 = arith.subf %121, %122 : vector<8x128xf32>
    %cst_42 = arith.constant 5.000000e-01 : f32
    %124 = vector.broadcast %cst_42 : f32 to vector<8x128xf32>
    %125 = arith.mulf %123, %124 : vector<8x128xf32>
    %cst_43 = arith.constant -2.000000e+00 : f32
    %cst_44 = arith.constant 9.000000e+00 : f32
    %126 = vector.broadcast %cst_43 : f32 to vector<8x128xf32>
    %127 = arith.maximumf %126, %125 : vector<8x128xf32>
    %128 = vector.broadcast %cst_44 : f32 to vector<8x128xf32>
    %129 = arith.minimumf %128, %127 : vector<8x128xf32>
    %cst_45 = arith.constant 1.000000e+00 : f32
    %130 = vector.broadcast %cst_45 : f32 to vector<8x128xf32>
    %131 = arith.addf %117, %130 : vector<8x128xf32>
    %cst_46 = arith.constant 6.000000e+00 : f32
    %132 = vector.broadcast %cst_46 : f32 to vector<8x128xf32>
    %133 = arith.mulf %131, %132 : vector<8x128xf32>
    %cst_47 = arith.constant 1.000000e+00 : f32
    %134 = vector.broadcast %cst_47 : f32 to vector<8x128xf32>
    %135 = arith.subf %133, %134 : vector<8x128xf32>
    %cst_48 = arith.constant 5.000000e-01 : f32
    %136 = vector.broadcast %cst_48 : f32 to vector<8x128xf32>
    %137 = arith.mulf %135, %136 : vector<8x128xf32>
    %cst_49 = arith.constant -2.000000e+00 : f32
    %cst_50 = arith.constant 7.000000e+00 : f32
    %138 = vector.broadcast %cst_49 : f32 to vector<8x128xf32>
    %139 = arith.maximumf %138, %137 : vector<8x128xf32>
    %140 = vector.broadcast %cst_50 : f32 to vector<8x128xf32>
    %141 = arith.minimumf %140, %139 : vector<8x128xf32>
    %142 = math.floor %129 : vector<8x128xf32>
    %143 = math.floor %141 : vector<8x128xf32>
    %144 = arith.subf %129, %142 : vector<8x128xf32>
    %145 = arith.subf %141, %143 : vector<8x128xf32>
    %cst_51 = arith.constant 1.000000e+00 : f32
    %146 = vector.broadcast %cst_51 : f32 to vector<8x128xf32>
    %147 = arith.subf %146, %144 : vector<8x128xf32>
    %cst_52 = arith.constant 1.000000e+00 : f32
    %148 = vector.broadcast %cst_52 : f32 to vector<8x128xf32>
    %149 = arith.subf %148, %145 : vector<8x128xf32>
    %150 = arith.mulf %147, %149 : vector<8x128xf32>
    %cst_53 = arith.constant 1.000000e+00 : f32
    %151 = vector.broadcast %cst_53 : f32 to vector<8x128xf32>
    %152 = arith.addf %142, %151 : vector<8x128xf32>
    %cst_54 = arith.constant 1.000000e+00 : f32
    %153 = vector.broadcast %cst_54 : f32 to vector<8x128xf32>
    %154 = arith.subf %153, %145 : vector<8x128xf32>
    %155 = arith.mulf %144, %154 : vector<8x128xf32>
    %cst_55 = arith.constant 1.000000e+00 : f32
    %156 = vector.broadcast %cst_55 : f32 to vector<8x128xf32>
    %157 = arith.addf %143, %156 : vector<8x128xf32>
    %cst_56 = arith.constant 1.000000e+00 : f32
    %158 = vector.broadcast %cst_56 : f32 to vector<8x128xf32>
    %159 = arith.subf %158, %144 : vector<8x128xf32>
    %160 = arith.mulf %159, %145 : vector<8x128xf32>
    %cst_57 = arith.constant 1.000000e+00 : f32
    %161 = vector.broadcast %cst_57 : f32 to vector<8x128xf32>
    %162 = arith.addf %142, %161 : vector<8x128xf32>
    %cst_58 = arith.constant 1.000000e+00 : f32
    %163 = vector.broadcast %cst_58 : f32 to vector<8x128xf32>
    %164 = arith.addf %143, %163 : vector<8x128xf32>
    %165 = arith.mulf %144, %145 : vector<8x128xf32>
    %cst_59 = arith.constant 0.000000e+00 : f32
    %166 = vector.broadcast %cst_59 : f32 to vector<8x128xf32>
    %167 = arith.cmpf oge, %142, %166 : vector<8x128xf32>
    %cst_60 = arith.constant 7.000000e+00 : f32
    %168 = vector.broadcast %cst_60 : f32 to vector<8x128xf32>
    %169 = arith.cmpf ole, %142, %168 : vector<8x128xf32>
    %170 = arith.andi %167, %169 : vector<8x128xi1>
    %cst_61 = arith.constant 0.000000e+00 : f32
    %171 = vector.broadcast %cst_61 : f32 to vector<8x128xf32>
    %172 = arith.cmpf oge, %143, %171 : vector<8x128xf32>
    %173 = arith.andi %170, %172 : vector<8x128xi1>
    %cst_62 = arith.constant 5.000000e+00 : f32
    %174 = vector.broadcast %cst_62 : f32 to vector<8x128xf32>
    %175 = arith.cmpf ole, %143, %174 : vector<8x128xf32>
    %176 = arith.andi %173, %175 : vector<8x128xi1>
    %cst_63 = arith.constant 0.000000e+00 : f32
    %cst_64 = arith.constant 7.000000e+00 : f32
    %177 = vector.broadcast %cst_63 : f32 to vector<8x128xf32>
    %178 = arith.maximumf %177, %142 : vector<8x128xf32>
    %179 = vector.broadcast %cst_64 : f32 to vector<8x128xf32>
    %180 = arith.minimumf %179, %178 : vector<8x128xf32>
    %181 = arith.fptosi %180 : vector<8x128xf32> to vector<8x128xi32>
    %cst_65 = arith.constant 0.000000e+00 : f32
    %cst_66 = arith.constant 5.000000e+00 : f32
    %182 = vector.broadcast %cst_65 : f32 to vector<8x128xf32>
    %183 = arith.maximumf %182, %143 : vector<8x128xf32>
    %184 = vector.broadcast %cst_66 : f32 to vector<8x128xf32>
    %185 = arith.minimumf %184, %183 : vector<8x128xf32>
    %186 = arith.fptosi %185 : vector<8x128xf32> to vector<8x128xi32>
    %c8_i32 = arith.constant 8 : i32
    %187 = vector.broadcast %c8_i32 : i32 to vector<8x128xi32>
    %188 = arith.muli %186, %187 : vector<8x128xi32>
    %189 = arith.addi %188, %181 : vector<8x128xi32>
    %cst_67 = arith.constant 0.000000e+00 : f32
    %190 = vector.broadcast %cst_67 : f32 to vector<8x128xf32>
    %191 = arith.select %176, %150, %190 : vector<8x128xi1>, vector<8x128xf32>
    %cst_68 = arith.constant 0.000000e+00 : f32
    %192 = vector.broadcast %cst_68 : f32 to vector<8x128xf32>
    %193 = arith.cmpf oge, %152, %192 : vector<8x128xf32>
    %cst_69 = arith.constant 7.000000e+00 : f32
    %194 = vector.broadcast %cst_69 : f32 to vector<8x128xf32>
    %195 = arith.cmpf ole, %152, %194 : vector<8x128xf32>
    %196 = arith.andi %193, %195 : vector<8x128xi1>
    %cst_70 = arith.constant 0.000000e+00 : f32
    %197 = vector.broadcast %cst_70 : f32 to vector<8x128xf32>
    %198 = arith.cmpf oge, %143, %197 : vector<8x128xf32>
    %199 = arith.andi %196, %198 : vector<8x128xi1>
    %cst_71 = arith.constant 5.000000e+00 : f32
    %200 = vector.broadcast %cst_71 : f32 to vector<8x128xf32>
    %201 = arith.cmpf ole, %143, %200 : vector<8x128xf32>
    %202 = arith.andi %199, %201 : vector<8x128xi1>
    %cst_72 = arith.constant 0.000000e+00 : f32
    %cst_73 = arith.constant 7.000000e+00 : f32
    %203 = vector.broadcast %cst_72 : f32 to vector<8x128xf32>
    %204 = arith.maximumf %203, %152 : vector<8x128xf32>
    %205 = vector.broadcast %cst_73 : f32 to vector<8x128xf32>
    %206 = arith.minimumf %205, %204 : vector<8x128xf32>
    %207 = arith.fptosi %206 : vector<8x128xf32> to vector<8x128xi32>
    %cst_74 = arith.constant 0.000000e+00 : f32
    %cst_75 = arith.constant 5.000000e+00 : f32
    %208 = vector.broadcast %cst_74 : f32 to vector<8x128xf32>
    %209 = arith.maximumf %208, %143 : vector<8x128xf32>
    %210 = vector.broadcast %cst_75 : f32 to vector<8x128xf32>
    %211 = arith.minimumf %210, %209 : vector<8x128xf32>
    %212 = arith.fptosi %211 : vector<8x128xf32> to vector<8x128xi32>
    %c8_i32_76 = arith.constant 8 : i32
    %213 = vector.broadcast %c8_i32_76 : i32 to vector<8x128xi32>
    %214 = arith.muli %212, %213 : vector<8x128xi32>
    %215 = arith.addi %214, %207 : vector<8x128xi32>
    %cst_77 = arith.constant 0.000000e+00 : f32
    %216 = vector.broadcast %cst_77 : f32 to vector<8x128xf32>
    %217 = arith.select %202, %155, %216 : vector<8x128xi1>, vector<8x128xf32>
    %cst_78 = arith.constant 0.000000e+00 : f32
    %218 = vector.broadcast %cst_78 : f32 to vector<8x128xf32>
    %219 = arith.cmpf oge, %142, %218 : vector<8x128xf32>
    %cst_79 = arith.constant 7.000000e+00 : f32
    %220 = vector.broadcast %cst_79 : f32 to vector<8x128xf32>
    %221 = arith.cmpf ole, %142, %220 : vector<8x128xf32>
    %222 = arith.andi %219, %221 : vector<8x128xi1>
    %cst_80 = arith.constant 0.000000e+00 : f32
    %223 = vector.broadcast %cst_80 : f32 to vector<8x128xf32>
    %224 = arith.cmpf oge, %157, %223 : vector<8x128xf32>
    %225 = arith.andi %222, %224 : vector<8x128xi1>
    %cst_81 = arith.constant 5.000000e+00 : f32
    %226 = vector.broadcast %cst_81 : f32 to vector<8x128xf32>
    %227 = arith.cmpf ole, %157, %226 : vector<8x128xf32>
    %228 = arith.andi %225, %227 : vector<8x128xi1>
    %cst_82 = arith.constant 0.000000e+00 : f32
    %cst_83 = arith.constant 7.000000e+00 : f32
    %229 = vector.broadcast %cst_82 : f32 to vector<8x128xf32>
    %230 = arith.maximumf %229, %142 : vector<8x128xf32>
    %231 = vector.broadcast %cst_83 : f32 to vector<8x128xf32>
    %232 = arith.minimumf %231, %230 : vector<8x128xf32>
    %233 = arith.fptosi %232 : vector<8x128xf32> to vector<8x128xi32>
    %cst_84 = arith.constant 0.000000e+00 : f32
    %cst_85 = arith.constant 5.000000e+00 : f32
    %234 = vector.broadcast %cst_84 : f32 to vector<8x128xf32>
    %235 = arith.maximumf %234, %157 : vector<8x128xf32>
    %236 = vector.broadcast %cst_85 : f32 to vector<8x128xf32>
    %237 = arith.minimumf %236, %235 : vector<8x128xf32>
    %238 = arith.fptosi %237 : vector<8x128xf32> to vector<8x128xi32>
    %c8_i32_86 = arith.constant 8 : i32
    %239 = vector.broadcast %c8_i32_86 : i32 to vector<8x128xi32>
    %240 = arith.muli %238, %239 : vector<8x128xi32>
    %241 = arith.addi %240, %233 : vector<8x128xi32>
    %cst_87 = arith.constant 0.000000e+00 : f32
    %242 = vector.broadcast %cst_87 : f32 to vector<8x128xf32>
    %243 = arith.select %228, %160, %242 : vector<8x128xi1>, vector<8x128xf32>
    %cst_88 = arith.constant 0.000000e+00 : f32
    %244 = vector.broadcast %cst_88 : f32 to vector<8x128xf32>
    %245 = arith.cmpf oge, %162, %244 : vector<8x128xf32>
    %cst_89 = arith.constant 7.000000e+00 : f32
    %246 = vector.broadcast %cst_89 : f32 to vector<8x128xf32>
    %247 = arith.cmpf ole, %162, %246 : vector<8x128xf32>
    %248 = arith.andi %245, %247 : vector<8x128xi1>
    %cst_90 = arith.constant 0.000000e+00 : f32
    %249 = vector.broadcast %cst_90 : f32 to vector<8x128xf32>
    %250 = arith.cmpf oge, %164, %249 : vector<8x128xf32>
    %251 = arith.andi %248, %250 : vector<8x128xi1>
    %cst_91 = arith.constant 5.000000e+00 : f32
    %252 = vector.broadcast %cst_91 : f32 to vector<8x128xf32>
    %253 = arith.cmpf ole, %164, %252 : vector<8x128xf32>
    %254 = arith.andi %251, %253 : vector<8x128xi1>
    %cst_92 = arith.constant 0.000000e+00 : f32
    %cst_93 = arith.constant 7.000000e+00 : f32
    %255 = vector.broadcast %cst_92 : f32 to vector<8x128xf32>
    %256 = arith.maximumf %255, %162 : vector<8x128xf32>
    %257 = vector.broadcast %cst_93 : f32 to vector<8x128xf32>
    %258 = arith.minimumf %257, %256 : vector<8x128xf32>
    %259 = arith.fptosi %258 : vector<8x128xf32> to vector<8x128xi32>
    %cst_94 = arith.constant 0.000000e+00 : f32
    %cst_95 = arith.constant 5.000000e+00 : f32
    %260 = vector.broadcast %cst_94 : f32 to vector<8x128xf32>
    %261 = arith.maximumf %260, %164 : vector<8x128xf32>
    %262 = vector.broadcast %cst_95 : f32 to vector<8x128xf32>
    %263 = arith.minimumf %262, %261 : vector<8x128xf32>
    %264 = arith.fptosi %263 : vector<8x128xf32> to vector<8x128xi32>
    %c8_i32_96 = arith.constant 8 : i32
    %265 = vector.broadcast %c8_i32_96 : i32 to vector<8x128xi32>
    %266 = arith.muli %264, %265 : vector<8x128xi32>
    %267 = arith.addi %266, %259 : vector<8x128xi32>
    %cst_97 = arith.constant 0.000000e+00 : f32
    %268 = vector.broadcast %cst_97 : f32 to vector<8x128xf32>
    %269 = arith.select %254, %165, %268 : vector<8x128xi1>, vector<8x128xf32>
    %c0_98 = arith.constant 0 : index
    %c0_99 = arith.constant 0 : index
    %270 = vector.load %arg6[%c0_98, %c0_99] : memref<8x11xf32, #tpu.memory_space<vmem>>, vector<8x11xf32>
    %271 = vector.extract_strided_slice %270 {offsets = [0, 0], sizes = [8, 4], strides = [1, 1]} : vector<8x11xf32> to vector<8x4xf32>
    %272 = arith.truncf %271 : vector<8x4xf32> to vector<8x4xbf16>
    %273 = vector.extract_strided_slice %270 {offsets = [0, 4], sizes = [8, 4], strides = [1, 1]} : vector<8x11xf32> to vector<8x4xf32>
    %274 = arith.truncf %273 : vector<8x4xf32> to vector<8x4xbf16>
    %275 = vector.extract_strided_slice %270 {offsets = [0, 8], sizes = [8, 1], strides = [1, 1]} : vector<8x11xf32> to vector<8x1xf32>
    %276 = vector.extract_strided_slice %270 {offsets = [0, 9], sizes = [8, 1], strides = [1, 1]} : vector<8x11xf32> to vector<8x1xf32>
    %277 = vector.extract_strided_slice %270 {offsets = [0, 10], sizes = [1, 1], strides = [1, 1]} : vector<8x11xf32> to vector<1x1xf32>
    %278 = arith.truncf %11 : vector<4x128xf32> to vector<4x128xbf16>
    %cst_100 = arith.constant dense<0.000000e+00> : vector<8x128xf32>
    %279 = tpu.matmul %272, %278, %cst_100 {dimension_numbers = #tpu.dot_dimension_numbers<[1], [0], [0], [1], [0, 0, 1, 1], [], []>} : vector<8x4xbf16>, vector<4x128xbf16>, vector<8x128xf32> -> vector<8x128xf32>
    %280 = vector.broadcast %275 : vector<8x1xf32> to vector<8x128xf32>
    %281 = arith.addf %279, %280 : vector<8x128xf32>
    %282 = arith.truncf %12 : vector<4x128xf32> to vector<4x128xbf16>
    %cst_101 = arith.constant dense<0.000000e+00> : vector<8x128xf32>
    %283 = tpu.matmul %274, %282, %cst_101 {dimension_numbers = #tpu.dot_dimension_numbers<[1], [0], [0], [1], [0, 0, 1, 1], [], []>} : vector<8x4xbf16>, vector<4x128xbf16>, vector<8x128xf32> -> vector<8x128xf32>
    %284 = arith.truncf %283 : vector<8x128xf32> to vector<8x128xbf16>
    %285 = tpu.iota {dimensions = array<i32: 0>} : vector<128x128xi32>
    %cst_102 = arith.constant 0.000000e+00 : f32
    %286 = vector.broadcast %cst_102 : f32 to vector<128x128xf32>
    %287 = vector.extract_strided_slice %189 {offsets = [0, 0], sizes = [1, 128], strides = [1, 1]} : vector<8x128xi32> to vector<1x128xi32>
    %288 = vector.broadcast %287 : vector<1x128xi32> to vector<128x128xi32>
    %289 = arith.cmpi eq, %285, %288 : vector<128x128xi32>
    %290 = vector.extract_strided_slice %191 {offsets = [0, 0], sizes = [1, 128], strides = [1, 1]} : vector<8x128xf32> to vector<1x128xf32>
    %cst_103 = arith.constant 0.000000e+00 : f32
    %291 = vector.shape_cast %290 : vector<1x128xf32> to vector<1x128xf32>
    %292 = vector.broadcast %291 : vector<1x128xf32> to vector<128x128xf32>
    %293 = vector.broadcast %cst_103 : f32 to vector<128x128xf32>
    %294 = arith.select %289, %292, %293 : vector<128x128xi1>, vector<128x128xf32>
    %295 = arith.addf %286, %294 : vector<128x128xf32>
    %296 = vector.extract_strided_slice %215 {offsets = [0, 0], sizes = [1, 128], strides = [1, 1]} : vector<8x128xi32> to vector<1x128xi32>
    %297 = vector.broadcast %296 : vector<1x128xi32> to vector<128x128xi32>
    %298 = arith.cmpi eq, %285, %297 : vector<128x128xi32>
    %299 = vector.extract_strided_slice %217 {offsets = [0, 0], sizes = [1, 128], strides = [1, 1]} : vector<8x128xf32> to vector<1x128xf32>
    %cst_104 = arith.constant 0.000000e+00 : f32
    %300 = vector.shape_cast %299 : vector<1x128xf32> to vector<1x128xf32>
    %301 = vector.broadcast %300 : vector<1x128xf32> to vector<128x128xf32>
    %302 = vector.broadcast %cst_104 : f32 to vector<128x128xf32>
    %303 = arith.select %298, %301, %302 : vector<128x128xi1>, vector<128x128xf32>
    %304 = arith.addf %295, %303 : vector<128x128xf32>
    %305 = vector.extract_strided_slice %241 {offsets = [0, 0], sizes = [1, 128], strides = [1, 1]} : vector<8x128xi32> to vector<1x128xi32>
    %306 = vector.broadcast %305 : vector<1x128xi32> to vector<128x128xi32>
    %307 = arith.cmpi eq, %285, %306 : vector<128x128xi32>
    %308 = vector.extract_strided_slice %243 {offsets = [0, 0], sizes = [1, 128], strides = [1, 1]} : vector<8x128xf32> to vector<1x128xf32>
    %cst_105 = arith.constant 0.000000e+00 : f32
    %309 = vector.shape_cast %308 : vector<1x128xf32> to vector<1x128xf32>
    %310 = vector.broadcast %309 : vector<1x128xf32> to vector<128x128xf32>
    %311 = vector.broadcast %cst_105 : f32 to vector<128x128xf32>
    %312 = arith.select %307, %310, %311 : vector<128x128xi1>, vector<128x128xf32>
    %313 = arith.addf %304, %312 : vector<128x128xf32>
    %314 = vector.extract_strided_slice %267 {offsets = [0, 0], sizes = [1, 128], strides = [1, 1]} : vector<8x128xi32> to vector<1x128xi32>
    %315 = vector.broadcast %314 : vector<1x128xi32> to vector<128x128xi32>
    %316 = arith.cmpi eq, %285, %315 : vector<128x128xi32>
    %317 = vector.extract_strided_slice %269 {offsets = [0, 0], sizes = [1, 128], strides = [1, 1]} : vector<8x128xf32> to vector<1x128xf32>
    %cst_106 = arith.constant 0.000000e+00 : f32
    %318 = vector.shape_cast %317 : vector<1x128xf32> to vector<1x128xf32>
    %319 = vector.broadcast %318 : vector<1x128xf32> to vector<128x128xf32>
    %320 = vector.broadcast %cst_106 : f32 to vector<128x128xf32>
    %321 = arith.select %316, %319, %320 : vector<128x128xi1>, vector<128x128xf32>
    %322 = arith.addf %313, %321 : vector<128x128xf32>
    %323 = arith.truncf %322 : vector<128x128xf32> to vector<128x128xbf16>
    %cst_107 = arith.constant dense<0.000000e+00> : vector<8x128xf32>
    %324 = tpu.matmul %284, %323, %cst_107 {dimension_numbers = #tpu.dot_dimension_numbers<[1], [0], [0], [1], [0, 0, 1, 1], [], []>} : vector<8x128xbf16>, vector<128x128xbf16>, vector<8x128xf32> -> vector<8x128xf32>
    %325 = arith.addf %281, %324 : vector<8x128xf32>
    %cst_108 = arith.constant 0.000000e+00 : f32
    %326 = vector.broadcast %cst_108 : f32 to vector<8x128xf32>
    %327 = arith.maximumf %325, %326 : vector<8x128xf32>
    %328 = vector.broadcast %276 : vector<8x1xf32> to vector<8x128xf32>
    %329 = arith.mulf %327, %328 : vector<8x128xf32>
    %cst_109 = arith.constant dense<0.000000e+00> : vector<128xf32>
    %330 = vector.multi_reduction <add>, %329, %cst_109 [0] : vector<8x128xf32> to vector<128xf32>
    %331 = vector.shape_cast %330 : vector<128xf32> to vector<1x128xf32>
    %cst_110 = arith.constant 0.000000e+00 : f32
    %332 = vector.broadcast %cst_110 : f32 to vector<128x128xf32>
    %333 = vector.extract_strided_slice %189 {offsets = [1, 0], sizes = [1, 128], strides = [1, 1]} : vector<8x128xi32> to vector<1x128xi32>
    %334 = vector.broadcast %333 : vector<1x128xi32> to vector<128x128xi32>
    %335 = arith.cmpi eq, %285, %334 : vector<128x128xi32>
    %336 = vector.extract_strided_slice %191 {offsets = [1, 0], sizes = [1, 128], strides = [1, 1]} : vector<8x128xf32> to vector<1x128xf32>
    %cst_111 = arith.constant 0.000000e+00 : f32
    %337 = vector.shape_cast %336 : vector<1x128xf32> to vector<1x128xf32>
    %338 = vector.broadcast %337 : vector<1x128xf32> to vector<128x128xf32>
    %339 = vector.broadcast %cst_111 : f32 to vector<128x128xf32>
    %340 = arith.select %335, %338, %339 : vector<128x128xi1>, vector<128x128xf32>
    %341 = arith.addf %332, %340 : vector<128x128xf32>
    %342 = vector.extract_strided_slice %215 {offsets = [1, 0], sizes = [1, 128], strides = [1, 1]} : vector<8x128xi32> to vector<1x128xi32>
    %343 = vector.broadcast %342 : vector<1x128xi32> to vector<128x128xi32>
    %344 = arith.cmpi eq, %285, %343 : vector<128x128xi32>
    %345 = vector.extract_strided_slice %217 {offsets = [1, 0], sizes = [1, 128], strides = [1, 1]} : vector<8x128xf32> to vector<1x128xf32>
    %cst_112 = arith.constant 0.000000e+00 : f32
    %346 = vector.shape_cast %345 : vector<1x128xf32> to vector<1x128xf32>
    %347 = vector.broadcast %346 : vector<1x128xf32> to vector<128x128xf32>
    %348 = vector.broadcast %cst_112 : f32 to vector<128x128xf32>
    %349 = arith.select %344, %347, %348 : vector<128x128xi1>, vector<128x128xf32>
    %350 = arith.addf %341, %349 : vector<128x128xf32>
    %351 = vector.extract_strided_slice %241 {offsets = [1, 0], sizes = [1, 128], strides = [1, 1]} : vector<8x128xi32> to vector<1x128xi32>
    %352 = vector.broadcast %351 : vector<1x128xi32> to vector<128x128xi32>
    %353 = arith.cmpi eq, %285, %352 : vector<128x128xi32>
    %354 = vector.extract_strided_slice %243 {offsets = [1, 0], sizes = [1, 128], strides = [1, 1]} : vector<8x128xf32> to vector<1x128xf32>
    %cst_113 = arith.constant 0.000000e+00 : f32
    %355 = vector.shape_cast %354 : vector<1x128xf32> to vector<1x128xf32>
    %356 = vector.broadcast %355 : vector<1x128xf32> to vector<128x128xf32>
    %357 = vector.broadcast %cst_113 : f32 to vector<128x128xf32>
    %358 = arith.select %353, %356, %357 : vector<128x128xi1>, vector<128x128xf32>
    %359 = arith.addf %350, %358 : vector<128x128xf32>
    %360 = vector.extract_strided_slice %267 {offsets = [1, 0], sizes = [1, 128], strides = [1, 1]} : vector<8x128xi32> to vector<1x128xi32>
    %361 = vector.broadcast %360 : vector<1x128xi32> to vector<128x128xi32>
    %362 = arith.cmpi eq, %285, %361 : vector<128x128xi32>
    %363 = vector.extract_strided_slice %269 {offsets = [1, 0], sizes = [1, 128], strides = [1, 1]} : vector<8x128xf32> to vector<1x128xf32>
    %cst_114 = arith.constant 0.000000e+00 : f32
    %364 = vector.shape_cast %363 : vector<1x128xf32> to vector<1x128xf32>
    %365 = vector.broadcast %364 : vector<1x128xf32> to vector<128x128xf32>
    %366 = vector.broadcast %cst_114 : f32 to vector<128x128xf32>
    %367 = arith.select %362, %365, %366 : vector<128x128xi1>, vector<128x128xf32>
    %368 = arith.addf %359, %367 : vector<128x128xf32>
    %369 = arith.truncf %368 : vector<128x128xf32> to vector<128x128xbf16>
    %cst_115 = arith.constant dense<0.000000e+00> : vector<8x128xf32>
    %370 = tpu.matmul %284, %369, %cst_115 {dimension_numbers = #tpu.dot_dimension_numbers<[1], [0], [0], [1], [0, 0, 1, 1], [], []>} : vector<8x128xbf16>, vector<128x128xbf16>, vector<8x128xf32> -> vector<8x128xf32>
    %371 = arith.addf %281, %370 : vector<8x128xf32>
    %cst_116 = arith.constant 0.000000e+00 : f32
    %372 = vector.broadcast %cst_116 : f32 to vector<8x128xf32>
    %373 = arith.maximumf %371, %372 : vector<8x128xf32>
    %374 = vector.broadcast %276 : vector<8x1xf32> to vector<8x128xf32>
    %375 = arith.mulf %373, %374 : vector<8x128xf32>
    %cst_117 = arith.constant dense<0.000000e+00> : vector<128xf32>
    %376 = vector.multi_reduction <add>, %375, %cst_117 [0] : vector<8x128xf32> to vector<128xf32>
    %377 = vector.shape_cast %376 : vector<128xf32> to vector<1x128xf32>
    %cst_118 = arith.constant 0.000000e+00 : f32
    %378 = vector.broadcast %cst_118 : f32 to vector<128x128xf32>
    %379 = vector.extract_strided_slice %189 {offsets = [2, 0], sizes = [1, 128], strides = [1, 1]} : vector<8x128xi32> to vector<1x128xi32>
    %380 = vector.broadcast %379 : vector<1x128xi32> to vector<128x128xi32>
    %381 = arith.cmpi eq, %285, %380 : vector<128x128xi32>
    %382 = vector.extract_strided_slice %191 {offsets = [2, 0], sizes = [1, 128], strides = [1, 1]} : vector<8x128xf32> to vector<1x128xf32>
    %cst_119 = arith.constant 0.000000e+00 : f32
    %383 = vector.shape_cast %382 : vector<1x128xf32> to vector<1x128xf32>
    %384 = vector.broadcast %383 : vector<1x128xf32> to vector<128x128xf32>
    %385 = vector.broadcast %cst_119 : f32 to vector<128x128xf32>
    %386 = arith.select %381, %384, %385 : vector<128x128xi1>, vector<128x128xf32>
    %387 = arith.addf %378, %386 : vector<128x128xf32>
    %388 = vector.extract_strided_slice %215 {offsets = [2, 0], sizes = [1, 128], strides = [1, 1]} : vector<8x128xi32> to vector<1x128xi32>
    %389 = vector.broadcast %388 : vector<1x128xi32> to vector<128x128xi32>
    %390 = arith.cmpi eq, %285, %389 : vector<128x128xi32>
    %391 = vector.extract_strided_slice %217 {offsets = [2, 0], sizes = [1, 128], strides = [1, 1]} : vector<8x128xf32> to vector<1x128xf32>
    %cst_120 = arith.constant 0.000000e+00 : f32
    %392 = vector.shape_cast %391 : vector<1x128xf32> to vector<1x128xf32>
    %393 = vector.broadcast %392 : vector<1x128xf32> to vector<128x128xf32>
    %394 = vector.broadcast %cst_120 : f32 to vector<128x128xf32>
    %395 = arith.select %390, %393, %394 : vector<128x128xi1>, vector<128x128xf32>
    %396 = arith.addf %387, %395 : vector<128x128xf32>
    %397 = vector.extract_strided_slice %241 {offsets = [2, 0], sizes = [1, 128], strides = [1, 1]} : vector<8x128xi32> to vector<1x128xi32>
    %398 = vector.broadcast %397 : vector<1x128xi32> to vector<128x128xi32>
    %399 = arith.cmpi eq, %285, %398 : vector<128x128xi32>
    %400 = vector.extract_strided_slice %243 {offsets = [2, 0], sizes = [1, 128], strides = [1, 1]} : vector<8x128xf32> to vector<1x128xf32>
    %cst_121 = arith.constant 0.000000e+00 : f32
    %401 = vector.shape_cast %400 : vector<1x128xf32> to vector<1x128xf32>
    %402 = vector.broadcast %401 : vector<1x128xf32> to vector<128x128xf32>
    %403 = vector.broadcast %cst_121 : f32 to vector<128x128xf32>
    %404 = arith.select %399, %402, %403 : vector<128x128xi1>, vector<128x128xf32>
    %405 = arith.addf %396, %404 : vector<128x128xf32>
    %406 = vector.extract_strided_slice %267 {offsets = [2, 0], sizes = [1, 128], strides = [1, 1]} : vector<8x128xi32> to vector<1x128xi32>
    %407 = vector.broadcast %406 : vector<1x128xi32> to vector<128x128xi32>
    %408 = arith.cmpi eq, %285, %407 : vector<128x128xi32>
    %409 = vector.extract_strided_slice %269 {offsets = [2, 0], sizes = [1, 128], strides = [1, 1]} : vector<8x128xf32> to vector<1x128xf32>
    %cst_122 = arith.constant 0.000000e+00 : f32
    %410 = vector.shape_cast %409 : vector<1x128xf32> to vector<1x128xf32>
    %411 = vector.broadcast %410 : vector<1x128xf32> to vector<128x128xf32>
    %412 = vector.broadcast %cst_122 : f32 to vector<128x128xf32>
    %413 = arith.select %408, %411, %412 : vector<128x128xi1>, vector<128x128xf32>
    %414 = arith.addf %405, %413 : vector<128x128xf32>
    %415 = arith.truncf %414 : vector<128x128xf32> to vector<128x128xbf16>
    %cst_123 = arith.constant dense<0.000000e+00> : vector<8x128xf32>
    %416 = tpu.matmul %284, %415, %cst_123 {dimension_numbers = #tpu.dot_dimension_numbers<[1], [0], [0], [1], [0, 0, 1, 1], [], []>} : vector<8x128xbf16>, vector<128x128xbf16>, vector<8x128xf32> -> vector<8x128xf32>
    %417 = arith.addf %281, %416 : vector<8x128xf32>
    %cst_124 = arith.constant 0.000000e+00 : f32
    %418 = vector.broadcast %cst_124 : f32 to vector<8x128xf32>
    %419 = arith.maximumf %417, %418 : vector<8x128xf32>
    %420 = vector.broadcast %276 : vector<8x1xf32> to vector<8x128xf32>
    %421 = arith.mulf %419, %420 : vector<8x128xf32>
    %cst_125 = arith.constant dense<0.000000e+00> : vector<128xf32>
    %422 = vector.multi_reduction <add>, %421, %cst_125 [0] : vector<8x128xf32> to vector<128xf32>
    %423 = vector.shape_cast %422 : vector<128xf32> to vector<1x128xf32>
    %cst_126 = arith.constant 0.000000e+00 : f32
    %424 = vector.broadcast %cst_126 : f32 to vector<128x128xf32>
    %425 = vector.extract_strided_slice %189 {offsets = [3, 0], sizes = [1, 128], strides = [1, 1]} : vector<8x128xi32> to vector<1x128xi32>
    %426 = vector.broadcast %425 : vector<1x128xi32> to vector<128x128xi32>
    %427 = arith.cmpi eq, %285, %426 : vector<128x128xi32>
    %428 = vector.extract_strided_slice %191 {offsets = [3, 0], sizes = [1, 128], strides = [1, 1]} : vector<8x128xf32> to vector<1x128xf32>
    %cst_127 = arith.constant 0.000000e+00 : f32
    %429 = vector.shape_cast %428 : vector<1x128xf32> to vector<1x128xf32>
    %430 = vector.broadcast %429 : vector<1x128xf32> to vector<128x128xf32>
    %431 = vector.broadcast %cst_127 : f32 to vector<128x128xf32>
    %432 = arith.select %427, %430, %431 : vector<128x128xi1>, vector<128x128xf32>
    %433 = arith.addf %424, %432 : vector<128x128xf32>
    %434 = vector.extract_strided_slice %215 {offsets = [3, 0], sizes = [1, 128], strides = [1, 1]} : vector<8x128xi32> to vector<1x128xi32>
    %435 = vector.broadcast %434 : vector<1x128xi32> to vector<128x128xi32>
    %436 = arith.cmpi eq, %285, %435 : vector<128x128xi32>
    %437 = vector.extract_strided_slice %217 {offsets = [3, 0], sizes = [1, 128], strides = [1, 1]} : vector<8x128xf32> to vector<1x128xf32>
    %cst_128 = arith.constant 0.000000e+00 : f32
    %438 = vector.shape_cast %437 : vector<1x128xf32> to vector<1x128xf32>
    %439 = vector.broadcast %438 : vector<1x128xf32> to vector<128x128xf32>
    %440 = vector.broadcast %cst_128 : f32 to vector<128x128xf32>
    %441 = arith.select %436, %439, %440 : vector<128x128xi1>, vector<128x128xf32>
    %442 = arith.addf %433, %441 : vector<128x128xf32>
    %443 = vector.extract_strided_slice %241 {offsets = [3, 0], sizes = [1, 128], strides = [1, 1]} : vector<8x128xi32> to vector<1x128xi32>
    %444 = vector.broadcast %443 : vector<1x128xi32> to vector<128x128xi32>
    %445 = arith.cmpi eq, %285, %444 : vector<128x128xi32>
    %446 = vector.extract_strided_slice %243 {offsets = [3, 0], sizes = [1, 128], strides = [1, 1]} : vector<8x128xf32> to vector<1x128xf32>
    %cst_129 = arith.constant 0.000000e+00 : f32
    %447 = vector.shape_cast %446 : vector<1x128xf32> to vector<1x128xf32>
    %448 = vector.broadcast %447 : vector<1x128xf32> to vector<128x128xf32>
    %449 = vector.broadcast %cst_129 : f32 to vector<128x128xf32>
    %450 = arith.select %445, %448, %449 : vector<128x128xi1>, vector<128x128xf32>
    %451 = arith.addf %442, %450 : vector<128x128xf32>
    %452 = vector.extract_strided_slice %267 {offsets = [3, 0], sizes = [1, 128], strides = [1, 1]} : vector<8x128xi32> to vector<1x128xi32>
    %453 = vector.broadcast %452 : vector<1x128xi32> to vector<128x128xi32>
    %454 = arith.cmpi eq, %285, %453 : vector<128x128xi32>
    %455 = vector.extract_strided_slice %269 {offsets = [3, 0], sizes = [1, 128], strides = [1, 1]} : vector<8x128xf32> to vector<1x128xf32>
    %cst_130 = arith.constant 0.000000e+00 : f32
    %456 = vector.shape_cast %455 : vector<1x128xf32> to vector<1x128xf32>
    %457 = vector.broadcast %456 : vector<1x128xf32> to vector<128x128xf32>
    %458 = vector.broadcast %cst_130 : f32 to vector<128x128xf32>
    %459 = arith.select %454, %457, %458 : vector<128x128xi1>, vector<128x128xf32>
    %460 = arith.addf %451, %459 : vector<128x128xf32>
    %461 = arith.truncf %460 : vector<128x128xf32> to vector<128x128xbf16>
    %cst_131 = arith.constant dense<0.000000e+00> : vector<8x128xf32>
    %462 = tpu.matmul %284, %461, %cst_131 {dimension_numbers = #tpu.dot_dimension_numbers<[1], [0], [0], [1], [0, 0, 1, 1], [], []>} : vector<8x128xbf16>, vector<128x128xbf16>, vector<8x128xf32> -> vector<8x128xf32>
    %463 = arith.addf %281, %462 : vector<8x128xf32>
    %cst_132 = arith.constant 0.000000e+00 : f32
    %464 = vector.broadcast %cst_132 : f32 to vector<8x128xf32>
    %465 = arith.maximumf %463, %464 : vector<8x128xf32>
    %466 = vector.broadcast %276 : vector<8x1xf32> to vector<8x128xf32>
    %467 = arith.mulf %465, %466 : vector<8x128xf32>
    %cst_133 = arith.constant dense<0.000000e+00> : vector<128xf32>
    %468 = vector.multi_reduction <add>, %467, %cst_133 [0] : vector<8x128xf32> to vector<128xf32>
    %469 = vector.shape_cast %468 : vector<128xf32> to vector<1x128xf32>
    %cst_134 = arith.constant 0.000000e+00 : f32
    %470 = vector.broadcast %cst_134 : f32 to vector<128x128xf32>
    %471 = vector.extract_strided_slice %189 {offsets = [4, 0], sizes = [1, 128], strides = [1, 1]} : vector<8x128xi32> to vector<1x128xi32>
    %472 = vector.broadcast %471 : vector<1x128xi32> to vector<128x128xi32>
    %473 = arith.cmpi eq, %285, %472 : vector<128x128xi32>
    %474 = vector.extract_strided_slice %191 {offsets = [4, 0], sizes = [1, 128], strides = [1, 1]} : vector<8x128xf32> to vector<1x128xf32>
    %cst_135 = arith.constant 0.000000e+00 : f32
    %475 = vector.shape_cast %474 : vector<1x128xf32> to vector<1x128xf32>
    %476 = vector.broadcast %475 : vector<1x128xf32> to vector<128x128xf32>
    %477 = vector.broadcast %cst_135 : f32 to vector<128x128xf32>
    %478 = arith.select %473, %476, %477 : vector<128x128xi1>, vector<128x128xf32>
    %479 = arith.addf %470, %478 : vector<128x128xf32>
    %480 = vector.extract_strided_slice %215 {offsets = [4, 0], sizes = [1, 128], strides = [1, 1]} : vector<8x128xi32> to vector<1x128xi32>
    %481 = vector.broadcast %480 : vector<1x128xi32> to vector<128x128xi32>
    %482 = arith.cmpi eq, %285, %481 : vector<128x128xi32>
    %483 = vector.extract_strided_slice %217 {offsets = [4, 0], sizes = [1, 128], strides = [1, 1]} : vector<8x128xf32> to vector<1x128xf32>
    %cst_136 = arith.constant 0.000000e+00 : f32
    %484 = vector.shape_cast %483 : vector<1x128xf32> to vector<1x128xf32>
    %485 = vector.broadcast %484 : vector<1x128xf32> to vector<128x128xf32>
    %486 = vector.broadcast %cst_136 : f32 to vector<128x128xf32>
    %487 = arith.select %482, %485, %486 : vector<128x128xi1>, vector<128x128xf32>
    %488 = arith.addf %479, %487 : vector<128x128xf32>
    %489 = vector.extract_strided_slice %241 {offsets = [4, 0], sizes = [1, 128], strides = [1, 1]} : vector<8x128xi32> to vector<1x128xi32>
    %490 = vector.broadcast %489 : vector<1x128xi32> to vector<128x128xi32>
    %491 = arith.cmpi eq, %285, %490 : vector<128x128xi32>
    %492 = vector.extract_strided_slice %243 {offsets = [4, 0], sizes = [1, 128], strides = [1, 1]} : vector<8x128xf32> to vector<1x128xf32>
    %cst_137 = arith.constant 0.000000e+00 : f32
    %493 = vector.shape_cast %492 : vector<1x128xf32> to vector<1x128xf32>
    %494 = vector.broadcast %493 : vector<1x128xf32> to vector<128x128xf32>
    %495 = vector.broadcast %cst_137 : f32 to vector<128x128xf32>
    %496 = arith.select %491, %494, %495 : vector<128x128xi1>, vector<128x128xf32>
    %497 = arith.addf %488, %496 : vector<128x128xf32>
    %498 = vector.extract_strided_slice %267 {offsets = [4, 0], sizes = [1, 128], strides = [1, 1]} : vector<8x128xi32> to vector<1x128xi32>
    %499 = vector.broadcast %498 : vector<1x128xi32> to vector<128x128xi32>
    %500 = arith.cmpi eq, %285, %499 : vector<128x128xi32>
    %501 = vector.extract_strided_slice %269 {offsets = [4, 0], sizes = [1, 128], strides = [1, 1]} : vector<8x128xf32> to vector<1x128xf32>
    %cst_138 = arith.constant 0.000000e+00 : f32
    %502 = vector.shape_cast %501 : vector<1x128xf32> to vector<1x128xf32>
    %503 = vector.broadcast %502 : vector<1x128xf32> to vector<128x128xf32>
    %504 = vector.broadcast %cst_138 : f32 to vector<128x128xf32>
    %505 = arith.select %500, %503, %504 : vector<128x128xi1>, vector<128x128xf32>
    %506 = arith.addf %497, %505 : vector<128x128xf32>
    %507 = arith.truncf %506 : vector<128x128xf32> to vector<128x128xbf16>
    %cst_139 = arith.constant dense<0.000000e+00> : vector<8x128xf32>
    %508 = tpu.matmul %284, %507, %cst_139 {dimension_numbers = #tpu.dot_dimension_numbers<[1], [0], [0], [1], [0, 0, 1, 1], [], []>} : vector<8x128xbf16>, vector<128x128xbf16>, vector<8x128xf32> -> vector<8x128xf32>
    %509 = arith.addf %281, %508 : vector<8x128xf32>
    %cst_140 = arith.constant 0.000000e+00 : f32
    %510 = vector.broadcast %cst_140 : f32 to vector<8x128xf32>
    %511 = arith.maximumf %509, %510 : vector<8x128xf32>
    %512 = vector.broadcast %276 : vector<8x1xf32> to vector<8x128xf32>
    %513 = arith.mulf %511, %512 : vector<8x128xf32>
    %cst_141 = arith.constant dense<0.000000e+00> : vector<128xf32>
    %514 = vector.multi_reduction <add>, %513, %cst_141 [0] : vector<8x128xf32> to vector<128xf32>
    %515 = vector.shape_cast %514 : vector<128xf32> to vector<1x128xf32>
    %cst_142 = arith.constant 0.000000e+00 : f32
    %516 = vector.broadcast %cst_142 : f32 to vector<128x128xf32>
    %517 = vector.extract_strided_slice %189 {offsets = [5, 0], sizes = [1, 128], strides = [1, 1]} : vector<8x128xi32> to vector<1x128xi32>
    %518 = vector.broadcast %517 : vector<1x128xi32> to vector<128x128xi32>
    %519 = arith.cmpi eq, %285, %518 : vector<128x128xi32>
    %520 = vector.extract_strided_slice %191 {offsets = [5, 0], sizes = [1, 128], strides = [1, 1]} : vector<8x128xf32> to vector<1x128xf32>
    %cst_143 = arith.constant 0.000000e+00 : f32
    %521 = vector.shape_cast %520 : vector<1x128xf32> to vector<1x128xf32>
    %522 = vector.broadcast %521 : vector<1x128xf32> to vector<128x128xf32>
    %523 = vector.broadcast %cst_143 : f32 to vector<128x128xf32>
    %524 = arith.select %519, %522, %523 : vector<128x128xi1>, vector<128x128xf32>
    %525 = arith.addf %516, %524 : vector<128x128xf32>
    %526 = vector.extract_strided_slice %215 {offsets = [5, 0], sizes = [1, 128], strides = [1, 1]} : vector<8x128xi32> to vector<1x128xi32>
    %527 = vector.broadcast %526 : vector<1x128xi32> to vector<128x128xi32>
    %528 = arith.cmpi eq, %285, %527 : vector<128x128xi32>
    %529 = vector.extract_strided_slice %217 {offsets = [5, 0], sizes = [1, 128], strides = [1, 1]} : vector<8x128xf32> to vector<1x128xf32>
    %cst_144 = arith.constant 0.000000e+00 : f32
    %530 = vector.shape_cast %529 : vector<1x128xf32> to vector<1x128xf32>
    %531 = vector.broadcast %530 : vector<1x128xf32> to vector<128x128xf32>
    %532 = vector.broadcast %cst_144 : f32 to vector<128x128xf32>
    %533 = arith.select %528, %531, %532 : vector<128x128xi1>, vector<128x128xf32>
    %534 = arith.addf %525, %533 : vector<128x128xf32>
    %535 = vector.extract_strided_slice %241 {offsets = [5, 0], sizes = [1, 128], strides = [1, 1]} : vector<8x128xi32> to vector<1x128xi32>
    %536 = vector.broadcast %535 : vector<1x128xi32> to vector<128x128xi32>
    %537 = arith.cmpi eq, %285, %536 : vector<128x128xi32>
    %538 = vector.extract_strided_slice %243 {offsets = [5, 0], sizes = [1, 128], strides = [1, 1]} : vector<8x128xf32> to vector<1x128xf32>
    %cst_145 = arith.constant 0.000000e+00 : f32
    %539 = vector.shape_cast %538 : vector<1x128xf32> to vector<1x128xf32>
    %540 = vector.broadcast %539 : vector<1x128xf32> to vector<128x128xf32>
    %541 = vector.broadcast %cst_145 : f32 to vector<128x128xf32>
    %542 = arith.select %537, %540, %541 : vector<128x128xi1>, vector<128x128xf32>
    %543 = arith.addf %534, %542 : vector<128x128xf32>
    %544 = vector.extract_strided_slice %267 {offsets = [5, 0], sizes = [1, 128], strides = [1, 1]} : vector<8x128xi32> to vector<1x128xi32>
    %545 = vector.broadcast %544 : vector<1x128xi32> to vector<128x128xi32>
    %546 = arith.cmpi eq, %285, %545 : vector<128x128xi32>
    %547 = vector.extract_strided_slice %269 {offsets = [5, 0], sizes = [1, 128], strides = [1, 1]} : vector<8x128xf32> to vector<1x128xf32>
    %cst_146 = arith.constant 0.000000e+00 : f32
    %548 = vector.shape_cast %547 : vector<1x128xf32> to vector<1x128xf32>
    %549 = vector.broadcast %548 : vector<1x128xf32> to vector<128x128xf32>
    %550 = vector.broadcast %cst_146 : f32 to vector<128x128xf32>
    %551 = arith.select %546, %549, %550 : vector<128x128xi1>, vector<128x128xf32>
    %552 = arith.addf %543, %551 : vector<128x128xf32>
    %553 = arith.truncf %552 : vector<128x128xf32> to vector<128x128xbf16>
    %cst_147 = arith.constant dense<0.000000e+00> : vector<8x128xf32>
    %554 = tpu.matmul %284, %553, %cst_147 {dimension_numbers = #tpu.dot_dimension_numbers<[1], [0], [0], [1], [0, 0, 1, 1], [], []>} : vector<8x128xbf16>, vector<128x128xbf16>, vector<8x128xf32> -> vector<8x128xf32>
    %555 = arith.addf %281, %554 : vector<8x128xf32>
    %cst_148 = arith.constant 0.000000e+00 : f32
    %556 = vector.broadcast %cst_148 : f32 to vector<8x128xf32>
    %557 = arith.maximumf %555, %556 : vector<8x128xf32>
    %558 = vector.broadcast %276 : vector<8x1xf32> to vector<8x128xf32>
    %559 = arith.mulf %557, %558 : vector<8x128xf32>
    %cst_149 = arith.constant dense<0.000000e+00> : vector<128xf32>
    %560 = vector.multi_reduction <add>, %559, %cst_149 [0] : vector<8x128xf32> to vector<128xf32>
    %561 = vector.shape_cast %560 : vector<128xf32> to vector<1x128xf32>
    %cst_150 = arith.constant 0.000000e+00 : f32
    %562 = vector.broadcast %cst_150 : f32 to vector<128x128xf32>
    %563 = vector.extract_strided_slice %189 {offsets = [6, 0], sizes = [1, 128], strides = [1, 1]} : vector<8x128xi32> to vector<1x128xi32>
    %564 = vector.broadcast %563 : vector<1x128xi32> to vector<128x128xi32>
    %565 = arith.cmpi eq, %285, %564 : vector<128x128xi32>
    %566 = vector.extract_strided_slice %191 {offsets = [6, 0], sizes = [1, 128], strides = [1, 1]} : vector<8x128xf32> to vector<1x128xf32>
    %cst_151 = arith.constant 0.000000e+00 : f32
    %567 = vector.shape_cast %566 : vector<1x128xf32> to vector<1x128xf32>
    %568 = vector.broadcast %567 : vector<1x128xf32> to vector<128x128xf32>
    %569 = vector.broadcast %cst_151 : f32 to vector<128x128xf32>
    %570 = arith.select %565, %568, %569 : vector<128x128xi1>, vector<128x128xf32>
    %571 = arith.addf %562, %570 : vector<128x128xf32>
    %572 = vector.extract_strided_slice %215 {offsets = [6, 0], sizes = [1, 128], strides = [1, 1]} : vector<8x128xi32> to vector<1x128xi32>
    %573 = vector.broadcast %572 : vector<1x128xi32> to vector<128x128xi32>
    %574 = arith.cmpi eq, %285, %573 : vector<128x128xi32>
    %575 = vector.extract_strided_slice %217 {offsets = [6, 0], sizes = [1, 128], strides = [1, 1]} : vector<8x128xf32> to vector<1x128xf32>
    %cst_152 = arith.constant 0.000000e+00 : f32
    %576 = vector.shape_cast %575 : vector<1x128xf32> to vector<1x128xf32>
    %577 = vector.broadcast %576 : vector<1x128xf32> to vector<128x128xf32>
    %578 = vector.broadcast %cst_152 : f32 to vector<128x128xf32>
    %579 = arith.select %574, %577, %578 : vector<128x128xi1>, vector<128x128xf32>
    %580 = arith.addf %571, %579 : vector<128x128xf32>
    %581 = vector.extract_strided_slice %241 {offsets = [6, 0], sizes = [1, 128], strides = [1, 1]} : vector<8x128xi32> to vector<1x128xi32>
    %582 = vector.broadcast %581 : vector<1x128xi32> to vector<128x128xi32>
    %583 = arith.cmpi eq, %285, %582 : vector<128x128xi32>
    %584 = vector.extract_strided_slice %243 {offsets = [6, 0], sizes = [1, 128], strides = [1, 1]} : vector<8x128xf32> to vector<1x128xf32>
    %cst_153 = arith.constant 0.000000e+00 : f32
    %585 = vector.shape_cast %584 : vector<1x128xf32> to vector<1x128xf32>
    %586 = vector.broadcast %585 : vector<1x128xf32> to vector<128x128xf32>
    %587 = vector.broadcast %cst_153 : f32 to vector<128x128xf32>
    %588 = arith.select %583, %586, %587 : vector<128x128xi1>, vector<128x128xf32>
    %589 = arith.addf %580, %588 : vector<128x128xf32>
    %590 = vector.extract_strided_slice %267 {offsets = [6, 0], sizes = [1, 128], strides = [1, 1]} : vector<8x128xi32> to vector<1x128xi32>
    %591 = vector.broadcast %590 : vector<1x128xi32> to vector<128x128xi32>
    %592 = arith.cmpi eq, %285, %591 : vector<128x128xi32>
    %593 = vector.extract_strided_slice %269 {offsets = [6, 0], sizes = [1, 128], strides = [1, 1]} : vector<8x128xf32> to vector<1x128xf32>
    %cst_154 = arith.constant 0.000000e+00 : f32
    %594 = vector.shape_cast %593 : vector<1x128xf32> to vector<1x128xf32>
    %595 = vector.broadcast %594 : vector<1x128xf32> to vector<128x128xf32>
    %596 = vector.broadcast %cst_154 : f32 to vector<128x128xf32>
    %597 = arith.select %592, %595, %596 : vector<128x128xi1>, vector<128x128xf32>
    %598 = arith.addf %589, %597 : vector<128x128xf32>
    %599 = arith.truncf %598 : vector<128x128xf32> to vector<128x128xbf16>
    %cst_155 = arith.constant dense<0.000000e+00> : vector<8x128xf32>
    %600 = tpu.matmul %284, %599, %cst_155 {dimension_numbers = #tpu.dot_dimension_numbers<[1], [0], [0], [1], [0, 0, 1, 1], [], []>} : vector<8x128xbf16>, vector<128x128xbf16>, vector<8x128xf32> -> vector<8x128xf32>
    %601 = arith.addf %281, %600 : vector<8x128xf32>
    %cst_156 = arith.constant 0.000000e+00 : f32
    %602 = vector.broadcast %cst_156 : f32 to vector<8x128xf32>
    %603 = arith.maximumf %601, %602 : vector<8x128xf32>
    %604 = vector.broadcast %276 : vector<8x1xf32> to vector<8x128xf32>
    %605 = arith.mulf %603, %604 : vector<8x128xf32>
    %cst_157 = arith.constant dense<0.000000e+00> : vector<128xf32>
    %606 = vector.multi_reduction <add>, %605, %cst_157 [0] : vector<8x128xf32> to vector<128xf32>
    %607 = vector.shape_cast %606 : vector<128xf32> to vector<1x128xf32>
    %cst_158 = arith.constant 0.000000e+00 : f32
    %608 = vector.broadcast %cst_158 : f32 to vector<128x128xf32>
    %609 = vector.extract_strided_slice %189 {offsets = [7, 0], sizes = [1, 128], strides = [1, 1]} : vector<8x128xi32> to vector<1x128xi32>
    %610 = vector.broadcast %609 : vector<1x128xi32> to vector<128x128xi32>
    %611 = arith.cmpi eq, %285, %610 : vector<128x128xi32>
    %612 = vector.extract_strided_slice %191 {offsets = [7, 0], sizes = [1, 128], strides = [1, 1]} : vector<8x128xf32> to vector<1x128xf32>
    %cst_159 = arith.constant 0.000000e+00 : f32
    %613 = vector.shape_cast %612 : vector<1x128xf32> to vector<1x128xf32>
    %614 = vector.broadcast %613 : vector<1x128xf32> to vector<128x128xf32>
    %615 = vector.broadcast %cst_159 : f32 to vector<128x128xf32>
    %616 = arith.select %611, %614, %615 : vector<128x128xi1>, vector<128x128xf32>
    %617 = arith.addf %608, %616 : vector<128x128xf32>
    %618 = vector.extract_strided_slice %215 {offsets = [7, 0], sizes = [1, 128], strides = [1, 1]} : vector<8x128xi32> to vector<1x128xi32>
    %619 = vector.broadcast %618 : vector<1x128xi32> to vector<128x128xi32>
    %620 = arith.cmpi eq, %285, %619 : vector<128x128xi32>
    %621 = vector.extract_strided_slice %217 {offsets = [7, 0], sizes = [1, 128], strides = [1, 1]} : vector<8x128xf32> to vector<1x128xf32>
    %cst_160 = arith.constant 0.000000e+00 : f32
    %622 = vector.shape_cast %621 : vector<1x128xf32> to vector<1x128xf32>
    %623 = vector.broadcast %622 : vector<1x128xf32> to vector<128x128xf32>
    %624 = vector.broadcast %cst_160 : f32 to vector<128x128xf32>
    %625 = arith.select %620, %623, %624 : vector<128x128xi1>, vector<128x128xf32>
    %626 = arith.addf %617, %625 : vector<128x128xf32>
    %627 = vector.extract_strided_slice %241 {offsets = [7, 0], sizes = [1, 128], strides = [1, 1]} : vector<8x128xi32> to vector<1x128xi32>
    %628 = vector.broadcast %627 : vector<1x128xi32> to vector<128x128xi32>
    %629 = arith.cmpi eq, %285, %628 : vector<128x128xi32>
    %630 = vector.extract_strided_slice %243 {offsets = [7, 0], sizes = [1, 128], strides = [1, 1]} : vector<8x128xf32> to vector<1x128xf32>
    %cst_161 = arith.constant 0.000000e+00 : f32
    %631 = vector.shape_cast %630 : vector<1x128xf32> to vector<1x128xf32>
    %632 = vector.broadcast %631 : vector<1x128xf32> to vector<128x128xf32>
    %633 = vector.broadcast %cst_161 : f32 to vector<128x128xf32>
    %634 = arith.select %629, %632, %633 : vector<128x128xi1>, vector<128x128xf32>
    %635 = arith.addf %626, %634 : vector<128x128xf32>
    %636 = vector.extract_strided_slice %267 {offsets = [7, 0], sizes = [1, 128], strides = [1, 1]} : vector<8x128xi32> to vector<1x128xi32>
    %637 = vector.broadcast %636 : vector<1x128xi32> to vector<128x128xi32>
    %638 = arith.cmpi eq, %285, %637 : vector<128x128xi32>
    %639 = vector.extract_strided_slice %269 {offsets = [7, 0], sizes = [1, 128], strides = [1, 1]} : vector<8x128xf32> to vector<1x128xf32>
    %cst_162 = arith.constant 0.000000e+00 : f32
    %640 = vector.shape_cast %639 : vector<1x128xf32> to vector<1x128xf32>
    %641 = vector.broadcast %640 : vector<1x128xf32> to vector<128x128xf32>
    %642 = vector.broadcast %cst_162 : f32 to vector<128x128xf32>
    %643 = arith.select %638, %641, %642 : vector<128x128xi1>, vector<128x128xf32>
    %644 = arith.addf %635, %643 : vector<128x128xf32>
    %645 = arith.truncf %644 : vector<128x128xf32> to vector<128x128xbf16>
    %cst_163 = arith.constant dense<0.000000e+00> : vector<8x128xf32>
    %646 = tpu.matmul %284, %645, %cst_163 {dimension_numbers = #tpu.dot_dimension_numbers<[1], [0], [0], [1], [0, 0, 1, 1], [], []>} : vector<8x128xbf16>, vector<128x128xbf16>, vector<8x128xf32> -> vector<8x128xf32>
    %647 = arith.addf %281, %646 : vector<8x128xf32>
    %cst_164 = arith.constant 0.000000e+00 : f32
    %648 = vector.broadcast %cst_164 : f32 to vector<8x128xf32>
    %649 = arith.maximumf %647, %648 : vector<8x128xf32>
    %650 = vector.broadcast %276 : vector<8x1xf32> to vector<8x128xf32>
    %651 = arith.mulf %649, %650 : vector<8x128xf32>
    %cst_165 = arith.constant dense<0.000000e+00> : vector<128xf32>
    %652 = vector.multi_reduction <add>, %651, %cst_165 [0] : vector<8x128xf32> to vector<128xf32>
    %653 = vector.shape_cast %652 : vector<128xf32> to vector<1x128xf32>
    %654 = tpu.concatenate %331, %377, %423, %469, %515, %561, %607, %653 in 0 : vector<1x128xf32>, vector<1x128xf32>, vector<1x128xf32>, vector<1x128xf32>, vector<1x128xf32>, vector<1x128xf32>, vector<1x128xf32>, vector<1x128xf32> -> vector<8x128xf32>
    %655 = vector.broadcast %277 : vector<1x1xf32> to vector<8x128xf32>
    %656 = arith.addf %654, %655 : vector<8x128xf32>
    %c0_166 = arith.constant 0 : index
    %c0_167 = arith.constant 0 : index
    %657 = vector.load %arg7[%c0_166, %c0_167] : memref<8x1xf32, #tpu.memory_space<vmem>>, vector<8x1xf32>
    %cst_168 = arith.constant dense<0xFF800000> : vector<128xf32>
    %658 = vector.multi_reduction <maximumf>, %656, %cst_168 [0] : vector<8x128xf32> to vector<128xf32>
    %659 = vector.shape_cast %658 : vector<128xf32> to vector<1x128xf32>
    %660 = vector.broadcast %659 : vector<1x128xf32> to vector<8x128xf32>
    %661 = arith.subf %656, %660 : vector<8x128xf32>
    %662 = math.exp %661 : vector<8x128xf32>
    %663 = vector.broadcast %657 : vector<8x1xf32> to vector<8x128xf32>
    %664 = arith.mulf %662, %663 : vector<8x128xf32>
    %cst_169 = arith.constant dense<0.000000e+00> : vector<128xf32>
    %665 = vector.multi_reduction <add>, %664, %cst_169 [0] : vector<8x128xf32> to vector<128xf32>
    %666 = vector.shape_cast %665 : vector<128xf32> to vector<1x128xf32>
    %cst_170 = arith.constant dense<0.000000e+00> : vector<128xf32>
    %667 = vector.multi_reduction <add>, %662, %cst_170 [0] : vector<8x128xf32> to vector<128xf32>
    %668 = vector.shape_cast %667 : vector<128xf32> to vector<1x128xf32>
    %669 = arith.divf %666, %668 : vector<1x128xf32>
    %c0_171 = arith.constant 0 : index
    %c0_172 = arith.constant 0 : index
    %c0_173 = arith.constant 0 : index
    %670 = vector.load %arg8[%c0_171, %c0_172, %c0_173] : memref<1x1x128xf32, #tpu.memory_space<vmem>>, vector<1x1x128xf32>
    %671 = vector.shape_cast %670 : vector<1x1x128xf32> to vector<1x128xf32>
    %672 = vector.shape_cast %669 : vector<1x128xf32> to vector<1x1x128xf32>
    tpu.vector_store %arg8[%c0_171, %c0_172, %c0_173], %672 {strides = array<i32>} : memref<1x1x128xf32, #tpu.memory_space<vmem>>, vector<1x1x128xf32>,
    return
  }
  func.func @transform_0(%arg0: i32) -> (i32, i32, i32) {
    %c0_i32 = arith.constant 0 : i32
    %c0_i32_0 = arith.constant 0 : i32
    %c0_i32_1 = arith.constant 0 : i32
    return %arg0, %c0_i32, %c0_i32_0 : i32, i32, i32
  }
  func.func @transform_1(%arg0: i32) -> (i32, i32, i32) {
    %c0_i32 = arith.constant 0 : i32
    %c0_i32_0 = arith.constant 0 : i32
    %c0_i32_1 = arith.constant 0 : i32
    return %arg0, %c0_i32, %c0_i32_0 : i32, i32, i32
  }
  func.func @transform_2(%arg0: i32) -> (i32, i32, i32, i32) {
    %c0_i32 = arith.constant 0 : i32
    %c0_i32_0 = arith.constant 0 : i32
    %c0_i32_1 = arith.constant 0 : i32
    %c0_i32_2 = arith.constant 0 : i32
    return %arg0, %c0_i32, %c0_i32_0, %c0_i32_1 : i32, i32, i32, i32
  }
  func.func @transform_3(%arg0: i32) -> (i32, i32) {
    %c0_i32 = arith.constant 0 : i32
    %c0_i32_0 = arith.constant 0 : i32
    %c0_i32_1 = arith.constant 0 : i32
    return %c0_i32, %c0_i32_0 : i32, i32
  }
  func.func @transform_4(%arg0: i32) -> (i32, i32) {
    %c0_i32 = arith.constant 0 : i32
    %c0_i32_0 = arith.constant 0 : i32
    %c0_i32_1 = arith.constant 0 : i32
    return %c0_i32, %c0_i32_0 : i32, i32
  }
  func.func @transform_5(%arg0: i32) -> (i32, i32) {
    %c0_i32 = arith.constant 0 : i32
    %c0_i32_0 = arith.constant 0 : i32
    %c0_i32_1 = arith.constant 0 : i32
    return %c0_i32, %c0_i32_0 : i32, i32
  }
  func.func @transform_6(%arg0: i32) -> (i32, i32) {
    %c0_i32 = arith.constant 0 : i32
    %c0_i32_0 = arith.constant 0 : i32
    %c0_i32_1 = arith.constant 0 : i32
    return %c0_i32, %c0_i32_0 : i32, i32
  }
  func.func @transform_7(%arg0: i32) -> (i32, i32, i32) {
    %c0_i32 = arith.constant 0 : i32
    %c0_i32_0 = arith.constant 0 : i32
    %c0_i32_1 = arith.constant 0 : i32
    return %arg0, %c0_i32, %c0_i32_0 : i32, i32, i32
  }
}

</mosaic_0001>

<llo_original>
// kernel: custom-call.11
$region0: #{custom-call.11}
  %s0 = inlined_call_operand.vmem [shape: f32[2,4,4], index: 0, kind: input, shape index: {}]
  %s1 = inlined_call_operand.vmem [shape: f32[2,4,4], index: 1, kind: output, shape index: {0}]
  %s2 = inlined_call_operand.hbm [shape: s32[2,4], index: 2, kind: output, shape index: {1}]
  %s3 = inlined_call_operand.vmem [shape: s32[2,4], index: 3, kind: output, shape index: {2}]
  %4 = xla_tuple %s1, %s2, %s3
  $region1: #{custom-call.11} parent=0
    #allocation0 [shape = 'u8[4096]{0}', space=vmem, size = 0x1000, scoped, tag = 'operand span for operand 0']
    #allocation1 [shape = 'u8[4096]{0}', space=vmem, size = 0x1000, scoped, tag = 'packed  for operand 0']
    #allocation2 [shape = 'u8[4096]{0}', space=vmem, size = 0x1000, scoped, tag = 'operand span for operand 1']
    #allocation3 [shape = 'u8[4096]{0}', space=vmem, size = 0x1000, scoped, tag = 'packed  for operand 1']
    #allocation4 [shape = 'u8[4096]{0}', space=vmem, size = 0x1000, scoped, tag = 'operand span for operand 2']
    #allocation5 [shape = 'u8[2048]{0}', space=vmem, size = 0x800, scoped, tag = 'packed  for operand 2']
    #allocation6 [shape = 's32[2]{0}', space=sflag, size = 0x8, scoped, tag = 'scoped memory for custom-call.11']
    #allocation7 [shape = 'u8[4096]{0}', space=vmem, size = 0x1000, scoped, tag = 'operand span for operand 3']
    #allocation8 [shape = 'u8[2048]{0}', space=vmem, size = 0x800, scoped, tag = 'packed  for operand 3']
    %5 = vsyncpa [#allocation6], 0
    %s6 = scalar_lea.sflag [#allocation6], 1
    %7 = vsyncpa %s6, 0
    loop: start=0, step=1, limit=4
    $region2: #{custom-call.11} parent=1 // loop_pre_header
      _
    $region3: #{custom-call.11} parent=1 // loop_header
      %s9 = sphi 0, %s13
      %p10 = scmp.ge.s32.totalorder %s9, 4
      %s21 = sphi 0, %s23
      %s24 = sphi 0, %s21
      %s25 = sphi 0, %s24
      %s41 = sphi 0, %s25
      %s49 = sphi 0, %s51
      %s52 = sphi 0, %s49
      %s53 = sphi 0, %s52
      %s69 = sphi 0, %s53
    $region4: #{custom-call.11} parent=1 // loop_header_branch
      %12 = sbr.rel (%p10) target = $region8
    $region5: #{custom-call.11} parent=1 // loop_body
      %s14 = ssub.s32 %s9, 1
      %s15 = ssub.s32 %s9, 2
      %s16 = sadd.s32 %s9, 1
      %s17 = sshrl.u32 %s9, 3
      %s18 = sshrl.u32 %s16, 3
      %s19 = ssub.s32 %s17, %s18
      %p20 = scmp.eq.s32.totalorder %s19, 0
      %s22 = sadd.s32 %s21, 1
      %s23 = scalar_select %p20, %s21, %s22
      %p26 = pneg %p20
      %p27 = scmp.eq.s32.totalorder %s9, 1
      %p28 = por %p26, %p27
      %p29 = scmp.ne.s32.totalorder %s21, %s24
      %p30 = scmp.eq.s32.totalorder %s9, 0
      %p31 = por %p29, %p30
      %p32 = scmp.ne.s32.totalorder %s21, %s24
      %p33 = scmp.eq.s32.totalorder %s14, 1
      %p34 = por %p32, %p33
      %p35 = scmp.ne.s32.totalorder %s24, %s25
      %p36 = scmp.eq.s32.totalorder %s14, 0
      %p37 = por %p35, %p36
      %p38 = scmp.ne.s32.totalorder %s24, %s25
      %p39 = scmp.eq.s32.totalorder %s15, 1
      %p40 = por %p38, %p39
      %p42 = scmp.ne.s32.totalorder %s25, %s41
      %p43 = scmp.eq.s32.totalorder %s15, 0
      %p44 = por %p42, %p43
      %s45 = sshrl.u32 %s9, 3
      %s46 = sshrl.u32 %s16, 3
      %s47 = ssub.s32 %s45, %s46
      %p48 = scmp.eq.s32.totalorder %s47, 0
      %s50 = sadd.s32 %s49, 1
      %s51 = scalar_select %p48, %s49, %s50
      %p54 = pneg %p48
      %p55 = scmp.eq.s32.totalorder %s9, 1
      %p56 = por %p54, %p55
      %p57 = scmp.ne.s32.totalorder %s49, %s52
      %p58 = scmp.eq.s32.totalorder %s9, 0
      %p59 = por %p57, %p58
      %p60 = scmp.ne.s32.totalorder %s49, %s52
      %p61 = scmp.eq.s32.totalorder %s14, 1
      %p62 = por %p60, %p61
      %p63 = scmp.ne.s32.totalorder %s52, %s53
      %p64 = scmp.eq.s32.totalorder %s14, 0
      %p65 = por %p63, %p64
      %p66 = scmp.ne.s32.totalorder %s52, %s53
      %p67 = scmp.eq.s32.totalorder %s15, 1
      %p68 = por %p66, %p67
      %p70 = scmp.ne.s32.totalorder %s53, %s69
      %p71 = scmp.eq.s32.totalorder %s15, 0
      %p72 = por %p70, %p71
      %p73 = scmp.le.s32.totalorder 1, %s9
      %p74 = scmp.lt.s32.totalorder %s9, 3
      %p75 = pnand %p73, %p74
      %p76 = pneg %p75
      // Predicated region
      $region9: #{custom-call.11} parent=5 // pred_check
        _
      $region10: #{custom-call.11} parent=5 // pred_check_branch
        %78 = sbr.rel (%p75) target = $region12
      $region11: #{custom-call.11} parent=5 // pred_region
        %s79 = ssub.s32 %s9, 1
      $region12: #{custom-call.11} parent=5 // pred_fallthru
        _
      %p80 = scmp.lt.s32.totalorder %s9, 2
      // Predicated region
      $region13: #{custom-call.11} parent=5 // pred_check
        %p81 = pneg %p80
      $region14: #{custom-call.11} parent=5 // pred_check_branch
        %83 = sbr.rel (%p81) target = $region16
      $region15: #{custom-call.11} parent=5 // pred_region
        %s84 = sand.u32 %s9, 1
        %s85 = sand.u32 %s9, 1
        %s86 = smul.addr %s85, 4
        %s87 = scalar_lea.vmem [#allocation1], %s86
        %s88 = smul.addr %s9, 4
        %s89 = scalar_lea.vmem %s0, %s88
        // Predicated region
        $region17: #{custom-call.11} parent=15 // pred_check
          _
        $region18: #{custom-call.11} parent=15 // pred_check_branch
          %91 = sbr.rel (0) target = $region20
        $region19: #{custom-call.11} parent=15 // pred_region
          // Predicated region
          $region21: #{custom-call.11} parent=19 // pred_check
            _
          $region22: #{custom-call.11} parent=19 // pred_check_branch
            %93 = sbr.rel target = $region24
          $region23: #{custom-call.11} parent=19 // pred_region
            // Predicated region
            $region36: #{custom-call.11} parent=23 // pred_check
              _
            $region37: #{custom-call.11} parent=23 // pred_check_branch
              %108 = sbr.rel (0) target = $region39
            $region38: #{custom-call.11} parent=23 // pred_region
              loop: start=0, step=1, limit=1
              $region40: #{custom-call.11} parent=38 // loop_pre_header
                _
              $region41: #{custom-call.11} parent=38 // loop_header
                %s111 = sphi 0, %s115
                %p112 = scmp.ge.s32.totalorder %s111, 1
                %s116 = sphi %s89, %s89
                %s117 = sphi %s87, %s87
              $region42: #{custom-call.11} parent=38 // loop_header_branch
                %114 = sbr.rel (%p112) target = $region46
              $region43: #{custom-call.11} parent=38 // loop_body
                %v118 = vld [vmem:[%s116] sm:$0xf]
                %119 = vst [vmem:[%s117] sm:$0xf] %v118
              $region44: #{custom-call.11} parent=38 // loop_footer
                %s115 = sadd.s32 1, %s111
              $region45: #{custom-call.11} parent=38 // loop_footer_branch
                %110 = sbr.rel target = $region41
              $region46: #{custom-call.11} parent=38 // loop_exit
                _
            $region39: #{custom-call.11} parent=23 // pred_fallthru
              _
          $region24: #{custom-call.11} parent=19 // pred_fallthru
            _
          // Predicated region
          $region25: #{custom-call.11} parent=19 // pred_check
            _
          $region26: #{custom-call.11} parent=19 // pred_check_branch
            %95 = sbr.rel (0) target = $region28
          $region27: #{custom-call.11} parent=19 // pred_region
            loop: start=0, step=1, limit=1
            $region29: #{custom-call.11} parent=27 // loop_pre_header
              _
            $region30: #{custom-call.11} parent=27 // loop_header
              %s98 = sphi 0, %s102
              %p99 = scmp.ge.s32.totalorder %s98, 1
              %s103 = sphi %s89, %s89
              %s104 = sphi %s87, %s87
            $region31: #{custom-call.11} parent=27 // loop_header_branch
              %101 = sbr.rel (%p99) target = $region35
            $region32: #{custom-call.11} parent=27 // loop_body
              %v105 = vld [vmem:[%s103] sm:$0xf]
              %106 = vst [vmem:[%s104] sm:$0xf] %v105
            $region33: #{custom-call.11} parent=27 // loop_footer
              %s102 = sadd.s32 1, %s98
            $region34: #{custom-call.11} parent=27 // loop_footer_branch
              %97 = sbr.rel target = $region30
            $region35: #{custom-call.11} parent=27 // loop_exit
              _
          $region28: #{custom-call.11} parent=19 // pred_fallthru
            _
        $region20: #{custom-call.11} parent=15 // pred_fallthru
          _
        %120 = vnop
      $region16: #{custom-call.11} parent=5 // pred_fallthru
        _
      %p121 = scmp.le.s32.totalorder 1, %s9
      %p122 = scmp.lt.s32.totalorder %s9, 3
      %p123 = pnand %p121, %p122
      %p124 = pneg %p123
      // Predicated region
      $region47: #{custom-call.11} parent=5 // pred_check
        _
      $region48: #{custom-call.11} parent=5 // pred_check_branch
        %126 = sbr.rel (%p123) target = $region50
      $region49: #{custom-call.11} parent=5 // pred_region
        #allocation9 [shape = 's32[4,128]{1,0}', space=vmem, size = 0x1000, scoped, tag = 'scratch for permutations']
        %s127 = ssub.s32 %s9, 1
        %s128 = sand.u32 %s14, 1
        %s129 = sand.u32 %s14, 1
        %s130 = smul.addr %s129, 4
        %s131 = scalar_lea.vmem [#allocation1], %s130
        %s132 = sand.u32 %s14, 1
        %s133 = sand.u32 %s14, 1
        %s134 = smul.addr %s133, 4
        %s135 = scalar_lea.vmem [#allocation1], %s134
        %s136 = sand.u32 %s14, 1
        %s137 = sand.u32 %s14, 1
        %s138 = smul.addr %s137, 4
        %s139 = scalar_lea.vmem [#allocation3], %s138
        %p140 = pneg %p37
        %p141 = pneg %p34
        %s142 = sand.u32 %s24, 1
        %s143 = scalar_lea.sflag [#allocation6], %s142
        %s144 = sand.u32 %s24, 1
        %s145 = smul.addr %s144, 2
        %s146 = scalar_lea.vmem [#allocation5], %s145
        %p147 = pneg %p65
        %p148 = pneg %p62
        %s149 = sand.u32 %s52, 1
        %s150 = sand.u32 %s52, 1
        %s151 = smul.addr %s150, 2
        %s152 = scalar_lea.vmem [#allocation8], %s151
        %s154 = sshllo.u32 0, 4
        %v155 = vld [vmem:[%s135] sm:%s154]
        %156 = vst [vmem:[#allocation0] sm:%s154] %v155
        %s157 = sshrl.u32 %s14, 3
        %s158 = sshrl.u32 %s14, 3
        %v159 = vld [vmem:[#allocation0] sm:$0xff]
        %160 = vst [vmem:[#allocation2] sm:$0xff] %v159
        %s161 = sand.u32 %s14, 7
        %s162 = scalar_lea.vmem [#allocation4], %s161
        %s163 = sand.u32 %s14, 7
        %s164 = scalar_lea.vmem [#allocation7], %s163
        %165 = vst [vmem:[%s162] sm:$0x1] 0
        %v166 = vlaneseq
        %v167 = vshrl.u32 %v166, 7
        %v168 = vmov %v167
        %170 = vst [vmem:[#allocation9] sm:$0xff] %v168
        loop: start=0, step=1, limit=4
        $region52: #{custom-call.11} parent=49 // loop_pre_header
          _
        $region53: #{custom-call.11} parent=49 // loop_header
          %s172 = sphi 0, %s176
          %p173 = scmp.ge.s32.totalorder %s172, 4
        $region54: #{custom-call.11} parent=49 // loop_header_branch
          %175 = sbr.rel (%p173) target = $region58
        $region55: #{custom-call.11} parent=49 // loop_body
          %v177 = vstv %s172
          %v178 = vlaneseq
          %v179 = vshrl.u32 %v178, 7
          %v180 = vmov %v179
          %v181 = vld [vmem:[#allocation2] sm:$0xff]
          %v182 = vand.u32 2147483647, %v181
          %v184 = vstv %s172
          %vm185 = vcmp.ge.s32.totalorder %v180, %v184
          %vm186 = vcmp.lt.s32.totalorder %v180, 4
          %vm187 = vmand %vm185, %vm186
          %vm188 = vcmp.lt.f32.partialorder -inf, %v182
          %vm189 = vmand %vm187, %vm188
          %v190 = vsel %vm189, %v180, %v177
          %v191 = vsel %vm189, %v182, -inf
          %v192 = vrot.slane %v191, 1
          %v193 = vrot.slane %v190, 1
          %vm194 = vcmp.ge.f32.partialorder %v192, %v191
          %v195 = vsel %vm194, %v192, %v191
          %v196 = vsel %vm194, %v193, %v190
          %v197 = vrot.slane %v192, 1
          %v198 = vrot.slane %v193, 1
          %vm199 = vcmp.ge.f32.partialorder %v197, %v195
          %v200 = vsel %vm199, %v197, %v195
          %v201 = vsel %vm199, %v198, %v196
          %v202 = vrot.slane %v197, 1
          %v203 = vrot.slane %v198, 1
          %vm204 = vcmp.ge.f32.partialorder %v202, %v200
          %v205 = vsel %vm204, %v202, %v200
          %v206 = vsel %vm204, %v203, %v201
          %v207 = vrot.slane %v202, 1
          %v208 = vrot.slane %v203, 1
          %vm209 = vcmp.ge.f32.partialorder %v207, %v205
          %v210 = vsel %vm209, %v207, %v205
          %v211 = vsel %vm209, %v208, %v206
          %v212 = vrot.slane %v207, 1
          %v213 = vrot.slane %v208, 1
          %vm214 = vcmp.ge.f32.partialorder %v212, %v210
          %v215 = vsel %vm214, %v212, %v210
          %v216 = vsel %vm214, %v213, %v211
          %v217 = vrot.slane %v212, 1
          %v218 = vrot.slane %v213, 1
          %vm219 = vcmp.ge.f32.partialorder %v217, %v215
          %v220 = vsel %vm219, %v217, %v215
          %v221 = vsel %vm219, %v218, %v216
          %v222 = vrot.slane %v217, 1
          %v223 = vrot.slane %v218, 1
          %vm224 = vcmp.ge.f32.partialorder %v222, %v220
          %v225 = vsel %vm224, %v222, %v220
          %v226 = vsel %vm224, %v223, %v221
          %s227 = ssub.s32 128, %s172
          %228 = vrot.lane.b32.xlu0 %v226, %s227
          %v229 = vpop.permute.xlu0 %228
          %s230 = vtos %v229
          %v231 = vstv %s172
          %v232 = vlaneseq
          %v233 = vand.u32 %v232, 127
          %vm234 = vcmp.eq.s32.totalorder %v233, %v231
          %v235 = vstv %s230
          %v236 = vld [vmem:[%s162] ss:$0 sm:$0xff]
          %v237 = vsel %vm234, %v235, %v236
          %238 = vst [vmem:[%s162] sm:$0x1] %v237
          %s239 = scalar_lea.vmem [#allocation2], %s172
          %s240 = scalar_lea.vmem [#allocation2], %s230
          %v241 = vld [vmem:[%s239] ss:$0 sm:$0xff]
          %v242 = vld [vmem:[%s240] ss:$0 sm:$0xff]
          %243 = vst [vmem:[%s240] sm:$0x1] %v241
          %244 = vst [vmem:[%s239] sm:$0x1] %v242
          %s245 = scalar_lea.vmem [#allocation9], %s172
          %s246 = scalar_lea.vmem [#allocation9], %s230
          %v247 = vld [vmem:[%s245] ss:$0 sm:$0xff]
          %v248 = vld [vmem:[%s246] ss:$0 sm:$0xff]
          %249 = vst [vmem:[%s246] sm:$0x1] %v247
          %250 = vst [vmem:[%s245] sm:$0x1] %v248
          %vm251 = vcmp.ne.f32.partialorder %v242, 0.0
          %vm252 = vmand %vm234, %vm251
          %v253 = vsel %vm252, %v242, 1.0
          %v254 = vlaneseq
          %v255 = vand.u32 %v254, 127
          %v256 = vstv %s172
          %vm257 = vcmp.gt.s32.totalorder %v255, %v256
          %v258 = vsel %vm257, %v242, 0.0
          %v259 = vlaneseq
          %v260 = vshrl.u32 %v259, 7
          %v261 = vmov %v260
          %v262 = vld [vmem:[#allocation2] sm:$0xff]
          %v264 = vstv %s172
          %vm265 = vcmp.gt.s32.totalorder %v261, %v264
          %v266 = vsel %vm265, %v253, 1.0
          %v267 = vrcp.pop %v266
          %v268 = vmul.f32 %v262, %v267
          %vm269 = vmand %vm265, %vm234
          %v270 = vsel %vm269, %v268, 0.0
          %271 = vadd.xlane.f32.xlu0 %v270
          %v272 = vpop.xlane.xlu0 %271
          %v273 = vmul.f32 %v272, %v258
          %v274 = vsub.f32 %v268, %v273
          %275 = vst [vmem:[#allocation2] sm:$0xff] %v274
        $region56: #{custom-call.11} parent=49 // loop_footer
          %s176 = sadd.s32 1, %s172
        $region57: #{custom-call.11} parent=49 // loop_footer_branch
          %171 = sbr.rel target = $region53
        $region58: #{custom-call.11} parent=49 // loop_exit
          _
        %v276 = vld [vmem:[#allocation9] sm:$0xff]
        %s277 = scalar_lea.vmem [#allocation9], 8
        %s278 = scalar_lea.vmem [#allocation9], 16
        %s279 = scalar_lea.vmem [#allocation9], 24
        %s280 = scalar_lea.vmem [#allocation9], 32
        %s281 = scalar_lea.vmem [#allocation9], 40
        %s282 = scalar_lea.vmem [#allocation9], 48
        %s283 = scalar_lea.vmem [#allocation9], 56
        %s284 = scalar_lea.vmem [#allocation9], 64
        %s285 = scalar_lea.vmem [#allocation9], 72
        %s286 = scalar_lea.vmem [#allocation9], 80
        %s287 = scalar_lea.vmem [#allocation9], 88
        %s288 = scalar_lea.vmem [#allocation9], 96
        %s289 = scalar_lea.vmem [#allocation9], 104
        %s290 = scalar_lea.vmem [#allocation9], 112
        %s291 = scalar_lea.vmem [#allocation9], 120
        %292 = vxpose.xlu0.b32.start [1/16] %v276, 128
        %293 = vxpose.xlu0.b32.cont [2/16] 0, 128
        %294 = vxpose.xlu0.b32.cont [3/16] 0, 128
        %295 = vxpose.xlu0.b32.cont [4/16] 0, 128
        %296 = vxpose.xlu0.b32.cont [5/16] 0, 128
        %297 = vxpose.xlu0.b32.cont [6/16] 0, 128
        %298 = vxpose.xlu0.b32.cont [7/16] 0, 128
        %299 = vxpose.xlu0.b32.cont [8/16] 0, 128
        %300 = vxpose.xlu0.b32.cont [9/16] 0, 128
        %301 = vxpose.xlu0.b32.cont [10/16] 0, 128
        %302 = vxpose.xlu0.b32.cont [11/16] 0, 128
        %303 = vxpose.xlu0.b32.cont [12/16] 0, 128
        %304 = vxpose.xlu0.b32.cont [13/16] 0, 128
        %305 = vxpose.xlu0.b32.cont [14/16] 0, 128
        %306 = vxpose.xlu0.b32.cont [15/16] 0, 128
        %307 = vxpose.xlu0.b32.end [16/16] 0, 128
        %v308 = vpop.trf.xlu0
        %v309 = vpop.trf.xlu0
        %v310 = vpop.trf.xlu0
        %v311 = vpop.trf.xlu0
        %v312 = vpop.trf.xlu0
        %v313 = vpop.trf.xlu0
        %v314 = vpop.trf.xlu0
        %v315 = vpop.trf.xlu0
        %v316 = vpop.trf.xlu0
        %v317 = vpop.trf.xlu0
        %v318 = vpop.trf.xlu0
        %v319 = vpop.trf.xlu0
        %v320 = vpop.trf.xlu0
        %v321 = vpop.trf.xlu0
        %v322 = vpop.trf.xlu0
        %v323 = vpop.trf.xlu0
        %324 = vst [vmem:[%s164] sm:$0x1] %v308
        %s326 = sshllo.u32 0, 4
        %v328 = vld [vmem:[#allocation2] sm:%s326]
        %s329 = sshllo.u32 0, 4
        %330 = vst [vmem:[%s139] sm:%s329] %v328
        %s332 = sshllo.u32 0, 2
        %v334 = vld [vmem:[#allocation4] sm:%s332]
        %s335 = sshllo.u32 0, 2
        %336 = vst [vmem:[%s146] sm:%s335] %v334
        %s338 = sshllo.u32 0, 2
        %v340 = vld [vmem:[#allocation7] sm:%s338]
        %s341 = sshllo.u32 0, 2
        %342 = vst [vmem:[%s152] sm:%s341] %v340
        %s343 = sand.u32 %s14, 1
        %s344 = sand.u32 %s14, 1
        %s345 = smul.addr %s344, 4
        %s346 = scalar_lea.vmem [#allocation3], %s345
        %s347 = sand.u32 %s24, 1
        %s348 = scalar_lea.sflag [#allocation6], %s347
        %s349 = sand.u32 %s24, 1
        %s350 = smul.addr %s349, 2
        %s351 = scalar_lea.vmem [#allocation5], %s350
        %s352 = sand.u32 %s52, 1
        %s353 = sand.u32 %s52, 1
        %s354 = smul.addr %s353, 2
        %s355 = scalar_lea.vmem [#allocation8], %s354
        %s356 = smul.addr %s14, 4
        %s357 = scalar_lea.vmem %s1, %s356
        // Predicated region
        $region59: #{custom-call.11} parent=49 // pred_check
          _
        $region60: #{custom-call.11} parent=49 // pred_check_branch
          %359 = sbr.rel (0) target = $region62
        $region61: #{custom-call.11} parent=49 // pred_region
          // Predicated region
          $region63: #{custom-call.11} parent=61 // pred_check
            _
          $region64: #{custom-call.11} parent=61 // pred_check_branch
            %361 = sbr.rel target = $region66
          $region65: #{custom-call.11} parent=61 // pred_region
            // Predicated region
            $region78: #{custom-call.11} parent=65 // pred_check
              _
            $region79: #{custom-call.11} parent=65 // pred_check_branch
              %376 = sbr.rel (0) target = $region81
            $region80: #{custom-call.11} parent=65 // pred_region
              loop: start=0, step=1, limit=1
              $region82: #{custom-call.11} parent=80 // loop_pre_header
                _
              $region83: #{custom-call.11} parent=80 // loop_header
                %s379 = sphi 0, %s383
                %p380 = scmp.ge.s32.totalorder %s379, 1
                %s384 = sphi %s346, %s346
                %s385 = sphi %s357, %s357
              $region84: #{custom-call.11} parent=80 // loop_header_branch
                %382 = sbr.rel (%p380) target = $region88
              $region85: #{custom-call.11} parent=80 // loop_body
                %v386 = vld [vmem:[%s384] sm:$0xf]
                %387 = vst [vmem:[%s385] sm:$0xf] %v386
              $region86: #{custom-call.11} parent=80 // loop_footer
                %s383 = sadd.s32 1, %s379
              $region87: #{custom-call.11} parent=80 // loop_footer_branch
                %378 = sbr.rel target = $region83
              $region88: #{custom-call.11} parent=80 // loop_exit
                _
            $region81: #{custom-call.11} parent=65 // pred_fallthru
              _
          $region66: #{custom-call.11} parent=61 // pred_fallthru
            _
          // Predicated region
          $region67: #{custom-call.11} parent=61 // pred_check
            _
          $region68: #{custom-call.11} parent=61 // pred_check_branch
            %363 = sbr.rel (0) target = $region70
          $region69: #{custom-call.11} parent=61 // pred_region
            loop: start=0, step=1, limit=1
            $region71: #{custom-call.11} parent=69 // loop_pre_header
              _
            $region72: #{custom-call.11} parent=69 // loop_header
              %s366 = sphi 0, %s370
              %p367 = scmp.ge.s32.totalorder %s366, 1
              %s371 = sphi %s346, %s346
              %s372 = sphi %s357, %s357
            $region73: #{custom-call.11} parent=69 // loop_header_branch
              %369 = sbr.rel (%p367) target = $region77
            $region74: #{custom-call.11} parent=69 // loop_body
              %v373 = vld [vmem:[%s371] sm:$0xf]
              %374 = vst [vmem:[%s372] sm:$0xf] %v373
            $region75: #{custom-call.11} parent=69 // loop_footer
              %s370 = sadd.s32 1, %s366
            $region76: #{custom-call.11} parent=69 // loop_footer_branch
              %365 = sbr.rel target = $region72
            $region77: #{custom-call.11} parent=69 // loop_exit
              _
          $region70: #{custom-call.11} parent=61 // pred_fallthru
            _
        $region62: #{custom-call.11} parent=49 // pred_fallthru
          _
        %388 = vnop
        // Predicated region
        $region89: #{custom-call.11} parent=49 // pred_check
          %p389 = pneg %p34
        $region90: #{custom-call.11} parent=49 // pred_check_branch
          %391 = sbr.rel (%p389) target = $region92
        $region91: #{custom-call.11} parent=49 // pred_region
          %s392 = sshrl.u32 %s14, 3
          %s394 = ssub.s32 32, 32
          %395 = vsyncadd %s348, %s394
          %s396 = smul.addr %s392, 32
          %s397 = scalar_lea.hbm %s2, %s396
          %s399 = sshll.u32 %s351, 4
          %s400 = int_to_ptr.vmem [resolvable:$true] %s399
          %402 = dma.vmem_to_hbm [thread:$0]  %s400, 32, %s397, %s348
        $region92: #{custom-call.11} parent=49 // pred_fallthru
          _
        // Predicated region
        $region93: #{custom-call.11} parent=49 // pred_check
          %p403 = pneg %p62
        $region94: #{custom-call.11} parent=49 // pred_check_branch
          %405 = sbr.rel (%p403) target = $region96
        $region95: #{custom-call.11} parent=49 // pred_region
          %s406 = sshrl.u32 %s14, 3
          %s407 = smul.addr %s406, 2
          %s408 = scalar_lea.vmem %s3, %s407
          // Predicated region
          $region97: #{custom-call.11} parent=95 // pred_check
            _
          $region98: #{custom-call.11} parent=95 // pred_check_branch
            %410 = sbr.rel (0) target = $region100
          $region99: #{custom-call.11} parent=95 // pred_region
            // Predicated region
            $region101: #{custom-call.11} parent=99 // pred_check
              _
            $region102: #{custom-call.11} parent=99 // pred_check_branch
              %412 = sbr.rel target = $region104
            $region103: #{custom-call.11} parent=99 // pred_region
              // Predicated region
              $region116: #{custom-call.11} parent=103 // pred_check
                _
              $region117: #{custom-call.11} parent=103 // pred_check_branch
                %427 = sbr.rel (0) target = $region119
              $region118: #{custom-call.11} parent=103 // pred_region
                loop: start=0, step=1, limit=1
                $region120: #{custom-call.11} parent=118 // loop_pre_header
                  _
                $region121: #{custom-call.11} parent=118 // loop_header
                  %s430 = sphi 0, %s434
                  %p431 = scmp.ge.s32.totalorder %s430, 1
                  %s435 = sphi %s355, %s355
                  %s436 = sphi %s408, %s408
                $region122: #{custom-call.11} parent=118 // loop_header_branch
                  %433 = sbr.rel (%p431) target = $region126
                $region123: #{custom-call.11} parent=118 // loop_body
                  %v437 = vld [vmem:[%s435] sm:$0x3]
                  %438 = vst [vmem:[%s436] sm:$0x3] %v437
                $region124: #{custom-call.11} parent=118 // loop_footer
                  %s434 = sadd.s32 1, %s430
                $region125: #{custom-call.11} parent=118 // loop_footer_branch
                  %429 = sbr.rel target = $region121
                $region126: #{custom-call.11} parent=118 // loop_exit
                  _
              $region119: #{custom-call.11} parent=103 // pred_fallthru
                _
            $region104: #{custom-call.11} parent=99 // pred_fallthru
              _
            // Predicated region
            $region105: #{custom-call.11} parent=99 // pred_check
              _
            $region106: #{custom-call.11} parent=99 // pred_check_branch
              %414 = sbr.rel (0) target = $region108
            $region107: #{custom-call.11} parent=99 // pred_region
              loop: start=0, step=1, limit=1
              $region109: #{custom-call.11} parent=107 // loop_pre_header
                _
              $region110: #{custom-call.11} parent=107 // loop_header
                %s417 = sphi 0, %s421
                %p418 = scmp.ge.s32.totalorder %s417, 1
                %s422 = sphi %s355, %s355
                %s423 = sphi %s408, %s408
              $region111: #{custom-call.11} parent=107 // loop_header_branch
                %420 = sbr.rel (%p418) target = $region115
              $region112: #{custom-call.11} parent=107 // loop_body
                %v424 = vld [vmem:[%s422] sm:$0x3]
                %425 = vst [vmem:[%s423] sm:$0x3] %v424
              $region113: #{custom-call.11} parent=107 // loop_footer
                %s421 = sadd.s32 1, %s417
              $region114: #{custom-call.11} parent=107 // loop_footer_branch
                %416 = sbr.rel target = $region110
              $region115: #{custom-call.11} parent=107 // loop_exit
                _
            $region108: #{custom-call.11} parent=99 // pred_fallthru
              _
          $region100: #{custom-call.11} parent=95 // pred_fallthru
            _
          %439 = vnop
        $region96: #{custom-call.11} parent=49 // pred_fallthru
          _
      $region50: #{custom-call.11} parent=5 // pred_fallthru
        _
      %p440 = scmp.le.s32.totalorder 2, %s9
      // Predicated region
      $region127: #{custom-call.11} parent=5 // pred_check
        %p441 = pneg %p440
      $region128: #{custom-call.11} parent=5 // pred_check_branch
        %443 = sbr.rel (%p441) target = $region130
      $region129: #{custom-call.11} parent=5 // pred_region
        %s444 = ssub.s32 %s9, 2
        %s445 = sand.u32 %s15, 1
        %s446 = sand.u32 %s15, 1
        %s447 = smul.addr %s446, 4
        %s448 = scalar_lea.vmem [#allocation3], %s447
        // Predicated region
        $region131: #{custom-call.11} parent=129 // pred_check
          %p449 = pneg %p40
        $region132: #{custom-call.11} parent=129 // pred_check_branch
          %451 = sbr.rel (%p449) target = $region134
        $region133: #{custom-call.11} parent=129 // pred_region
          %s452 = sand.u32 %s25, 1
          %s453 = scalar_lea.sflag [#allocation6], %s452
          %s454 = sand.u32 %s25, 1
          %s455 = smul.addr %s454, 2
          %s456 = scalar_lea.vmem [#allocation5], %s455
          %457 = dma.done %s453, 32
        $region134: #{custom-call.11} parent=129 // pred_fallthru
          _
        // Predicated region
        $region135: #{custom-call.11} parent=129 // pred_check
          %p458 = pneg %p68
        $region136: #{custom-call.11} parent=129 // pred_check_branch
          %460 = sbr.rel (%p458) target = $region138
        $region137: #{custom-call.11} parent=129 // pred_region
          %s461 = sand.u32 %s53, 1
          %s462 = sand.u32 %s53, 1
          %s463 = smul.addr %s462, 2
          %s464 = scalar_lea.vmem [#allocation8], %s463
        $region138: #{custom-call.11} parent=129 // pred_fallthru
          _
      $region130: #{custom-call.11} parent=5 // pred_fallthru
        _
    $region6: #{custom-call.11} parent=1 // loop_footer
      %s13 = sadd.s32 1, %s9
    $region7: #{custom-call.11} parent=1 // loop_footer_branch
      %8 = sbr.rel target = $region3
    $region8: #{custom-call.11} parent=1 // loop_exit
      _
    %465 = vsyncpa [#allocation6], 1
    %s466 = scalar_lea.sflag [#allocation6], 1
    %467 = vsyncpa %s466, 1

// kernel: custom-call.13
$region0: #{custom-call.13}
  %s0 = inlined_call_operand.vmem [shape: f32[2,1,4,4], index: 0, kind: input, shape index: {}]
  %s1 = inlined_call_operand.vmem [shape: f32[2,1,4,4], index: 1, kind: output, shape index: {}]
  $region1: #{custom-call.13} parent=0
    #allocation0 [shape = 'u8[4096]{0}', space=vmem, size = 0x1000, scoped, tag = 'operand span for operand 0']
    #allocation1 [shape = 'u8[4096]{0}', space=vmem, size = 0x1000, scoped, tag = 'packed  for operand 0']
    #allocation2 [shape = 'u8[4096]{0}', space=vmem, size = 0x1000, scoped, tag = 'operand span for operand 1']
    #allocation3 [shape = 'u8[4096]{0}', space=vmem, size = 0x1000, scoped, tag = 'packed  for operand 1']
    loop: start=0, step=1, limit=4
    $region2: #{custom-call.13} parent=1 // loop_pre_header
      _
    $region3: #{custom-call.13} parent=1 // loop_header
      %s3 = sphi 0, %s7
      %p4 = scmp.ge.s32.totalorder %s3, 4
      %s10 = sphi 0, %s36
      %s11 = sphi 0, %s32
      %s12 = sphi 0, %s28
      %s13 = sphi 0, %s24
      %s14 = sphi 0, %s10
      %s15 = sphi 0, %s11
      %s16 = sphi 0, %s12
      %s17 = sphi 0, %s13
      %s18 = sphi 0, %s14
      %s19 = sphi 0, %s15
      %s20 = sphi 0, %s16
      %s21 = sphi 0, %s17
    $region4: #{custom-call.13} parent=1 // loop_header_branch
      %6 = sbr.rel (%p4) target = $region8
    $region5: #{custom-call.13} parent=1 // loop_body
      %s8 = ssub.s32 %s3, 1
      %s9 = ssub.s32 %s3, 2
      %s22 = sadd.s32 1, %s13
      %p23 = scmp.ge.s32.totalorder %s22, 1
      %s24 = scalar_select %p23, 0, %s22
      %s25 = sadd.s32 1, %s12
      %s26 = scalar_select %p23, %s25, %s12
      %p27 = scmp.ge.s32.totalorder %s26, 1
      %s28 = scalar_select %p27, 0, %s26
      %s29 = sadd.s32 1, %s11
      %s30 = scalar_select %p27, %s29, %s11
      %p31 = scmp.ge.s32.totalorder %s30, 1
      %s32 = scalar_select %p31, 0, %s30
      %s33 = sadd.s32 1, %s10
      %s34 = scalar_select %p31, %s33, %s10
      %p35 = scmp.ge.s32.totalorder %s34, 2
      %s36 = scalar_select %p35, 0, %s34
      %p37 = scmp.le.s32.totalorder 1, %s3
      %p38 = scmp.lt.s32.totalorder %s3, 3
      %p39 = pnand %p37, %p38
      %p40 = pneg %p39
      // Predicated region
      $region9: #{custom-call.13} parent=5 // pred_check
        _
      $region10: #{custom-call.13} parent=5 // pred_check_branch
        %42 = sbr.rel (%p39) target = $region12
      $region11: #{custom-call.13} parent=5 // pred_region
        %s43 = ssub.s32 %s3, 1
      $region12: #{custom-call.13} parent=5 // pred_fallthru
        _
      %p44 = scmp.lt.s32.totalorder %s3, 2
      // Predicated region
      $region13: #{custom-call.13} parent=5 // pred_check
        %p45 = pneg %p44
      $region14: #{custom-call.13} parent=5 // pred_check_branch
        %47 = sbr.rel (%p45) target = $region16
      $region15: #{custom-call.13} parent=5 // pred_region
        %s48 = sand.u32 %s3, 1
        %s49 = sand.u32 %s3, 1
        %s50 = smul.addr %s49, 4
        %s51 = scalar_lea.vmem [#allocation1], %s50
        %s52 = sadd.s32 %s13, %s12
        %s53 = sadd.s32 %s52, %s11
        %s54 = sadd.s32 %s53, %s10
        %s55 = smul.addr %s54, 4
        %s56 = scalar_lea.vmem %s0, %s55
        // Predicated region
        $region17: #{custom-call.13} parent=15 // pred_check
          _
        $region18: #{custom-call.13} parent=15 // pred_check_branch
          %58 = sbr.rel (0) target = $region20
        $region19: #{custom-call.13} parent=15 // pred_region
          // Predicated region
          $region21: #{custom-call.13} parent=19 // pred_check
            _
          $region22: #{custom-call.13} parent=19 // pred_check_branch
            %60 = sbr.rel target = $region24
          $region23: #{custom-call.13} parent=19 // pred_region
            // Predicated region
            $region36: #{custom-call.13} parent=23 // pred_check
              _
            $region37: #{custom-call.13} parent=23 // pred_check_branch
              %75 = sbr.rel (0) target = $region39
            $region38: #{custom-call.13} parent=23 // pred_region
              loop: start=0, step=1, limit=1
              $region40: #{custom-call.13} parent=38 // loop_pre_header
                _
              $region41: #{custom-call.13} parent=38 // loop_header
                %s78 = sphi 0, %s82
                %p79 = scmp.ge.s32.totalorder %s78, 1
                %s83 = sphi %s56, %s56
                %s84 = sphi %s51, %s51
              $region42: #{custom-call.13} parent=38 // loop_header_branch
                %81 = sbr.rel (%p79) target = $region46
              $region43: #{custom-call.13} parent=38 // loop_body
                %v85 = vld [vmem:[%s83] sm:$0xf]
                %86 = vst [vmem:[%s84] sm:$0xf] %v85
              $region44: #{custom-call.13} parent=38 // loop_footer
                %s82 = sadd.s32 1, %s78
              $region45: #{custom-call.13} parent=38 // loop_footer_branch
                %77 = sbr.rel target = $region41
              $region46: #{custom-call.13} parent=38 // loop_exit
                _
            $region39: #{custom-call.13} parent=23 // pred_fallthru
              _
          $region24: #{custom-call.13} parent=19 // pred_fallthru
            _
          // Predicated region
          $region25: #{custom-call.13} parent=19 // pred_check
            _
          $region26: #{custom-call.13} parent=19 // pred_check_branch
            %62 = sbr.rel (0) target = $region28
          $region27: #{custom-call.13} parent=19 // pred_region
            loop: start=0, step=1, limit=1
            $region29: #{custom-call.13} parent=27 // loop_pre_header
              _
            $region30: #{custom-call.13} parent=27 // loop_header
              %s65 = sphi 0, %s69
              %p66 = scmp.ge.s32.totalorder %s65, 1
              %s70 = sphi %s56, %s56
              %s71 = sphi %s51, %s51
            $region31: #{custom-call.13} parent=27 // loop_header_branch
              %68 = sbr.rel (%p66) target = $region35
            $region32: #{custom-call.13} parent=27 // loop_body
              %v72 = vld [vmem:[%s70] sm:$0xf]
              %73 = vst [vmem:[%s71] sm:$0xf] %v72
            $region33: #{custom-call.13} parent=27 // loop_footer
              %s69 = sadd.s32 1, %s65
            $region34: #{custom-call.13} parent=27 // loop_footer_branch
              %64 = sbr.rel target = $region30
            $region35: #{custom-call.13} parent=27 // loop_exit
              _
          $region28: #{custom-call.13} parent=19 // pred_fallthru
            _
        $region20: #{custom-call.13} parent=15 // pred_fallthru
          _
        %87 = vnop
      $region16: #{custom-call.13} parent=5 // pred_fallthru
        _
      %p88 = scmp.le.s32.totalorder 1, %s3
      %p89 = scmp.lt.s32.totalorder %s3, 3
      %p90 = pnand %p88, %p89
      %p91 = pneg %p90
      // Predicated region
      $region47: #{custom-call.13} parent=5 // pred_check
        _
      $region48: #{custom-call.13} parent=5 // pred_check_branch
        %93 = sbr.rel (%p90) target = $region50
      $region49: #{custom-call.13} parent=5 // pred_region
        #allocation4 [shape = 'f32[4,4]{1,0}', space=vmem, size = 0x1000, scoped, tag = 'rescaled input a']
        %s94 = ssub.s32 %s3, 1
        %s95 = sand.u32 %s8, 1
        %s96 = sand.u32 %s8, 1
        %s97 = smul.addr %s96, 4
        %s98 = scalar_lea.vmem [#allocation1], %s97
        %s99 = sand.u32 %s8, 1
        %s100 = sand.u32 %s8, 1
        %s101 = smul.addr %s100, 4
        %s102 = scalar_lea.vmem [#allocation1], %s101
        %s103 = sand.u32 %s8, 1
        %s104 = sand.u32 %s8, 1
        %s105 = smul.addr %s104, 4
        %s106 = scalar_lea.vmem [#allocation3], %s105
        %s108 = sshllo.u32 0, 4
        %v109 = vld [vmem:[%s102] sm:%s108]
        %110 = vst [vmem:[#allocation0] sm:%s108] %v109
        %v111 = vlaneseq
        %v112 = vand.u32 %v111, 127
        %vm113 = vcmp.lt.s32.totalorder %v112, 4
        %v114 = vlaneseq
        %v115 = vshrl.u32 %v114, 7
        %vm117 = vcmp.eq.s32.totalorder %v115, %v112
        %v118 = vld [vmem:[#allocation0] sm:$0xff]
        %v119 = vsel %vm117, %v118, 0.0
        %120 = vadd.xlane.f32.xlu0 %v119
        %v121 = vpop.xlane.xlu0 %120
        %vm122 = vcmp.ge.s32.totalorder %v115, %v112
        %vm123 = vmand %vm122, %vm113
        %v124 = vsel %vm123, %v118, 0.0
        %v125 = vrcp.pop %v121
        %v126 = vmul.f32 %v124, %v125
        %127 = vst [vmem:[#allocation4] sm:$0xff] %v126
        %v128 = vlaneseq
        %v129 = vand.u32 %v128, 127
        %v130 = vlaneseq
        %v131 = vshrl.u32 %v130, 7
        %vm133 = vcmp.eq.s32.totalorder %v129, %v131
        %v134 = vlaneseq
        %v135 = vand.u32 %v134, 127
        %vm136 = vcmp.eq.s32.totalorder %v135, 0
        %v137 = vsel %vm136, 1.0, -1.0
        %v138 = vsel %vm133, %v137, 0.0
        %s139 = scalar_lea.vmem [#allocation4], 1
        %v140 = vld [vmem:[%s139] ss:$0 sm:$0xff]
        %v141 = vxor.u32 %v140, 2147483648
        %v142 = vlaneseq
        %v143 = vand.u32 %v142, 127
        %vm144 = vcmp.eq.s32.totalorder %v143, 1
        %v145 = vmul.f32 %v141, %v138
        %146 = vadd.xlane.f32.xlu0 %v145
        %v147 = vpop.xlane.xlu0 %146
        %v148 = vsel %vm144, %v147, %v138
        %s149 = scalar_lea.vmem [#allocation4], 2
        %v150 = vld [vmem:[%s149] ss:$0 sm:$0xff]
        %v151 = vxor.u32 %v150, 2147483648
        %v152 = vlaneseq
        %v153 = vand.u32 %v152, 127
        %vm154 = vcmp.eq.s32.totalorder %v153, 2
        %v155 = vmul.f32 %v151, %v148
        %156 = vadd.xlane.f32.xlu0 %v155
        %v157 = vpop.xlane.xlu0 %156
        %v158 = vsel %vm154, %v157, %v148
        %s159 = scalar_lea.vmem [#allocation4], 3
        %v160 = vld [vmem:[%s159] ss:$0 sm:$0xff]
        %v161 = vxor.u32 %v160, 2147483648
        %v162 = vlaneseq
        %v163 = vand.u32 %v162, 127
        %vm164 = vcmp.eq.s32.totalorder %v163, 3
        %v165 = vmul.f32 %v161, %v158
        %166 = vadd.xlane.f32.xlu0 %v165
        %v167 = vpop.xlane.xlu0 %166
        %v168 = vsel %vm164, %v167, %v158
        %v169 = vrcp.pop %v121
        %v170 = vmul.f32 %v168, %v169
        %vm171 = vweird.f32 %v121
        %v172 = vsel %vm171, %v168, %v170
        %173 = vst [vmem:[#allocation2] sm:$0xff] %v172
        %s175 = sshllo.u32 0, 4
        %v177 = vld [vmem:[#allocation2] sm:%s175]
        %s178 = sshllo.u32 0, 4
        %179 = vst [vmem:[%s106] sm:%s178] %v177
        %s180 = sand.u32 %s8, 1
        %s181 = sand.u32 %s8, 1
        %s182 = smul.addr %s181, 4
        %s183 = scalar_lea.vmem [#allocation3], %s182
        %s184 = sadd.s32 %s17, %s16
        %s185 = sadd.s32 %s184, %s15
        %s186 = sadd.s32 %s185, %s14
        %s187 = smul.addr %s186, 4
        %s188 = scalar_lea.vmem %s1, %s187
        // Predicated region
        $region51: #{custom-call.13} parent=49 // pred_check
          _
        $region52: #{custom-call.13} parent=49 // pred_check_branch
          %190 = sbr.rel (0) target = $region54
        $region53: #{custom-call.13} parent=49 // pred_region
          // Predicated region
          $region55: #{custom-call.13} parent=53 // pred_check
            _
          $region56: #{custom-call.13} parent=53 // pred_check_branch
            %192 = sbr.rel target = $region58
          $region57: #{custom-call.13} parent=53 // pred_region
            // Predicated region
            $region70: #{custom-call.13} parent=57 // pred_check
              _
            $region71: #{custom-call.13} parent=57 // pred_check_branch
              %207 = sbr.rel (0) target = $region73
            $region72: #{custom-call.13} parent=57 // pred_region
              loop: start=0, step=1, limit=1
              $region74: #{custom-call.13} parent=72 // loop_pre_header
                _
              $region75: #{custom-call.13} parent=72 // loop_header
                %s210 = sphi 0, %s214
                %p211 = scmp.ge.s32.totalorder %s210, 1
                %s215 = sphi %s183, %s183
                %s216 = sphi %s188, %s188
              $region76: #{custom-call.13} parent=72 // loop_header_branch
                %213 = sbr.rel (%p211) target = $region80
              $region77: #{custom-call.13} parent=72 // loop_body
                %v217 = vld [vmem:[%s215] sm:$0xf]
                %218 = vst [vmem:[%s216] sm:$0xf] %v217
              $region78: #{custom-call.13} parent=72 // loop_footer
                %s214 = sadd.s32 1, %s210
              $region79: #{custom-call.13} parent=72 // loop_footer_branch
                %209 = sbr.rel target = $region75
              $region80: #{custom-call.13} parent=72 // loop_exit
                _
            $region73: #{custom-call.13} parent=57 // pred_fallthru
              _
          $region58: #{custom-call.13} parent=53 // pred_fallthru
            _
          // Predicated region
          $region59: #{custom-call.13} parent=53 // pred_check
            _
          $region60: #{custom-call.13} parent=53 // pred_check_branch
            %194 = sbr.rel (0) target = $region62
          $region61: #{custom-call.13} parent=53 // pred_region
            loop: start=0, step=1, limit=1
            $region63: #{custom-call.13} parent=61 // loop_pre_header
              _
            $region64: #{custom-call.13} parent=61 // loop_header
              %s197 = sphi 0, %s201
              %p198 = scmp.ge.s32.totalorder %s197, 1
              %s202 = sphi %s183, %s183
              %s203 = sphi %s188, %s188
            $region65: #{custom-call.13} parent=61 // loop_header_branch
              %200 = sbr.rel (%p198) target = $region69
            $region66: #{custom-call.13} parent=61 // loop_body
              %v204 = vld [vmem:[%s202] sm:$0xf]
              %205 = vst [vmem:[%s203] sm:$0xf] %v204
            $region67: #{custom-call.13} parent=61 // loop_footer
              %s201 = sadd.s32 1, %s197
            $region68: #{custom-call.13} parent=61 // loop_footer_branch
              %196 = sbr.rel target = $region64
            $region69: #{custom-call.13} parent=61 // loop_exit
              _
          $region62: #{custom-call.13} parent=53 // pred_fallthru
            _
        $region54: #{custom-call.13} parent=49 // pred_fallthru
          _
        %219 = vnop
      $region50: #{custom-call.13} parent=5 // pred_fallthru
        _
      %p220 = scmp.le.s32.totalorder 2, %s3
      // Predicated region
      $region81: #{custom-call.13} parent=5 // pred_check
        %p221 = pneg %p220
      $region82: #{custom-call.13} parent=5 // pred_check_branch
        %223 = sbr.rel (%p221) target = $region84
      $region83: #{custom-call.13} parent=5 // pred_region
        %s224 = ssub.s32 %s3, 2
        %s225 = sand.u32 %s9, 1
        %s226 = sand.u32 %s9, 1
        %s227 = smul.addr %s226, 4
        %s228 = scalar_lea.vmem [#allocation3], %s227
      $region84: #{custom-call.13} parent=5 // pred_fallthru
        _
    $region6: #{custom-call.13} parent=1 // loop_footer
      %s7 = sadd.s32 1, %s3
    $region7: #{custom-call.13} parent=1 // loop_footer_branch
      %2 = sbr.rel target = $region3
    $region8: #{custom-call.13} parent=1 // loop_exit
      _

// kernel: custom-call.12
$region0: #{custom-call.12}
  %s0 = inlined_call_operand.vmem [shape: f32[2,1,4,4], index: 0, kind: input, shape index: {}]
  %s1 = inlined_call_operand.vmem [shape: f32[2,1,4,4], index: 1, kind: output, shape index: {}]
  $region1: #{custom-call.12} parent=0
    #allocation0 [shape = 'u8[4096]{0}', space=vmem, size = 0x1000, scoped, tag = 'operand span for operand 0']
    #allocation1 [shape = 'u8[4096]{0}', space=vmem, size = 0x1000, scoped, tag = 'packed  for operand 0']
    #allocation2 [shape = 'u8[4096]{0}', space=vmem, size = 0x1000, scoped, tag = 'operand span for operand 1']
    #allocation3 [shape = 'u8[4096]{0}', space=vmem, size = 0x1000, scoped, tag = 'packed  for operand 1']
    loop: start=0, step=1, limit=4
    $region2: #{custom-call.12} parent=1 // loop_pre_header
      _
    $region3: #{custom-call.12} parent=1 // loop_header
      %s3 = sphi 0, %s7
      %p4 = scmp.ge.s32.totalorder %s3, 4
      %s10 = sphi 0, %s36
      %s11 = sphi 0, %s32
      %s12 = sphi 0, %s28
      %s13 = sphi 0, %s24
      %s14 = sphi 0, %s10
      %s15 = sphi 0, %s11
      %s16 = sphi 0, %s12
      %s17 = sphi 0, %s13
      %s18 = sphi 0, %s14
      %s19 = sphi 0, %s15
      %s20 = sphi 0, %s16
      %s21 = sphi 0, %s17
    $region4: #{custom-call.12} parent=1 // loop_header_branch
      %6 = sbr.rel (%p4) target = $region8
    $region5: #{custom-call.12} parent=1 // loop_body
      %s8 = ssub.s32 %s3, 1
      %s9 = ssub.s32 %s3, 2
      %s22 = sadd.s32 1, %s13
      %p23 = scmp.ge.s32.totalorder %s22, 1
      %s24 = scalar_select %p23, 0, %s22
      %s25 = sadd.s32 1, %s12
      %s26 = scalar_select %p23, %s25, %s12
      %p27 = scmp.ge.s32.totalorder %s26, 1
      %s28 = scalar_select %p27, 0, %s26
      %s29 = sadd.s32 1, %s11
      %s30 = scalar_select %p27, %s29, %s11
      %p31 = scmp.ge.s32.totalorder %s30, 1
      %s32 = scalar_select %p31, 0, %s30
      %s33 = sadd.s32 1, %s10
      %s34 = scalar_select %p31, %s33, %s10
      %p35 = scmp.ge.s32.totalorder %s34, 2
      %s36 = scalar_select %p35, 0, %s34
      %p37 = scmp.le.s32.totalorder 1, %s3
      %p38 = scmp.lt.s32.totalorder %s3, 3
      %p39 = pnand %p37, %p38
      %p40 = pneg %p39
      // Predicated region
      $region9: #{custom-call.12} parent=5 // pred_check
        _
      $region10: #{custom-call.12} parent=5 // pred_check_branch
        %42 = sbr.rel (%p39) target = $region12
      $region11: #{custom-call.12} parent=5 // pred_region
        %s43 = ssub.s32 %s3, 1
      $region12: #{custom-call.12} parent=5 // pred_fallthru
        _
      %p44 = scmp.lt.s32.totalorder %s3, 2
      // Predicated region
      $region13: #{custom-call.12} parent=5 // pred_check
        %p45 = pneg %p44
      $region14: #{custom-call.12} parent=5 // pred_check_branch
        %47 = sbr.rel (%p45) target = $region16
      $region15: #{custom-call.12} parent=5 // pred_region
        %s48 = sand.u32 %s3, 1
        %s49 = sand.u32 %s3, 1
        %s50 = smul.addr %s49, 4
        %s51 = scalar_lea.vmem [#allocation1], %s50
        %s52 = sadd.s32 %s13, %s12
        %s53 = sadd.s32 %s52, %s11
        %s54 = sadd.s32 %s53, %s10
        %s55 = smul.addr %s54, 4
        %s56 = scalar_lea.vmem %s0, %s55
        // Predicated region
        $region17: #{custom-call.12} parent=15 // pred_check
          _
        $region18: #{custom-call.12} parent=15 // pred_check_branch
          %58 = sbr.rel (0) target = $region20
        $region19: #{custom-call.12} parent=15 // pred_region
          // Predicated region
          $region21: #{custom-call.12} parent=19 // pred_check
            _
          $region22: #{custom-call.12} parent=19 // pred_check_branch
            %60 = sbr.rel target = $region24
          $region23: #{custom-call.12} parent=19 // pred_region
            // Predicated region
            $region36: #{custom-call.12} parent=23 // pred_check
              _
            $region37: #{custom-call.12} parent=23 // pred_check_branch
              %75 = sbr.rel (0) target = $region39
            $region38: #{custom-call.12} parent=23 // pred_region
              loop: start=0, step=1, limit=1
              $region40: #{custom-call.12} parent=38 // loop_pre_header
                _
              $region41: #{custom-call.12} parent=38 // loop_header
                %s78 = sphi 0, %s82
                %p79 = scmp.ge.s32.totalorder %s78, 1
                %s83 = sphi %s56, %s56
                %s84 = sphi %s51, %s51
              $region42: #{custom-call.12} parent=38 // loop_header_branch
                %81 = sbr.rel (%p79) target = $region46
              $region43: #{custom-call.12} parent=38 // loop_body
                %v85 = vld [vmem:[%s83] sm:$0xf]
                %86 = vst [vmem:[%s84] sm:$0xf] %v85
              $region44: #{custom-call.12} parent=38 // loop_footer
                %s82 = sadd.s32 1, %s78
              $region45: #{custom-call.12} parent=38 // loop_footer_branch
                %77 = sbr.rel target = $region41
              $region46: #{custom-call.12} parent=38 // loop_exit
                _
            $region39: #{custom-call.12} parent=23 // pred_fallthru
              _
          $region24: #{custom-call.12} parent=19 // pred_fallthru
            _
          // Predicated region
          $region25: #{custom-call.12} parent=19 // pred_check
            _
          $region26: #{custom-call.12} parent=19 // pred_check_branch
            %62 = sbr.rel (0) target = $region28
          $region27: #{custom-call.12} parent=19 // pred_region
            loop: start=0, step=1, limit=1
            $region29: #{custom-call.12} parent=27 // loop_pre_header
              _
            $region30: #{custom-call.12} parent=27 // loop_header
              %s65 = sphi 0, %s69
              %p66 = scmp.ge.s32.totalorder %s65, 1
              %s70 = sphi %s56, %s56
              %s71 = sphi %s51, %s51
            $region31: #{custom-call.12} parent=27 // loop_header_branch
              %68 = sbr.rel (%p66) target = $region35
            $region32: #{custom-call.12} parent=27 // loop_body
              %v72 = vld [vmem:[%s70] sm:$0xf]
              %73 = vst [vmem:[%s71] sm:$0xf] %v72
            $region33: #{custom-call.12} parent=27 // loop_footer
              %s69 = sadd.s32 1, %s65
            $region34: #{custom-call.12} parent=27 // loop_footer_branch
              %64 = sbr.rel target = $region30
            $region35: #{custom-call.12} parent=27 // loop_exit
              _
          $region28: #{custom-call.12} parent=19 // pred_fallthru
            _
        $region20: #{custom-call.12} parent=15 // pred_fallthru
          _
        %87 = vnop
      $region16: #{custom-call.12} parent=5 // pred_fallthru
        _
      %p88 = scmp.le.s32.totalorder 1, %s3
      %p89 = scmp.lt.s32.totalorder %s3, 3
      %p90 = pnand %p88, %p89
      %p91 = pneg %p90
      // Predicated region
      $region47: #{custom-call.12} parent=5 // pred_check
        _
      $region48: #{custom-call.12} parent=5 // pred_check_branch
        %93 = sbr.rel (%p90) target = $region50
      $region49: #{custom-call.12} parent=5 // pred_region
        #allocation4 [shape = 'f32[4,4]{1,0}', space=vmem, size = 0x1000, scoped, tag = 'rescaled input a']
        %s94 = ssub.s32 %s3, 1
        %s95 = sand.u32 %s8, 1
        %s96 = sand.u32 %s8, 1
        %s97 = smul.addr %s96, 4
        %s98 = scalar_lea.vmem [#allocation1], %s97
        %s99 = sand.u32 %s8, 1
        %s100 = sand.u32 %s8, 1
        %s101 = smul.addr %s100, 4
        %s102 = scalar_lea.vmem [#allocation1], %s101
        %s103 = sand.u32 %s8, 1
        %s104 = sand.u32 %s8, 1
        %s105 = smul.addr %s104, 4
        %s106 = scalar_lea.vmem [#allocation3], %s105
        %s108 = sshllo.u32 0, 4
        %v109 = vld [vmem:[%s102] sm:%s108]
        %110 = vst [vmem:[#allocation0] sm:%s108] %v109
        %v111 = vlaneseq
        %v112 = vand.u32 %v111, 127
        %vm113 = vcmp.lt.s32.totalorder %v112, 4
        %v114 = vlaneseq
        %v115 = vshrl.u32 %v114, 7
        %vm117 = vcmp.eq.s32.totalorder %v115, %v112
        %v118 = vld [vmem:[#allocation0] sm:$0xff]
        %v119 = vsel %vm117, %v118, 0.0
        %120 = vadd.xlane.f32.xlu0 %v119
        %v121 = vpop.xlane.xlu0 %120
        %vm122 = vcmp.le.s32.totalorder %v115, %v112
        %vm123 = vmand %vm122, %vm113
        %v124 = vsel %vm123, %v118, 0.0
        %v125 = vrcp.pop %v121
        %v126 = vmul.f32 %v124, %v125
        %127 = vst [vmem:[#allocation4] sm:$0xff] %v126
        %v128 = vlaneseq
        %v129 = vand.u32 %v128, 127
        %v130 = vlaneseq
        %v131 = vshrl.u32 %v130, 7
        %vm133 = vcmp.eq.s32.totalorder %v129, %v131
        %v134 = vlaneseq
        %v135 = vand.u32 %v134, 127
        %vm136 = vcmp.eq.s32.totalorder %v135, 3
        %v137 = vsel %vm136, 1.0, -1.0
        %v138 = vsel %vm133, %v137, 0.0
        %s139 = scalar_lea.vmem [#allocation4], 2
        %v140 = vld [vmem:[%s139] ss:$0 sm:$0xff]
        %v141 = vxor.u32 %v140, 2147483648
        %v142 = vlaneseq
        %v143 = vand.u32 %v142, 127
        %vm144 = vcmp.eq.s32.totalorder %v143, 2
        %v145 = vmul.f32 %v141, %v138
        %146 = vadd.xlane.f32.xlu0 %v145
        %v147 = vpop.xlane.xlu0 %146
        %v148 = vsel %vm144, %v147, %v138
        %s149 = scalar_lea.vmem [#allocation4], 1
        %v150 = vld [vmem:[%s149] ss:$0 sm:$0xff]
        %v151 = vxor.u32 %v150, 2147483648
        %v152 = vlaneseq
        %v153 = vand.u32 %v152, 127
        %vm154 = vcmp.eq.s32.totalorder %v153, 1
        %v155 = vmul.f32 %v151, %v148
        %156 = vadd.xlane.f32.xlu0 %v155
        %v157 = vpop.xlane.xlu0 %156
        %v158 = vsel %vm154, %v157, %v148
        %v159 = vld [vmem:[#allocation4] ss:$0 sm:$0xff]
        %v160 = vxor.u32 %v159, 2147483648
        %v161 = vlaneseq
        %v162 = vand.u32 %v161, 127
        %vm163 = vcmp.eq.s32.totalorder %v162, 0
        %v164 = vmul.f32 %v160, %v158
        %165 = vadd.xlane.f32.xlu0 %v164
        %v166 = vpop.xlane.xlu0 %165
        %v167 = vsel %vm163, %v166, %v158
        %v168 = vrcp.pop %v121
        %v169 = vmul.f32 %v167, %v168
        %vm170 = vweird.f32 %v121
        %v171 = vsel %vm170, %v167, %v169
        %172 = vst [vmem:[#allocation2] sm:$0xff] %v171
        %s174 = sshllo.u32 0, 4
        %v176 = vld [vmem:[#allocation2] sm:%s174]
        %s177 = sshllo.u32 0, 4
        %178 = vst [vmem:[%s106] sm:%s177] %v176
        %s179 = sand.u32 %s8, 1
        %s180 = sand.u32 %s8, 1
        %s181 = smul.addr %s180, 4
        %s182 = scalar_lea.vmem [#allocation3], %s181
        %s183 = sadd.s32 %s17, %s16
        %s184 = sadd.s32 %s183, %s15
        %s185 = sadd.s32 %s184, %s14
        %s186 = smul.addr %s185, 4
        %s187 = scalar_lea.vmem %s1, %s186
        // Predicated region
        $region51: #{custom-call.12} parent=49 // pred_check
          _
        $region52: #{custom-call.12} parent=49 // pred_check_branch
          %189 = sbr.rel (0) target = $region54
        $region53: #{custom-call.12} parent=49 // pred_region
          // Predicated region
          $region55: #{custom-call.12} parent=53 // pred_check
            _
          $region56: #{custom-call.12} parent=53 // pred_check_branch
            %191 = sbr.rel target = $region58
          $region57: #{custom-call.12} parent=53 // pred_region
            // Predicated region
            $region70: #{custom-call.12} parent=57 // pred_check
              _
            $region71: #{custom-call.12} parent=57 // pred_check_branch
              %206 = sbr.rel (0) target = $region73
            $region72: #{custom-call.12} parent=57 // pred_region
              loop: start=0, step=1, limit=1
              $region74: #{custom-call.12} parent=72 // loop_pre_header
                _
              $region75: #{custom-call.12} parent=72 // loop_header
                %s209 = sphi 0, %s213
                %p210 = scmp.ge.s32.totalorder %s209, 1
                %s214 = sphi %s182, %s182
                %s215 = sphi %s187, %s187
              $region76: #{custom-call.12} parent=72 // loop_header_branch
                %212 = sbr.rel (%p210) target = $region80
              $region77: #{custom-call.12} parent=72 // loop_body
                %v216 = vld [vmem:[%s214] sm:$0xf]
                %217 = vst [vmem:[%s215] sm:$0xf] %v216
              $region78: #{custom-call.12} parent=72 // loop_footer
                %s213 = sadd.s32 1, %s209
              $region79: #{custom-call.12} parent=72 // loop_footer_branch
                %208 = sbr.rel target = $region75
              $region80: #{custom-call.12} parent=72 // loop_exit
                _
            $region73: #{custom-call.12} parent=57 // pred_fallthru
              _
          $region58: #{custom-call.12} parent=53 // pred_fallthru
            _
          // Predicated region
          $region59: #{custom-call.12} parent=53 // pred_check
            _
          $region60: #{custom-call.12} parent=53 // pred_check_branch
            %193 = sbr.rel (0) target = $region62
          $region61: #{custom-call.12} parent=53 // pred_region
            loop: start=0, step=1, limit=1
            $region63: #{custom-call.12} parent=61 // loop_pre_header
              _
            $region64: #{custom-call.12} parent=61 // loop_header
              %s196 = sphi 0, %s200
              %p197 = scmp.ge.s32.totalorder %s196, 1
              %s201 = sphi %s182, %s182
              %s202 = sphi %s187, %s187
            $region65: #{custom-call.12} parent=61 // loop_header_branch
              %199 = sbr.rel (%p197) target = $region69
            $region66: #{custom-call.12} parent=61 // loop_body
              %v203 = vld [vmem:[%s201] sm:$0xf]
              %204 = vst [vmem:[%s202] sm:$0xf] %v203
            $region67: #{custom-call.12} parent=61 // loop_footer
              %s200 = sadd.s32 1, %s196
            $region68: #{custom-call.12} parent=61 // loop_footer_branch
              %195 = sbr.rel target = $region64
            $region69: #{custom-call.12} parent=61 // loop_exit
              _
          $region62: #{custom-call.12} parent=53 // pred_fallthru
            _
        $region54: #{custom-call.12} parent=49 // pred_fallthru
          _
        %218 = vnop
      $region50: #{custom-call.12} parent=5 // pred_fallthru
        _
      %p219 = scmp.le.s32.totalorder 2, %s3
      // Predicated region
      $region81: #{custom-call.12} parent=5 // pred_check
        %p220 = pneg %p219
      $region82: #{custom-call.12} parent=5 // pred_check_branch
        %222 = sbr.rel (%p220) target = $region84
      $region83: #{custom-call.12} parent=5 // pred_region
        %s223 = ssub.s32 %s3, 2
        %s224 = sand.u32 %s9, 1
        %s225 = sand.u32 %s9, 1
        %s226 = smul.addr %s225, 4
        %s227 = scalar_lea.vmem [#allocation3], %s226
      $region84: #{custom-call.12} parent=5 // pred_fallthru
        _
    $region6: #{custom-call.12} parent=1 // loop_footer
      %s7 = sadd.s32 1, %s3
    $region7: #{custom-call.12} parent=1 // loop_footer_branch
      %2 = sbr.rel target = $region3
    $region8: #{custom-call.12} parent=1 // loop_exit
      _

// kernel: squeeze.3
$region0: #{squeeze.3}
  %s0 = inlined_call_operand.vmem [shape: s32[2,6,8], index: 0, kind: input, shape index: {}]
  %s1 = inlined_call_operand.vmem [shape: s32[2,1,48], index: 1, kind: output, shape index: {}]
  $region1: #{squeeze.3} parent=0
    #allocation0 [shape = 'u8[4096]{0}', space=vmem, size = 0x1000, scoped, tag = 'scoped mem for output reshape']
    %s2 = smov 3
    %v3 = vld [vmem:[%s0] ss:$8 sm:%s2]
    %vm4 = vcmask 64512
    %5 = vst.msk [vmem:[#allocation0] sm:$0x3] %vm4, %v3
    %s6 = scalar_lea.vmem %s0, 5
    %s7 = smov 3
    %v8 = vld [vmem:[%s6] ss:$8 sm:%s7]
    %9 = vrot.lane.b32.xlu0 %v8, 40
    %v10 = vpop.permute.xlu0 %9
    %vm11 = vcmask 392512
    %12 = vst.msk [vmem:[#allocation0] sm:$0x3] %vm11, %v10
    %s13 = scalar_lea.vmem %s0, 4
    %s14 = smov 3
    %v15 = vld [vmem:[%s13] ss:$8 sm:%s14]
    %16 = vrot.lane.b32.xlu0 %v15, 32
    %v17 = vpop.permute.xlu0 %16
    %vm18 = vcmask 326912
    %19 = vst.msk [vmem:[#allocation0] sm:$0x3] %vm18, %v17
    %s20 = scalar_lea.vmem %s0, 3
    %s21 = smov 3
    %v22 = vld [vmem:[%s20] ss:$8 sm:%s21]
    %23 = vrot.lane.b32.xlu0 %v22, 24
    %v24 = vpop.permute.xlu0 %23
    %vm25 = vcmask 261312
    %26 = vst.msk [vmem:[#allocation0] sm:$0x3] %vm25, %v24
    %s27 = scalar_lea.vmem %s0, 2
    %s28 = smov 3
    %v29 = vld [vmem:[%s27] ss:$8 sm:%s28]
    %30 = vrot.lane.b32.xlu0 %v29, 16
    %v31 = vpop.permute.xlu0 %30
    %vm32 = vcmask 195712
    %33 = vst.msk [vmem:[#allocation0] sm:$0x3] %vm32, %v31
    %s34 = scalar_lea.vmem %s0, 1
    %s35 = smov 3
    %v36 = vld [vmem:[%s34] ss:$8 sm:%s35]
    %37 = vrot.lane.b32.xlu0 %v36, 8
    %v38 = vpop.permute.xlu0 %37
    %vm39 = vcmask 130112
    %40 = vst.msk [vmem:[#allocation0] sm:$0x3] %vm39, %v38
    %s42 = sshllo.u32 0, 2
    %v44 = vld [vmem:[#allocation0] sm:%s42]
    %s45 = sshllo.u32 0, 2
    %46 = vst [vmem:[%s1] sm:%s45] %v44

// kernel: forward.1
$region0: #{forward.1}
  #allocation0 [shape = 'u32[]', space=smem, size = 0x4, offset = 0x4, fixed_abs, tag = 'smem constant byte address 0x4 - core index']
  #allocation1 [shape = 'u32[144,128]{1,0:T(1,128)}', space=vmem, size = 0x12000, scoped, tag = 'internal scratch']
  %s0 = inlined_call_operand.vmem [shape: bf16[2,27,256], index: 0, kind: input, shape index: {}]
  %s1 = inlined_call_operand.vmem [shape: s32[2,1,128], index: 1, kind: input, shape index: {}]
  %s2 = inlined_call_operand.vmem [shape: f32[2,4,16,128], index: 2, kind: input, shape index: {}]
  %s3 = inlined_call_operand.vmem [shape: f32[24,128], index: 3, kind: input, shape index: {}]
  %s4 = inlined_call_operand.vmem [shape: f32[4,28], index: 4, kind: input, shape index: {}]
  %s5 = inlined_call_operand.vmem [shape: f32[8,11], index: 5, kind: input, shape index: {}]
  %s6 = inlined_call_operand.vmem [shape: f32[8,1], index: 6, kind: input, shape index: {}]
  %s7 = inlined_call_operand.vmem [shape: f32[2,1,128], index: 7, kind: output, shape index: {}]
  %s8 = sld [smem:[#allocation0]]
  $region61: #{forward.1} parent=0
    _
  %s10 = ssub.s32 1, %s8
  %s11 = scalar_select 0, %s10, %s8
  loop: start=0, step=1, limit=4
  $region2: #{forward.1} parent=0 // loop_pre_header
    _
  $region3: #{forward.1} parent=0 // loop_header
    %s13 = sphi 0, %s17
    %p14 = scmp.ge.s32.totalorder %s13, 4
    %s23 = sphi 0, %s25
    %s26 = sphi 0, %s23
    %s27 = sphi 0, %s26
    %s43 = sphi 0, %s27
    %s49 = sphi 0, %s51
    %s52 = sphi 0, %s49
    %s53 = sphi 0, %s52
    %s69 = sphi 0, %s53
    %s75 = sphi 0, %s77
    %s78 = sphi 0, %s75
    %s79 = sphi 0, %s78
    %s95 = sphi 0, %s79
    %s99 = sphi 0, %s99
    %s101 = sphi 0, %s99
    %s102 = sphi 0, %s101
    %s116 = sphi 0, %s102
    %s120 = sphi 0, %s120
    %s122 = sphi 0, %s120
    %s123 = sphi 0, %s122
    %s137 = sphi 0, %s123
    %s141 = sphi 0, %s141
    %s143 = sphi 0, %s141
    %s144 = sphi 0, %s143
    %s158 = sphi 0, %s144
    %s162 = sphi 0, %s162
    %s164 = sphi 0, %s162
    %s165 = sphi 0, %s164
    %s179 = sphi 0, %s165
    %s185 = sphi 0, %s187
    %s188 = sphi 0, %s185
    %s189 = sphi 0, %s188
    %s205 = sphi 0, %s189
  $region4: #{forward.1} parent=0 // loop_header_branch
    %16 = sbr.rel (%p14) target = $region8
  $region5: #{forward.1} parent=0 // loop_body
    %s18 = ssub.s32 %s13, 1
    %s19 = ssub.s32 %s13, 2
    %s20 = sadd.s32 %s13, 1
    %s21 = ssub.s32 %s13, %s20
    %p22 = scmp.eq.s32.totalorder %s21, 0
    %s24 = sadd.s32 %s23, 1
    %s25 = scalar_select %p22, %s23, %s24
    %p28 = pneg %p22
    %p29 = scmp.eq.s32.totalorder %s13, 1
    %p30 = por %p28, %p29
    %p31 = scmp.ne.s32.totalorder %s23, %s26
    %p32 = scmp.eq.s32.totalorder %s13, 0
    %p33 = por %p31, %p32
    %p34 = scmp.ne.s32.totalorder %s23, %s26
    %p35 = scmp.eq.s32.totalorder %s18, 1
    %p36 = por %p34, %p35
    %p37 = scmp.ne.s32.totalorder %s26, %s27
    %p38 = scmp.eq.s32.totalorder %s18, 0
    %p39 = por %p37, %p38
    %p40 = scmp.ne.s32.totalorder %s26, %s27
    %p41 = scmp.eq.s32.totalorder %s19, 1
    %p42 = por %p40, %p41
    %p44 = scmp.ne.s32.totalorder %s27, %s43
    %p45 = scmp.eq.s32.totalorder %s19, 0
    %p46 = por %p44, %p45
    %s47 = ssub.s32 %s13, %s20
    %p48 = scmp.eq.s32.totalorder %s47, 0
    %s50 = sadd.s32 %s49, 1
    %s51 = scalar_select %p48, %s49, %s50
    %p54 = pneg %p48
    %p55 = scmp.eq.s32.totalorder %s13, 1
    %p56 = por %p54, %p55
    %p57 = scmp.ne.s32.totalorder %s49, %s52
    %p58 = scmp.eq.s32.totalorder %s13, 0
    %p59 = por %p57, %p58
    %p60 = scmp.ne.s32.totalorder %s49, %s52
    %p61 = scmp.eq.s32.totalorder %s18, 1
    %p62 = por %p60, %p61
    %p63 = scmp.ne.s32.totalorder %s52, %s53
    %p64 = scmp.eq.s32.totalorder %s18, 0
    %p65 = por %p63, %p64
    %p66 = scmp.ne.s32.totalorder %s52, %s53
    %p67 = scmp.eq.s32.totalorder %s19, 1
    %p68 = por %p66, %p67
    %p70 = scmp.ne.s32.totalorder %s53, %s69
    %p71 = scmp.eq.s32.totalorder %s19, 0
    %p72 = por %p70, %p71
    %s73 = ssub.s32 %s13, %s20
    %p74 = scmp.eq.s32.totalorder %s73, 0
    %s76 = sadd.s32 %s75, 1
    %s77 = scalar_select %p74, %s75, %s76
    %p80 = pneg %p74
    %p81 = scmp.eq.s32.totalorder %s13, 1
    %p82 = por %p80, %p81
    %p83 = scmp.ne.s32.totalorder %s75, %s78
    %p84 = scmp.eq.s32.totalorder %s13, 0
    %p85 = por %p83, %p84
    %p86 = scmp.ne.s32.totalorder %s75, %s78
    %p87 = scmp.eq.s32.totalorder %s18, 1
    %p88 = por %p86, %p87
    %p89 = scmp.ne.s32.totalorder %s78, %s79
    %p90 = scmp.eq.s32.totalorder %s18, 0
    %p91 = por %p89, %p90
    %p92 = scmp.ne.s32.totalorder %s78, %s79
    %p93 = scmp.eq.s32.totalorder %s19, 1
    %p94 = por %p92, %p93
    %p96 = scmp.ne.s32.totalorder %s79, %s95
    %p97 = scmp.eq.s32.totalorder %s19, 0
    %p98 = por %p96, %p97
    %s100 = sadd.s32 %s99, 1
    %p103 = scmp.eq.s32.totalorder %s13, 1
    %p104 = scmp.ne.s32.totalorder %s99, %s101
    %p105 = scmp.eq.s32.totalorder %s13, 0
    %p106 = por %p104, %p105
    %p107 = scmp.ne.s32.totalorder %s99, %s101
    %p108 = scmp.eq.s32.totalorder %s18, 1
    %p109 = por %p107, %p108
    %p110 = scmp.ne.s32.totalorder %s101, %s102
    %p111 = scmp.eq.s32.totalorder %s18, 0
    %p112 = por %p110, %p111
    %p113 = scmp.ne.s32.totalorder %s101, %s102
    %p114 = scmp.eq.s32.totalorder %s19, 1
    %p115 = por %p113, %p114
    %p117 = scmp.ne.s32.totalorder %s102, %s116
    %p118 = scmp.eq.s32.totalorder %s19, 0
    %p119 = por %p117, %p118
    %s121 = sadd.s32 %s120, 1
    %p124 = scmp.eq.s32.totalorder %s13, 1
    %p125 = scmp.ne.s32.totalorder %s120, %s122
    %p126 = scmp.eq.s32.totalorder %s13, 0
    %p127 = por %p125, %p126
    %p128 = scmp.ne.s32.totalorder %s120, %s122
    %p129 = scmp.eq.s32.totalorder %s18, 1
    %p130 = por %p128, %p129
    %p131 = scmp.ne.s32.totalorder %s122, %s123
    %p132 = scmp.eq.s32.totalorder %s18, 0
    %p133 = por %p131, %p132
    %p134 = scmp.ne.s32.totalorder %s122, %s123
    %p135 = scmp.eq.s32.totalorder %s19, 1
    %p136 = por %p134, %p135
    %p138 = scmp.ne.s32.totalorder %s123, %s137
    %p139 = scmp.eq.s32.totalorder %s19, 0
    %p140 = por %p138, %p139
    %s142 = sadd.s32 %s141, 1
    %p145 = scmp.eq.s32.totalorder %s13, 1
    %p146 = scmp.ne.s32.totalorder %s141, %s143
    %p147 = scmp.eq.s32.totalorder %s13, 0
    %p148 = por %p146, %p147
    %p149 = scmp.ne.s32.totalorder %s141, %s143
    %p150 = scmp.eq.s32.totalorder %s18, 1
    %p151 = por %p149, %p150
    %p152 = scmp.ne.s32.totalorder %s143, %s144
    %p153 = scmp.eq.s32.totalorder %s18, 0
    %p154 = por %p152, %p153
    %p155 = scmp.ne.s32.totalorder %s143, %s144
    %p156 = scmp.eq.s32.totalorder %s19, 1
    %p157 = por %p155, %p156
    %p159 = scmp.ne.s32.totalorder %s144, %s158
    %p160 = scmp.eq.s32.totalorder %s19, 0
    %p161 = por %p159, %p160
    %s163 = sadd.s32 %s162, 1
    %p166 = scmp.eq.s32.totalorder %s13, 1
    %p167 = scmp.ne.s32.totalorder %s162, %s164
    %p168 = scmp.eq.s32.totalorder %s13, 0
    %p169 = por %p167, %p168
    %p170 = scmp.ne.s32.totalorder %s162, %s164
    %p171 = scmp.eq.s32.totalorder %s18, 1
    %p172 = por %p170, %p171
    %p173 = scmp.ne.s32.totalorder %s164, %s165
    %p174 = scmp.eq.s32.totalorder %s18, 0
    %p175 = por %p173, %p174
    %p176 = scmp.ne.s32.totalorder %s164, %s165
    %p177 = scmp.eq.s32.totalorder %s19, 1
    %p178 = por %p176, %p177
    %p180 = scmp.ne.s32.totalorder %s165, %s179
    %p181 = scmp.eq.s32.totalorder %s19, 0
    %p182 = por %p180, %p181
    %s183 = ssub.s32 %s13, %s20
    %p184 = scmp.eq.s32.totalorder %s183, 0
    %s186 = sadd.s32 %s185, 1
    %s187 = scalar_select %p184, %s185, %s186
    %p190 = pneg %p184
    %p191 = scmp.eq.s32.totalorder %s13, 1
    %p192 = por %p190, %p191
    %p193 = scmp.ne.s32.totalorder %s185, %s188
    %p194 = scmp.eq.s32.totalorder %s13, 0
    %p195 = por %p193, %p194
    %p196 = scmp.ne.s32.totalorder %s185, %s188
    %p197 = scmp.eq.s32.totalorder %s18, 1
    %p198 = por %p196, %p197
    %p199 = scmp.ne.s32.totalorder %s188, %s189
    %p200 = scmp.eq.s32.totalorder %s18, 0
    %p201 = por %p199, %p200
    %p202 = scmp.ne.s32.totalorder %s188, %s189
    %p203 = scmp.eq.s32.totalorder %s19, 1
    %p204 = por %p202, %p203
    %p206 = scmp.ne.s32.totalorder %s189, %s205
    %p207 = scmp.eq.s32.totalorder %s19, 0
    %p208 = por %p206, %p207
    %p209 = scmp.le.s32.totalorder 1, %s13
    %p210 = scmp.lt.s32.totalorder %s13, 3
    %p211 = pnand %p209, %p210
    %p212 = pneg %p211
    // Predicated region
    $region9: #{forward.1} parent=5 // pred_check
      _
    $region10: #{forward.1} parent=5 // pred_check_branch
      %214 = sbr.rel (%p211) target = $region12
    $region11: #{forward.1} parent=5 // pred_region
      %s215 = ssub.s32 %s13, 1
      // Predicated region
      $region13: #{forward.1} parent=11 // pred_check
        %p216 = pneg %p112
      $region14: #{forward.1} parent=11 // pred_check_branch
        %218 = sbr.rel (%p216) target = $region16
      $region15: #{forward.1} parent=11 // pred_region
        _
      $region16: #{forward.1} parent=11 // pred_fallthru
        _
      // Predicated region
      $region17: #{forward.1} parent=11 // pred_check
        %p219 = pneg %p133
      $region18: #{forward.1} parent=11 // pred_check_branch
        %221 = sbr.rel (%p219) target = $region20
      $region19: #{forward.1} parent=11 // pred_region
        _
      $region20: #{forward.1} parent=11 // pred_fallthru
        _
      // Predicated region
      $region21: #{forward.1} parent=11 // pred_check
        %p222 = pneg %p154
      $region22: #{forward.1} parent=11 // pred_check_branch
        %224 = sbr.rel (%p222) target = $region24
      $region23: #{forward.1} parent=11 // pred_region
        _
      $region24: #{forward.1} parent=11 // pred_fallthru
        _
      // Predicated region
      $region25: #{forward.1} parent=11 // pred_check
        %p225 = pneg %p175
      $region26: #{forward.1} parent=11 // pred_check_branch
        %227 = sbr.rel (%p225) target = $region28
      $region27: #{forward.1} parent=11 // pred_region
        _
      $region28: #{forward.1} parent=11 // pred_fallthru
        _
    $region12: #{forward.1} parent=5 // pred_fallthru
      _
    %p228 = scmp.lt.s32.totalorder %s13, 2
    // Predicated region
    $region29: #{forward.1} parent=5 // pred_check
      %p229 = pneg %p228
    $region30: #{forward.1} parent=5 // pred_check_branch
      %231 = sbr.rel (%p229) target = $region32
    $region31: #{forward.1} parent=5 // pred_region
      // Predicated region
      $region33: #{forward.1} parent=31 // pred_check
        %p232 = pneg %p33
      $region34: #{forward.1} parent=31 // pred_check_branch
        %234 = sbr.rel (%p232) target = $region36
      $region35: #{forward.1} parent=31 // pred_region
        %p235 = scmp.lt.s32.totalorder %s13, 1
        %s236 = scalar_select %p235, %s13, 1
        %s237 = smul.addr %s236, 8
        %s238 = smul.addr %s237, 4
        %s239 = scalar_lea.vmem %s0, %s238
      $region36: #{forward.1} parent=31 // pred_fallthru
        _
      // Predicated region
      $region37: #{forward.1} parent=31 // pred_check
        %p240 = pneg %p59
      $region38: #{forward.1} parent=31 // pred_check_branch
        %242 = sbr.rel (%p240) target = $region40
      $region39: #{forward.1} parent=31 // pred_region
        %p243 = scmp.lt.s32.totalorder %s13, 1
        %s244 = scalar_select %p243, %s13, 1
        %s245 = scalar_lea.vmem %s1, %s244
      $region40: #{forward.1} parent=31 // pred_fallthru
        _
      // Predicated region
      $region41: #{forward.1} parent=31 // pred_check
        %p246 = pneg %p85
      $region42: #{forward.1} parent=31 // pred_check_branch
        %248 = sbr.rel (%p246) target = $region44
      $region43: #{forward.1} parent=31 // pred_region
        %p249 = scmp.lt.s32.totalorder %s13, 1
        %s250 = scalar_select %p249, %s13, 1
        %s251 = smul.addr %s250, 8
        %s252 = smul.addr %s251, 8
        %s253 = scalar_lea.vmem %s2, %s252
      $region44: #{forward.1} parent=31 // pred_fallthru
        _
    $region32: #{forward.1} parent=5 // pred_fallthru
      _
    %p254 = scmp.le.s32.totalorder 1, %s13
    %p255 = scmp.lt.s32.totalorder %s13, 3
    %p256 = pnand %p254, %p255
    %p257 = pneg %p256
    // Predicated region
    $region45: #{forward.1} parent=5 // pred_check
      _
    $region46: #{forward.1} parent=5 // pred_check_branch
      %259 = sbr.rel (%p256) target = $region48
    $region47: #{forward.1} parent=5 // pred_region
      %s260 = ssub.s32 %s13, 1
      %p261 = scmp.lt.s32.totalorder %s18, 1
      %s262 = scalar_select %p261, %s18, 1
      %s263 = smul.addr %s262, 8
      %s264 = smul.addr %s263, 4
      %s265 = scalar_lea.vmem %s0, %s264
      %p266 = pneg %p39
      %p267 = pneg %p36
      %p268 = scmp.lt.s32.totalorder %s18, 1
      %s269 = scalar_select %p268, %s18, 1
      %s270 = scalar_lea.vmem %s1, %s269
      %p271 = pneg %p65
      %p272 = pneg %p62
      %p273 = scmp.lt.s32.totalorder %s18, 1
      %s274 = scalar_select %p273, %s18, 1
      %s275 = smul.addr %s274, 8
      %s276 = smul.addr %s275, 8
      %s277 = scalar_lea.vmem %s2, %s276
      %p278 = pneg %p91
      %p279 = pneg %p88
      %p280 = pneg %p112
      %p281 = pneg %p109
      %p282 = pneg %p133
      %p283 = pneg %p130
      %p284 = pneg %p154
      %p285 = pneg %p151
      %p286 = pneg %p175
      %p287 = pneg %p172
      %p288 = pneg %p201
      %p289 = pneg %p198
      %p290 = scmp.lt.s32.totalorder %s18, 1
      %s291 = scalar_select %p290, %s18, 1
      %s292 = scalar_lea.vmem %s7, %s291
      %p293 = scmp.lt.s32.totalorder %s18, 1
      %s294 = scalar_select %p293, %s18, 1
      %s295 = smul.addr %s294, 8
      %s296 = smul.addr %s295, 4
      %s297 = scalar_lea.vmem %s0, %s296
      %p298 = scmp.lt.s32.totalorder %s18, 1
      %s299 = scalar_select %p298, %s18, 1
      %s300 = scalar_lea.vmem %s1, %s299
      %p301 = scmp.lt.s32.totalorder %s18, 1
      %s302 = scalar_select %p301, %s18, 1
      %s303 = smul.addr %s302, 8
      %s304 = smul.addr %s303, 8
      %s305 = scalar_lea.vmem %s2, %s304
      %p306 = scmp.lt.s32.totalorder %s18, 1
      %s307 = scalar_select %p306, %s18, 1
      %s308 = scalar_lea.vmem %s7, %s307
      %v310 = vld [vmem:[%s4] sm:$0xf]
      %v311 = vpack.c.bf16 %v310, %v310
      %v312 = vld [vmem:[%s297] sm:$0xff]
      %v313 = vld [vmem:[%s297 + $0x8] sm:$0xff]
      %v314 = vld [vmem:[%s297 + $0x10] sm:$0xff]
      %v315 = vld [vmem:[%s297 + $0x18] sm:$0x33]
      %317 = vset.pattern.permute.xlu0 27
      %318 = vperm.xlu0 %317, %v310
      %v319 = vpop.permute.xlu0 %318
      %v325 = vunpack.c.l.b16 %v312
      %v326 = vunpack.c.h.b16 %v312
      %v327 = vunpack.c.l.b16 %v313
      %v328 = vunpack.c.h.b16 %v313
      %v329 = vunpack.c.l.b16 %v314
      %v330 = vunpack.c.h.b16 %v314
      %v331 = vunpack.c.l.b16 %v315
      %v332 = vunpack.c.h.b16 %v315
      %v333 = vpack.c.b16 %v327, %v325
      %v334 = vpack.c.b16 %v328, %v326
      %v335 = vpack.c.b16 %v331, %v329
      %v336 = vpack.c.b16 %v332, %v330
      %vm339 = vcmask 220160
      %v341 = vsel %vm339, %v311, 0
      %vm343 = vcmask 1044480
      %vm344 = vcmask 1045504
      %v345 = vsel %vm343, 4294967295, 65535
      %v346 = vsel %vm344, %v345, 0
      %v348 = vand.u32 %v335, %v346
      %v351 = vand.u32 %v336, %v346
      %353 = vmatprep.subr.bf16.mxu0 %v334
      %354 = vmatpush1.bf16.msra.mxu0 %v333
      %355 = vmatprep.subr.bf16.mxu0 %v351
      %356 = vmatpush1.bf16.msra.mxu0 %v348
      %357 = vmatprep.subr.bf16.mxu0 0
      %358 = vmatpush1.bf16.msra.mxu0 0
      %359 = vmatprep.subr.bf16.mxu0 0
      %360 = vmatpush1.bf16.msra.mxu0 0
      %361 = vmatprep.subr.bf16.mxu0 0
      %362 = vmatpush1.bf16.msra.mxu0 0
      %363 = vmatprep.subr.bf16.mxu0 0
      %364 = vmatpush1.bf16.msra.mxu0 0
      %365 = vmatprep.subr.bf16.mxu0 0
      %366 = vmatpush1.bf16.msra.mxu0 0
      %367 = vmatprep.subr.bf16.mxu0 0
      %368 = vmatpush1.bf16.msra.mxu0 0
      %369 = vmatprep.subr.bf16.mxu0 0
      %370 = vmatpush1.bf16.msra.mxu0 0
      %371 = vmatprep.subr.bf16.mxu0 0
      %372 = vmatpush1.bf16.msra.mxu0 0
      %373 = vmatprep.subr.bf16.mxu0 0
      %374 = vmatpush1.bf16.msra.mxu0 0
      %375 = vmatprep.subr.bf16.mxu0 0
      %376 = vmatpush1.bf16.msra.mxu0 0
      %377 = vmatprep.subr.bf16.mxu0 0
      %378 = vmatpush1.bf16.msra.mxu0 0
      %379 = vmatprep.subr.bf16.mxu0 0
      %380 = vmatpush1.bf16.msra.mxu0 0
      %381 = vmatprep.subr.bf16.mxu0 0
      %382 = vmatpush1.bf16.msra.mxu0 0
      %383 = vmatprep.subr.bf16.mxu0 0
      %384 = vmatpush1.bf16.msra.mxu0 0
      %385 = vmatprep.mubr.bf16.mxu0 0
      %386 = vmatmul.mubr.bf16.gmra.mrb[0].mxu0 %v341
      %v387 = vpop.f32.mrb[0].mxu0
      %v388 = vadd.f32 %v319, %v387
      %v389 = vpop.f32.mrb[0].mxu0
      %v390 = vadd.f32 %v319, %v389
      %v391 = vpop.f32.mrb[0].mxu0
      %v392 = vpop.f32.mrb[0].mxu0
      %393 = vdwg.mxu0
      %v394 = vmax.f32 %v388, 0.0
      %v395 = vmax.f32 %v390, 0.0
      %v396 = vld [vmem:[%s300] sm:$0x1]
      %vm397 = vcmp.eq.s32.totalorder %v396, 0
      %v398 = vld [vmem:[%s305] sm:$0xff]
      %v399 = vld [vmem:[%s305 + $0x8] sm:$0xff]
      %v400 = vsel %vm397, 1, 0
      %v401 = vlaneseq
      %v402 = vshrl.u32 %v401, 7
      %v403 = vsub.s32 0, %v402
      %v404 = vrot.slane %v400, %v403
      %vm405 = vcmp.eq.s32.totalorder %v404, 1
      %v406 = vsel %vm405, %v398, 0.0
      %v407 = vsel %vm405, %v399, 0.0
      %vm408 = vcmp.eq.s32.totalorder %v396, 1
      %s409 = scalar_lea.vmem %s305, 16
      %v410 = vld [vmem:[%s409] sm:$0xff]
      %v411 = vld [vmem:[%s409 + $0x8] sm:$0xff]
      %v412 = vsel %vm408, 1, 0
      %v413 = vlaneseq
      %v414 = vshrl.u32 %v413, 7
      %v415 = vsub.s32 0, %v414
      %v416 = vrot.slane %v412, %v415
      %vm417 = vcmp.eq.s32.totalorder %v416, 1
      %v418 = vsel %vm417, %v410, %v406
      %v419 = vsel %vm417, %v411, %v407
      %vm420 = vcmp.eq.s32.totalorder %v396, 2
      %s421 = scalar_lea.vmem %s305, 32
      %v422 = vld [vmem:[%s421] sm:$0xff]
      %v423 = vld [vmem:[%s421 + $0x8] sm:$0xff]
      %v424 = vsel %vm420, 1, 0
      %v425 = vlaneseq
      %v426 = vshrl.u32 %v425, 7
      %v427 = vsub.s32 0, %v426
      %v428 = vrot.slane %v424, %v427
      %vm429 = vcmp.eq.s32.totalorder %v428, 1
      %v430 = vsel %vm429, %v422, %v418
      %v431 = vsel %vm429, %v423, %v419
      %vm432 = vcmp.eq.s32.totalorder %v396, 3
      %s433 = scalar_lea.vmem %s305, 48
      %v434 = vld [vmem:[%s433] sm:$0xff]
      %v435 = vld [vmem:[%s433 + $0x8] sm:$0xff]
      %v436 = vsel %vm432, 1, 0
      %v437 = vlaneseq
      %v438 = vshrl.u32 %v437, 7
      %v439 = vsub.s32 0, %v438
      %v440 = vrot.slane %v436, %v439
      %vm441 = vcmp.eq.s32.totalorder %v440, 1
      %v442 = vsel %vm441, %v434, %v430
      %v443 = vsel %vm441, %v435, %v431
      %v444 = vld [vmem:[%s3] sm:$0xff]
      %v445 = vld [vmem:[%s3 + $0x8] sm:$0xff]
      %v446 = vld [vmem:[%s3 + $0x10] sm:$0xff]
      %v447 = vlaneseq
      %v448 = vshrl.u32 %v447, 7
      %v449 = vsub.s32 0, %v448
      %v450 = vrot.slane %v442, %v449
      %v451 = vmul.f32 %v450, %v444
      %v452 = vlaneseq
      %v453 = vshrl.u32 %v452, 7
      %v454 = vsub.s32 1, %v453
      %v455 = vrot.slane %v442, %v454
      %v456 = vmul.f32 %v455, %v445
      %v457 = vadd.f32 %v451, %v456
      %v458 = vlaneseq
      %v459 = vshrl.u32 %v458, 7
      %v460 = vsub.s32 2, %v459
      %v461 = vrot.slane %v442, %v460
      %v462 = vmul.f32 %v461, %v446
      %v463 = vadd.f32 %v457, %v462
      %v464 = vlaneseq
      %v465 = vshrl.u32 %v464, 7
      %v466 = vsub.s32 3, %v465
      %v467 = vrot.slane %v442, %v466
      %v468 = vadd.f32 %v463, %v467
      %v469 = vlaneseq
      %v470 = vshrl.u32 %v469, 7
      %v471 = vsub.s32 4, %v470
      %v472 = vrot.slane %v442, %v471
      %v473 = vmul.f32 %v472, %v444
      %v474 = vlaneseq
      %v475 = vshrl.u32 %v474, 7
      %v476 = vsub.s32 5, %v475
      %v477 = vrot.slane %v442, %v476
      %v478 = vmul.f32 %v477, %v445
      %v479 = vadd.f32 %v473, %v478
      %v480 = vlaneseq
      %v481 = vshrl.u32 %v480, 7
      %v482 = vsub.s32 6, %v481
      %v483 = vrot.slane %v442, %v482
      %v484 = vmul.f32 %v483, %v446
      %v485 = vadd.f32 %v479, %v484
      %v486 = vlaneseq
      %v487 = vshrl.u32 %v486, 7
      %v488 = vsub.s32 7, %v487
      %v489 = vrot.slane %v442, %v488
      %v490 = vadd.f32 %v485, %v489
      %v491 = vlaneseq
      %v492 = vshrl.u32 %v491, 7
      %v493 = vsub.s32 0, %v492
      %v494 = vrot.slane %v443, %v493
      %v495 = vmul.f32 %v494, %v444
      %v496 = vlaneseq
      %v497 = vshrl.u32 %v496, 7
      %v498 = vsub.s32 1, %v497
      %v499 = vrot.slane %v443, %v498
      %v500 = vmul.f32 %v499, %v445
      %v501 = vadd.f32 %v495, %v500
      %v502 = vlaneseq
      %v503 = vshrl.u32 %v502, 7
      %v504 = vsub.s32 2, %v503
      %v505 = vrot.slane %v443, %v504
      %v506 = vmul.f32 %v505, %v446
      %v507 = vadd.f32 %v501, %v506
      %v508 = vlaneseq
      %v509 = vshrl.u32 %v508, 7
      %v510 = vsub.s32 3, %v509
      %v511 = vrot.slane %v443, %v510
      %v512 = vadd.f32 %v507, %v511
      %vm513 = vcmp.lt.f32.partialorder %v512, 0.0
      %v514 = vsel %vm513, -1.0, 1.0
      %v515 = vand.u32 2147483647, %v512
      %v516 = vmax.f32 %v515, 1e-20
      %v517 = vmul.f32 %v516, %v514
      %v518 = vrcp.pop %v517
      %v519 = vmul.f32 1.0, %v518
      %v520 = vmul.f32 %v468, %v519
      %v521 = vmul.f32 %v520, 0.33333334
      %v522 = vmul.f32 %v490, %v519
      %v523 = vmul.f32 %v522, 0.33333334
      %v524 = vrcp.pop 8.0
      %v525 = vmul.f32 %v521, %v524
      %v526 = vsub.f32 %v525, 0.5
      %v527 = vmul.f32 %v526, 2.0
      %v528 = vrcp.pop 6.0
      %v529 = vmul.f32 %v523, %v528
      %v530 = vsub.f32 %v529, 0.5
      %v531 = vmul.f32 %v530, 2.0
      %v532 = vadd.f32 %v527, 1.0
      %v533 = vmul.f32 %v532, 8.0
      %v534 = vsub.f32 %v533, 1.0
      %v535 = vmul.f32 %v534, 0.5
      %v536 = vmax.f32 %v535, -2.0
      %v537 = vmin.f32 %v536, 9.0
      %v538 = vadd.f32 %v531, 1.0
      %v539 = vmul.f32 %v538, 6.0
      %v540 = vsub.f32 %v539, 1.0
      %v541 = vmul.f32 %v540, 0.5
      %v542 = vmax.f32 %v541, -2.0
      %v543 = vmin.f32 %v542, 7.0
      %v544 = vfloor.f32 %v537
      %v545 = vfloor.f32 %v543
      %v546 = vsub.f32 %v537, %v544
      %v547 = vsub.f32 %v543, %v545
      %v548 = vsub.f32 1.0, %v546
      %v549 = vsub.f32 1.0, %v547
      %v550 = vmul.f32 %v548, %v549
      %v551 = vadd.f32 %v544, 1.0
      %v552 = vmul.f32 %v546, %v549
      %v553 = vadd.f32 %v545, 1.0
      %v554 = vmul.f32 %v548, %v547
      %v555 = vmul.f32 %v546, %v547
      %vm556 = vcmp.ge.f32.partialorder %v544, 0.0
      %vm557 = vcmp.le.f32.partialorder %v544, 7.0
      %vm558 = vmand %vm556, %vm557
      %vm559 = vcmp.ge.f32.partialorder %v545, 0.0
      %vm560 = vmand %vm558, %vm559
      %vm561 = vcmp.le.f32.partialorder %v545, 5.0
      %vm562 = vmand %vm560, %vm561
      %v563 = vmax.f32 %v544, 0.0
      %v564 = vmin.f32 %v563, 7.0
      %v565 = vcvt.f32.s32.to.zero.pseudo %v564
      %v566 = vmax.f32 %v545, 0.0
      %v567 = vmin.f32 %v566, 5.0
      %v568 = vcvt.f32.s32.to.zero.pseudo %v567
      %v569 = vmul.u32 %v568, 8
      %v570 = vadd.s32 %v569, %v565
      %v571 = vsel %vm562, %v550, 0.0
      %vm572 = vcmp.ge.f32.partialorder %v551, 0.0
      %vm573 = vcmp.le.f32.partialorder %v551, 7.0
      %vm574 = vmand %vm572, %vm573
      %vm575 = vmand %vm574, %vm559
      %vm576 = vmand %vm575, %vm561
      %v577 = vmax.f32 %v551, 0.0
      %v578 = vmin.f32 %v577, 7.0
      %v579 = vcvt.f32.s32.to.zero.pseudo %v578
      %v580 = vadd.s32 %v569, %v579
      %v581 = vsel %vm576, %v552, 0.0
      %vm582 = vcmp.ge.f32.partialorder %v553, 0.0
      %vm583 = vmand %vm558, %vm582
      %vm584 = vcmp.le.f32.partialorder %v553, 5.0
      %vm585 = vmand %vm583, %vm584
      %v586 = vmax.f32 %v553, 0.0
      %v587 = vmin.f32 %v586, 5.0
      %v588 = vcvt.f32.s32.to.zero.pseudo %v587
      %v589 = vmul.u32 %v588, 8
      %v590 = vadd.s32 %v589, %v565
      %v591 = vsel %vm585, %v554, 0.0
      %vm592 = vmand %vm574, %vm582
      %vm593 = vmand %vm592, %vm584
      %v594 = vadd.s32 %v589, %v579
      %v595 = vsel %vm593, %v555, 0.0
      %v596 = vld [vmem:[%s5] sm:$0xff]
      %v597 = vpack.c.bf16 %v596, %v596
      %v598 = vpack.c.bf16 %v394, %v394
      %600 = vset.pattern.permute.xlu0 8
      %601 = vperm.xlu0 %600, %v596
      %v602 = vpop.permute.xlu0 %601
      %vm604 = vcmask 31744
      %v606 = vsel %vm604, %v597, 0
      %vm608 = vcmask 1041408
      %v610 = vsel %vm608, %v598, 0
      %612 = vmatprep.subr.bf16.mxu0 0
      %613 = vmatpush1.bf16.msra.mxu0 %v610
      %614 = vmatprep.subr.bf16.mxu0 0
      %615 = vmatpush1.bf16.msra.mxu0 0
      %616 = vmatprep.subr.bf16.mxu0 0
      %617 = vmatpush1.bf16.msra.mxu0 0
      %618 = vmatprep.subr.bf16.mxu0 0
      %619 = vmatpush1.bf16.msra.mxu0 0
      %620 = vmatprep.subr.bf16.mxu0 0
      %621 = vmatpush1.bf16.msra.mxu0 0
      %622 = vmatprep.subr.bf16.mxu0 0
      %623 = vmatpush1.bf16.msra.mxu0 0
      %624 = vmatprep.subr.bf16.mxu0 0
      %625 = vmatpush1.bf16.msra.mxu0 0
      %626 = vmatprep.subr.bf16.mxu0 0
      %627 = vmatpush1.bf16.msra.mxu0 0
      %628 = vmatprep.subr.bf16.mxu0 0
      %629 = vmatpush1.bf16.msra.mxu0 0
      %630 = vmatprep.subr.bf16.mxu0 0
      %631 = vmatpush1.bf16.msra.mxu0 0
      %632 = vmatprep.subr.bf16.mxu0 0
      %633 = vmatpush1.bf16.msra.mxu0 0
      %634 = vmatprep.subr.bf16.mxu0 0
      %635 = vmatpush1.bf16.msra.mxu0 0
      %636 = vmatprep.subr.bf16.mxu0 0
      %637 = vmatpush1.bf16.msra.mxu0 0
      %638 = vmatprep.subr.bf16.mxu0 0
      %639 = vmatpush1.bf16.msra.mxu0 0
      %640 = vmatprep.subr.bf16.mxu0 0
      %641 = vmatpush1.bf16.msra.mxu0 0
      %642 = vmatprep.subr.bf16.mxu0 0
      %643 = vmatpush1.bf16.msra.mxu0 0
      %644 = vmatprep.mubr.bf16.mxu0 0
      %645 = vmatmul.mubr.bf16.gmra.mrb[0].mxu0 %v606
      %v646 = vpop.f32.mrb[0].mxu0
      %v647 = vadd.f32 %v602, %v646
      %v648 = vpop.f32.mrb[0].mxu0
      %v649 = vpop.f32.mrb[0].mxu0
      %v650 = vpop.f32.mrb[0].mxu0
      %651 = vdwg.mxu0
      %v652 = vpack.c.bf16 %v395, %v395
      %654 = vrot.lane.b32.xlu0 %v597, 124
      %v655 = vpop.permute.xlu0 %654
      %v657 = vsel %vm604, %v655, 0
      %v660 = vsel %vm608, %v652, 0
      %662 = vmatprep.subr.bf16.mxu0 0
      %663 = vmatpush1.bf16.msra.mxu0 %v660
      %664 = vmatprep.subr.bf16.mxu0 0
      %665 = vmatpush1.bf16.msra.mxu0 0
      %666 = vmatprep.subr.bf16.mxu0 0
      %667 = vmatpush1.bf16.msra.mxu0 0
      %668 = vmatprep.subr.bf16.mxu0 0
      %669 = vmatpush1.bf16.msra.mxu0 0
      %670 = vmatprep.subr.bf16.mxu0 0
      %671 = vmatpush1.bf16.msra.mxu0 0
      %672 = vmatprep.subr.bf16.mxu0 0
      %673 = vmatpush1.bf16.msra.mxu0 0
      %674 = vmatprep.subr.bf16.mxu0 0
      %675 = vmatpush1.bf16.msra.mxu0 0
      %676 = vmatprep.subr.bf16.mxu0 0
      %677 = vmatpush1.bf16.msra.mxu0 0
      %678 = vmatprep.subr.bf16.mxu0 0
      %679 = vmatpush1.bf16.msra.mxu0 0
      %680 = vmatprep.subr.bf16.mxu0 0
      %681 = vmatpush1.bf16.msra.mxu0 0
      %682 = vmatprep.subr.bf16.mxu0 0
      %683 = vmatpush1.bf16.msra.mxu0 0
      %684 = vmatprep.subr.bf16.mxu0 0
      %685 = vmatpush1.bf16.msra.mxu0 0
      %686 = vmatprep.subr.bf16.mxu0 0
      %687 = vmatpush1.bf16.msra.mxu0 0
      %688 = vmatprep.subr.bf16.mxu0 0
      %689 = vmatpush1.bf16.msra.mxu0 0
      %690 = vmatprep.subr.bf16.mxu0 0
      %691 = vmatpush1.bf16.msra.mxu0 0
      %692 = vmatprep.subr.bf16.mxu0 0
      %693 = vmatpush1.bf16.msra.mxu0 0
      %694 = vmatprep.mubr.bf16.mxu0 0
      %695 = vmatmul.mubr.bf16.gmra.mrb[0].mxu0 %v657
      %v696 = vpop.f32.mrb[0].mxu0
      %v697 = vadd.f32 0.0, %v696
      %v698 = vpop.f32.mrb[0].mxu0
      %v699 = vpop.f32.mrb[0].mxu0
      %v700 = vpop.f32.mrb[0].mxu0
      %701 = vdwg.mxu0
      %v702 = vpack.c.bf16 %v697, %v697
      %v703 = vlaneseq
      %v704 = vshrl.u32 %v703, 7
      %v705 = vadd.s32 %v704, 8
      %v706 = vadd.s32 %v704, 16
      %v707 = vadd.s32 %v704, 24
      %v708 = vadd.s32 %v704, 32
      %v709 = vadd.s32 %v704, 40
      %v710 = vadd.s32 %v704, 48
      %v711 = vadd.s32 %v704, 56
      %v712 = vadd.s32 %v704, 64
      %v713 = vadd.s32 %v704, 72
      %v714 = vadd.s32 %v704, 80
      %v715 = vadd.s32 %v704, 88
      %v716 = vadd.s32 %v704, 96
      %v717 = vadd.s32 %v704, 104
      %v718 = vadd.s32 %v704, 112
      %v719 = vadd.s32 %v704, 120
      %v720 = vlaneseq
      %v721 = vshrl.u32 %v720, 7
      %v722 = vsub.s32 0, %v721
      %v723 = vrot.slane %v570, %v722
      %vm724 = vcmp.eq.s32.totalorder %v704, %v723
      %vm725 = vcmp.eq.s32.totalorder %v705, %v723
      %vm726 = vcmp.eq.s32.totalorder %v706, %v723
      %vm727 = vcmp.eq.s32.totalorder %v707, %v723
      %vm728 = vcmp.eq.s32.totalorder %v708, %v723
      %vm729 = vcmp.eq.s32.totalorder %v709, %v723
      %vm730 = vcmp.eq.s32.totalorder %v710, %v723
      %vm731 = vcmp.eq.s32.totalorder %v711, %v723
      %vm732 = vcmp.eq.s32.totalorder %v712, %v723
      %vm733 = vcmp.eq.s32.totalorder %v713, %v723
      %vm734 = vcmp.eq.s32.totalorder %v714, %v723
      %vm735 = vcmp.eq.s32.totalorder %v715, %v723
      %vm736 = vcmp.eq.s32.totalorder %v716, %v723
      %vm737 = vcmp.eq.s32.totalorder %v717, %v723
      %vm738 = vcmp.eq.s32.totalorder %v718, %v723
      %vm739 = vcmp.eq.s32.totalorder %v719, %v723
      %v740 = vlaneseq
      %v741 = vshrl.u32 %v740, 7
      %v742 = vsub.s32 0, %v741
      %v743 = vrot.slane %v571, %v742
      %v744 = vsel %vm724, %v743, 0.0
      %v745 = vsel %vm725, %v743, 0.0
      %v746 = vsel %vm726, %v743, 0.0
      %v747 = vsel %vm727, %v743, 0.0
      %v748 = vsel %vm728, %v743, 0.0
      %v749 = vsel %vm729, %v743, 0.0
      %v750 = vsel %vm730, %v743, 0.0
      %v751 = vsel %vm731, %v743, 0.0
      %v752 = vsel %vm732, %v743, 0.0
      %v753 = vsel %vm733, %v743, 0.0
      %v754 = vsel %vm734, %v743, 0.0
      %v755 = vsel %vm735, %v743, 0.0
      %v756 = vsel %vm736, %v743, 0.0
      %v757 = vsel %vm737, %v743, 0.0
      %v758 = vsel %vm738, %v743, 0.0
      %v759 = vsel %vm739, %v743, 0.0
      %v760 = vadd.f32 %v744, 0.0
      %v761 = vadd.f32 %v745, 0.0
      %v762 = vadd.f32 %v746, 0.0
      %v763 = vadd.f32 %v747, 0.0
      %v764 = vadd.f32 %v748, 0.0
      %v765 = vadd.f32 %v749, 0.0
      %v766 = vadd.f32 %v750, 0.0
      %v767 = vadd.f32 %v751, 0.0
      %v768 = vadd.f32 %v752, 0.0
      %v769 = vadd.f32 %v753, 0.0
      %v770 = vadd.f32 %v754, 0.0
      %v771 = vadd.f32 %v755, 0.0
      %v772 = vadd.f32 %v756, 0.0
      %v773 = vadd.f32 %v757, 0.0
      %v774 = vadd.f32 %v758, 0.0
      %v775 = vadd.f32 %v759, 0.0
      %v776 = vlaneseq
      %v777 = vshrl.u32 %v776, 7
      %v778 = vsub.s32 0, %v777
      %v779 = vrot.slane %v580, %v778
      %vm780 = vcmp.eq.s32.totalorder %v704, %v779
      %vm781 = vcmp.eq.s32.totalorder %v705, %v779
      %vm782 = vcmp.eq.s32.totalorder %v706, %v779
      %vm783 = vcmp.eq.s32.totalorder %v707, %v779
      %vm784 = vcmp.eq.s32.totalorder %v708, %v779
      %vm785 = vcmp.eq.s32.totalorder %v709, %v779
      %vm786 = vcmp.eq.s32.totalorder %v710, %v779
      %vm787 = vcmp.eq.s32.totalorder %v711, %v779
      %vm788 = vcmp.eq.s32.totalorder %v712, %v779
      %vm789 = vcmp.eq.s32.totalorder %v713, %v779
      %vm790 = vcmp.eq.s32.totalorder %v714, %v779
      %vm791 = vcmp.eq.s32.totalorder %v715, %v779
      %vm792 = vcmp.eq.s32.totalorder %v716, %v779
      %vm793 = vcmp.eq.s32.totalorder %v717, %v779
      %vm794 = vcmp.eq.s32.totalorder %v718, %v779
      %vm795 = vcmp.eq.s32.totalorder %v719, %v779
      %v796 = vlaneseq
      %v797 = vshrl.u32 %v796, 7
      %v798 = vsub.s32 0, %v797
      %v799 = vrot.slane %v581, %v798
      %v800 = vsel %vm780, %v799, 0.0
      %v801 = vsel %vm781, %v799, 0.0
      %v802 = vsel %vm782, %v799, 0.0
      %v803 = vsel %vm783, %v799, 0.0
      %v804 = vsel %vm784, %v799, 0.0
      %v805 = vsel %vm785, %v799, 0.0
      %v806 = vsel %vm786, %v799, 0.0
      %v807 = vsel %vm787, %v799, 0.0
      %v808 = vsel %vm788, %v799, 0.0
      %v809 = vsel %vm789, %v799, 0.0
      %v810 = vsel %vm790, %v799, 0.0
      %v811 = vsel %vm791, %v799, 0.0
      %v812 = vsel %vm792, %v799, 0.0
      %v813 = vsel %vm793, %v799, 0.0
      %v814 = vsel %vm794, %v799, 0.0
      %v815 = vsel %vm795, %v799, 0.0
      %v816 = vadd.f32 %v760, %v800
      %v817 = vadd.f32 %v761, %v801
      %v818 = vadd.f32 %v762, %v802
      %v819 = vadd.f32 %v763, %v803
      %v820 = vadd.f32 %v764, %v804
      %v821 = vadd.f32 %v765, %v805
      %v822 = vadd.f32 %v766, %v806
      %v823 = vadd.f32 %v767, %v807
      %v824 = vadd.f32 %v768, %v808
      %v825 = vadd.f32 %v769, %v809
      %v826 = vadd.f32 %v770, %v810
      %v827 = vadd.f32 %v771, %v811
      %v828 = vadd.f32 %v772, %v812
      %v829 = vadd.f32 %v773, %v813
      %v830 = vadd.f32 %v774, %v814
      %v831 = vadd.f32 %v775, %v815
      %v832 = vlaneseq
      %v833 = vshrl.u32 %v832, 7
      %v834 = vsub.s32 0, %v833
      %v835 = vrot.slane %v590, %v834
      %vm836 = vcmp.eq.s32.totalorder %v704, %v835
      %vm837 = vcmp.eq.s32.totalorder %v705, %v835
      %vm838 = vcmp.eq.s32.totalorder %v706, %v835
      %vm839 = vcmp.eq.s32.totalorder %v707, %v835
      %vm840 = vcmp.eq.s32.totalorder %v708, %v835
      %vm841 = vcmp.eq.s32.totalorder %v709, %v835
      %vm842 = vcmp.eq.s32.totalorder %v710, %v835
      %vm843 = vcmp.eq.s32.totalorder %v711, %v835
      %vm844 = vcmp.eq.s32.totalorder %v712, %v835
      %vm845 = vcmp.eq.s32.totalorder %v713, %v835
      %vm846 = vcmp.eq.s32.totalorder %v714, %v835
      %vm847 = vcmp.eq.s32.totalorder %v715, %v835
      %vm848 = vcmp.eq.s32.totalorder %v716, %v835
      %vm849 = vcmp.eq.s32.totalorder %v717, %v835
      %vm850 = vcmp.eq.s32.totalorder %v718, %v835
      %vm851 = vcmp.eq.s32.totalorder %v719, %v835
      %v852 = vlaneseq
      %v853 = vshrl.u32 %v852, 7
      %v854 = vsub.s32 0, %v853
      %v855 = vrot.slane %v591, %v854
      %v856 = vsel %vm836, %v855, 0.0
      %v857 = vsel %vm837, %v855, 0.0
      %v858 = vsel %vm838, %v855, 0.0
      %v859 = vsel %vm839, %v855, 0.0
      %v860 = vsel %vm840, %v855, 0.0
      %v861 = vsel %vm841, %v855, 0.0
      %v862 = vsel %vm842, %v855, 0.0
      %v863 = vsel %vm843, %v855, 0.0
      %v864 = vsel %vm844, %v855, 0.0
      %v865 = vsel %vm845, %v855, 0.0
      %v866 = vsel %vm846, %v855, 0.0
      %v867 = vsel %vm847, %v855, 0.0
      %v868 = vsel %vm848, %v855, 0.0
      %v869 = vsel %vm849, %v855, 0.0
      %v870 = vsel %vm850, %v855, 0.0
      %v871 = vsel %vm851, %v855, 0.0
      %v872 = vadd.f32 %v816, %v856
      %v873 = vadd.f32 %v817, %v857
      %v874 = vadd.f32 %v818, %v858
      %v875 = vadd.f32 %v819, %v859
      %v876 = vadd.f32 %v820, %v860
      %v877 = vadd.f32 %v821, %v861
      %v878 = vadd.f32 %v822, %v862
      %v879 = vadd.f32 %v823, %v863
      %v880 = vadd.f32 %v824, %v864
      %v881 = vadd.f32 %v825, %v865
      %v882 = vadd.f32 %v826, %v866
      %v883 = vadd.f32 %v827, %v867
      %v884 = vadd.f32 %v828, %v868
      %v885 = vadd.f32 %v829, %v869
      %v886 = vadd.f32 %v830, %v870
      %v887 = vadd.f32 %v831, %v871
      %v888 = vlaneseq
      %v889 = vshrl.u32 %v888, 7
      %v890 = vsub.s32 0, %v889
      %v891 = vrot.slane %v594, %v890
      %vm892 = vcmp.eq.s32.totalorder %v704, %v891
      %vm893 = vcmp.eq.s32.totalorder %v705, %v891
      %vm894 = vcmp.eq.s32.totalorder %v706, %v891
      %vm895 = vcmp.eq.s32.totalorder %v707, %v891
      %vm896 = vcmp.eq.s32.totalorder %v708, %v891
      %vm897 = vcmp.eq.s32.totalorder %v709, %v891
      %vm898 = vcmp.eq.s32.totalorder %v710, %v891
      %vm899 = vcmp.eq.s32.totalorder %v711, %v891
      %vm900 = vcmp.eq.s32.totalorder %v712, %v891
      %vm901 = vcmp.eq.s32.totalorder %v713, %v891
      %vm902 = vcmp.eq.s32.totalorder %v714, %v891
      %vm903 = vcmp.eq.s32.totalorder %v715, %v891
      %vm904 = vcmp.eq.s32.totalorder %v716, %v891
      %vm905 = vcmp.eq.s32.totalorder %v717, %v891
      %vm906 = vcmp.eq.s32.totalorder %v718, %v891
      %vm907 = vcmp.eq.s32.totalorder %v719, %v891
      %v908 = vlaneseq
      %v909 = vshrl.u32 %v908, 7
      %v910 = vsub.s32 0, %v909
      %v911 = vrot.slane %v595, %v910
      %v912 = vsel %vm892, %v911, 0.0
      %v913 = vsel %vm893, %v911, 0.0
      %v914 = vsel %vm894, %v911, 0.0
      %v915 = vsel %vm895, %v911, 0.0
      %v916 = vsel %vm896, %v911, 0.0
      %v917 = vsel %vm897, %v911, 0.0
      %v918 = vsel %vm898, %v911, 0.0
      %v919 = vsel %vm899, %v911, 0.0
      %v920 = vsel %vm900, %v911, 0.0
      %v921 = vsel %vm901, %v911, 0.0
      %v922 = vsel %vm902, %v911, 0.0
      %v923 = vsel %vm903, %v911, 0.0
      %v924 = vsel %vm904, %v911, 0.0
      %v925 = vsel %vm905, %v911, 0.0
      %v926 = vsel %vm906, %v911, 0.0
      %v927 = vsel %vm907, %v911, 0.0
      %v928 = vadd.f32 %v872, %v912
      %v929 = vadd.f32 %v873, %v913
      %v930 = vadd.f32 %v874, %v914
      %v931 = vadd.f32 %v875, %v915
      %v932 = vadd.f32 %v876, %v916
      %v933 = vadd.f32 %v877, %v917
      %v934 = vadd.f32 %v878, %v918
      %v935 = vadd.f32 %v879, %v919
      %v936 = vadd.f32 %v880, %v920
      %v937 = vadd.f32 %v881, %v921
      %v938 = vadd.f32 %v882, %v922
      %v939 = vadd.f32 %v883, %v923
      %v940 = vadd.f32 %v884, %v924
      %v941 = vadd.f32 %v885, %v925
      %v942 = vadd.f32 %v886, %v926
      %v943 = vadd.f32 %v887, %v927
      %v944 = vpack.c.bf16 %v929, %v928
      %v945 = vpack.c.bf16 %v931, %v930
      %v946 = vpack.c.bf16 %v933, %v932
      %v947 = vpack.c.bf16 %v935, %v934
      %v948 = vpack.c.bf16 %v937, %v936
      %v949 = vpack.c.bf16 %v939, %v938
      %v950 = vpack.c.bf16 %v941, %v940
      %v951 = vpack.c.bf16 %v943, %v942
      %952 = vmatprep.subr.bf16.mxu0 0
      %953 = vmatpush1.bf16.msra.mxu0 %v944
      %954 = vmatprep.subr.bf16.mxu0 0
      %955 = vmatpush1.bf16.msra.mxu0 %v945
      %956 = vmatprep.subr.bf16.mxu0 0
      %957 = vmatpush1.bf16.msra.mxu0 %v946
      %958 = vmatprep.subr.bf16.mxu0 0
      %959 = vmatpush1.bf16.msra.mxu0 %v947
      %960 = vmatprep.subr.bf16.mxu0 0
      %961 = vmatpush1.bf16.msra.mxu0 %v948
      %962 = vmatprep.subr.bf16.mxu0 0
      %963 = vmatpush1.bf16.msra.mxu0 %v949
      %964 = vmatprep.subr.bf16.mxu0 0
      %965 = vmatpush1.bf16.msra.mxu0 %v950
      %966 = vmatprep.subr.bf16.mxu0 0
      %967 = vmatpush1.bf16.msra.mxu0 %v951
      %968 = vmatprep.subr.bf16.mxu0 0
      %969 = vmatpush1.bf16.msra.mxu0 0
      %970 = vmatprep.subr.bf16.mxu0 0
      %971 = vmatpush1.bf16.msra.mxu0 0
      %972 = vmatprep.subr.bf16.mxu0 0
      %973 = vmatpush1.bf16.msra.mxu0 0
      %974 = vmatprep.subr.bf16.mxu0 0
      %975 = vmatpush1.bf16.msra.mxu0 0
      %976 = vmatprep.subr.bf16.mxu0 0
      %977 = vmatpush1.bf16.msra.mxu0 0
      %978 = vmatprep.subr.bf16.mxu0 0
      %979 = vmatpush1.bf16.msra.mxu0 0
      %980 = vmatprep.subr.bf16.mxu0 0
      %981 = vmatpush1.bf16.msra.mxu0 0
      %982 = vmatprep.subr.bf16.mxu0 0
      %983 = vmatpush1.bf16.msra.mxu0 0
      %984 = vmatprep.mubr.bf16.mxu0 0
      %985 = vmatmul.mubr.bf16.gmra.mrb[0].mxu0 %v702
      %v986 = vpop.f32.mrb[0].mxu0
      %v987 = vadd.f32 0.0, %v986
      %v988 = vpop.f32.mrb[0].mxu0
      %v989 = vpop.f32.mrb[0].mxu0
      %v990 = vpop.f32.mrb[0].mxu0
      %991 = vdwg.mxu0
      %v992 = vadd.f32 %v647, %v987
      %v993 = vmax.f32 %v992, 0.0
      %994 = vset.pattern.permute.xlu0 9
      %995 = vperm.xlu0 %994, %v596
      %v996 = vpop.permute.xlu0 %995
      %v998 = vmul.f32 %v993, %v996
      %v999 = vrot.slane %v998, 4
      %v1000 = vadd.f32 %v998, %v999
      %v1001 = vrot.slane %v1000, 2
      %v1002 = vadd.f32 %v1000, %v1001
      %v1003 = vrot.slane %v1002, 1
      %v1004 = vadd.f32 %v1002, %v1003
      %v1005 = vlaneseq
      %v1006 = vshrl.u32 %v1005, 7
      %v1007 = vsub.s32 1, %v1006
      %v1008 = vrot.slane %v570, %v1007
      %vm1009 = vcmp.eq.s32.totalorder %v704, %v1008
      %vm1010 = vcmp.eq.s32.totalorder %v705, %v1008
      %vm1011 = vcmp.eq.s32.totalorder %v706, %v1008
      %vm1012 = vcmp.eq.s32.totalorder %v707, %v1008
      %vm1013 = vcmp.eq.s32.totalorder %v708, %v1008
      %vm1014 = vcmp.eq.s32.totalorder %v709, %v1008
      %vm1015 = vcmp.eq.s32.totalorder %v710, %v1008
      %vm1016 = vcmp.eq.s32.totalorder %v711, %v1008
      %vm1017 = vcmp.eq.s32.totalorder %v712, %v1008
      %vm1018 = vcmp.eq.s32.totalorder %v713, %v1008
      %vm1019 = vcmp.eq.s32.totalorder %v714, %v1008
      %vm1020 = vcmp.eq.s32.totalorder %v715, %v1008
      %vm1021 = vcmp.eq.s32.totalorder %v716, %v1008
      %vm1022 = vcmp.eq.s32.totalorder %v717, %v1008
      %vm1023 = vcmp.eq.s32.totalorder %v718, %v1008
      %vm1024 = vcmp.eq.s32.totalorder %v719, %v1008
      %v1025 = vlaneseq
      %v1026 = vshrl.u32 %v1025, 7
      %v1027 = vsub.s32 1, %v1026
      %v1028 = vrot.slane %v571, %v1027
      %v1029 = vsel %vm1009, %v1028, 0.0
      %v1030 = vsel %vm1010, %v1028, 0.0
      %v1031 = vsel %vm1011, %v1028, 0.0
      %v1032 = vsel %vm1012, %v1028, 0.0
      %v1033 = vsel %vm1013, %v1028, 0.0
      %v1034 = vsel %vm1014, %v1028, 0.0
      %v1035 = vsel %vm1015, %v1028, 0.0
      %v1036 = vsel %vm1016, %v1028, 0.0
      %v1037 = vsel %vm1017, %v1028, 0.0
      %v1038 = vsel %vm1018, %v1028, 0.0
      %v1039 = vsel %vm1019, %v1028, 0.0
      %v1040 = vsel %vm1020, %v1028, 0.0
      %v1041 = vsel %vm1021, %v1028, 0.0
      %v1042 = vsel %vm1022, %v1028, 0.0
      %v1043 = vsel %vm1023, %v1028, 0.0
      %v1044 = vsel %vm1024, %v1028, 0.0
      %v1045 = vadd.f32 %v1029, 0.0
      %v1046 = vadd.f32 %v1030, 0.0
      %v1047 = vadd.f32 %v1031, 0.0
      %v1048 = vadd.f32 %v1032, 0.0
      %v1049 = vadd.f32 %v1033, 0.0
      %v1050 = vadd.f32 %v1034, 0.0
      %v1051 = vadd.f32 %v1035, 0.0
      %v1052 = vadd.f32 %v1036, 0.0
      %v1053 = vadd.f32 %v1037, 0.0
      %v1054 = vadd.f32 %v1038, 0.0
      %v1055 = vadd.f32 %v1039, 0.0
      %v1056 = vadd.f32 %v1040, 0.0
      %v1057 = vadd.f32 %v1041, 0.0
      %v1058 = vadd.f32 %v1042, 0.0
      %v1059 = vadd.f32 %v1043, 0.0
      %v1060 = vadd.f32 %v1044, 0.0
      %v1061 = vlaneseq
      %v1062 = vshrl.u32 %v1061, 7
      %v1063 = vsub.s32 1, %v1062
      %v1064 = vrot.slane %v580, %v1063
      %vm1065 = vcmp.eq.s32.totalorder %v704, %v1064
      %vm1066 = vcmp.eq.s32.totalorder %v705, %v1064
      %vm1067 = vcmp.eq.s32.totalorder %v706, %v1064
      %vm1068 = vcmp.eq.s32.totalorder %v707, %v1064
      %vm1069 = vcmp.eq.s32.totalorder %v708, %v1064
      %vm1070 = vcmp.eq.s32.totalorder %v709, %v1064
      %vm1071 = vcmp.eq.s32.totalorder %v710, %v1064
      %vm1072 = vcmp.eq.s32.totalorder %v711, %v1064
      %vm1073 = vcmp.eq.s32.totalorder %v712, %v1064
      %vm1074 = vcmp.eq.s32.totalorder %v713, %v1064
      %vm1075 = vcmp.eq.s32.totalorder %v714, %v1064
      %vm1076 = vcmp.eq.s32.totalorder %v715, %v1064
      %vm1077 = vcmp.eq.s32.totalorder %v716, %v1064
      %vm1078 = vcmp.eq.s32.totalorder %v717, %v1064
      %vm1079 = vcmp.eq.s32.totalorder %v718, %v1064
      %vm1080 = vcmp.eq.s32.totalorder %v719, %v1064
      %v1081 = vlaneseq
      %v1082 = vshrl.u32 %v1081, 7
      %v1083 = vsub.s32 1, %v1082
      %v1084 = vrot.slane %v581, %v1083
      %v1085 = vsel %vm1065, %v1084, 0.0
      %v1086 = vsel %vm1066, %v1084, 0.0
      %v1087 = vsel %vm1067, %v1084, 0.0
      %v1088 = vsel %vm1068, %v1084, 0.0
      %v1089 = vsel %vm1069, %v1084, 0.0
      %v1090 = vsel %vm1070, %v1084, 0.0
      %v1091 = vsel %vm1071, %v1084, 0.0
      %v1092 = vsel %vm1072, %v1084, 0.0
      %v1093 = vsel %vm1073, %v1084, 0.0
      %v1094 = vsel %vm1074, %v1084, 0.0
      %v1095 = vsel %vm1075, %v1084, 0.0
      %v1096 = vsel %vm1076, %v1084, 0.0
      %v1097 = vsel %vm1077, %v1084, 0.0
      %v1098 = vsel %vm1078, %v1084, 0.0
      %v1099 = vsel %vm1079, %v1084, 0.0
      %v1100 = vsel %vm1080, %v1084, 0.0
      %v1101 = vadd.f32 %v1045, %v1085
      %v1102 = vadd.f32 %v1046, %v1086
      %v1103 = vadd.f32 %v1047, %v1087
      %v1104 = vadd.f32 %v1048, %v1088
      %v1105 = vadd.f32 %v1049, %v1089
      %v1106 = vadd.f32 %v1050, %v1090
      %v1107 = vadd.f32 %v1051, %v1091
      %v1108 = vadd.f32 %v1052, %v1092
      %v1109 = vadd.f32 %v1053, %v1093
      %v1110 = vadd.f32 %v1054, %v1094
      %v1111 = vadd.f32 %v1055, %v1095
      %v1112 = vadd.f32 %v1056, %v1096
      %v1113 = vadd.f32 %v1057, %v1097
      %v1114 = vadd.f32 %v1058, %v1098
      %v1115 = vadd.f32 %v1059, %v1099
      %v1116 = vadd.f32 %v1060, %v1100
      %v1117 = vlaneseq
      %v1118 = vshrl.u32 %v1117, 7
      %v1119 = vsub.s32 1, %v1118
      %v1120 = vrot.slane %v590, %v1119
      %vm1121 = vcmp.eq.s32.totalorder %v704, %v1120
      %vm1122 = vcmp.eq.s32.totalorder %v705, %v1120
      %vm1123 = vcmp.eq.s32.totalorder %v706, %v1120
      %vm1124 = vcmp.eq.s32.totalorder %v707, %v1120
      %vm1125 = vcmp.eq.s32.totalorder %v708, %v1120
      %vm1126 = vcmp.eq.s32.totalorder %v709, %v1120
      %vm1127 = vcmp.eq.s32.totalorder %v710, %v1120
      %vm1128 = vcmp.eq.s32.totalorder %v711, %v1120
      %vm1129 = vcmp.eq.s32.totalorder %v712, %v1120
      %vm1130 = vcmp.eq.s32.totalorder %v713, %v1120
      %vm1131 = vcmp.eq.s32.totalorder %v714, %v1120
      %vm1132 = vcmp.eq.s32.totalorder %v715, %v1120
      %vm1133 = vcmp.eq.s32.totalorder %v716, %v1120
      %vm1134 = vcmp.eq.s32.totalorder %v717, %v1120
      %vm1135 = vcmp.eq.s32.totalorder %v718, %v1120
      %vm1136 = vcmp.eq.s32.totalorder %v719, %v1120
      %v1137 = vlaneseq
      %v1138 = vshrl.u32 %v1137, 7
      %v1139 = vsub.s32 1, %v1138
      %v1140 = vrot.slane %v591, %v1139
      %v1141 = vsel %vm1121, %v1140, 0.0
      %v1142 = vsel %vm1122, %v1140, 0.0
      %v1143 = vsel %vm1123, %v1140, 0.0
      %v1144 = vsel %vm1124, %v1140, 0.0
      %v1145 = vsel %vm1125, %v1140, 0.0
      %v1146 = vsel %vm1126, %v1140, 0.0
      %v1147 = vsel %vm1127, %v1140, 0.0
      %v1148 = vsel %vm1128, %v1140, 0.0
      %v1149 = vsel %vm1129, %v1140, 0.0
      %v1150 = vsel %vm1130, %v1140, 0.0
      %v1151 = vsel %vm1131, %v1140, 0.0
      %v1152 = vsel %vm1132, %v1140, 0.0
      %v1153 = vsel %vm1133, %v1140, 0.0
      %v1154 = vsel %vm1134, %v1140, 0.0
      %v1155 = vsel %vm1135, %v1140, 0.0
      %v1156 = vsel %vm1136, %v1140, 0.0
      %v1157 = vadd.f32 %v1101, %v1141
      %v1158 = vadd.f32 %v1102, %v1142
      %v1159 = vadd.f32 %v1103, %v1143
      %v1160 = vadd.f32 %v1104, %v1144
      %v1161 = vadd.f32 %v1105, %v1145
      %v1162 = vadd.f32 %v1106, %v1146
      %v1163 = vadd.f32 %v1107, %v1147
      %v1164 = vadd.f32 %v1108, %v1148
      %v1165 = vadd.f32 %v1109, %v1149
      %v1166 = vadd.f32 %v1110, %v1150
      %v1167 = vadd.f32 %v1111, %v1151
      %v1168 = vadd.f32 %v1112, %v1152
      %v1169 = vadd.f32 %v1113, %v1153
      %v1170 = vadd.f32 %v1114, %v1154
      %v1171 = vadd.f32 %v1115, %v1155
      %v1172 = vadd.f32 %v1116, %v1156
      %v1173 = vlaneseq
      %v1174 = vshrl.u32 %v1173, 7
      %v1175 = vsub.s32 1, %v1174
      %v1176 = vrot.slane %v594, %v1175
      %vm1177 = vcmp.eq.s32.totalorder %v704, %v1176
      %vm1178 = vcmp.eq.s32.totalorder %v705, %v1176
      %vm1179 = vcmp.eq.s32.totalorder %v706, %v1176
      %vm1180 = vcmp.eq.s32.totalorder %v707, %v1176
      %vm1181 = vcmp.eq.s32.totalorder %v708, %v1176
      %vm1182 = vcmp.eq.s32.totalorder %v709, %v1176
      %vm1183 = vcmp.eq.s32.totalorder %v710, %v1176
      %vm1184 = vcmp.eq.s32.totalorder %v711, %v1176
      %vm1185 = vcmp.eq.s32.totalorder %v712, %v1176
      %vm1186 = vcmp.eq.s32.totalorder %v713, %v1176
      %vm1187 = vcmp.eq.s32.totalorder %v714, %v1176
      %vm1188 = vcmp.eq.s32.totalorder %v715, %v1176
      %vm1189 = vcmp.eq.s32.totalorder %v716, %v1176
      %vm1190 = vcmp.eq.s32.totalorder %v717, %v1176
      %vm1191 = vcmp.eq.s32.totalorder %v718, %v1176
      %vm1192 = vcmp.eq.s32.totalorder %v719, %v1176
      %v1193 = vlaneseq
      %v1194 = vshrl.u32 %v1193, 7
      %v1195 = vsub.s32 1, %v1194
      %v1196 = vrot.slane %v595, %v1195
      %v1197 = vsel %vm1177, %v1196, 0.0
      %v1198 = vsel %vm1178, %v1196, 0.0
      %v1199 = vsel %vm1179, %v1196, 0.0
      %v1200 = vsel %vm1180, %v1196, 0.0
      %v1201 = vsel %vm1181, %v1196, 0.0
      %v1202 = vsel %vm1182, %v1196, 0.0
      %v1203 = vsel %vm1183, %v1196, 0.0
      %v1204 = vsel %vm1184, %v1196, 0.0
      %v1205 = vsel %vm1185, %v1196, 0.0
      %v1206 = vsel %vm1186, %v1196, 0.0
      %v1207 = vsel %vm1187, %v1196, 0.0
      %v1208 = vsel %vm1188, %v1196, 0.0
      %v1209 = vsel %vm1189, %v1196, 0.0
      %v1210 = vsel %vm1190, %v1196, 0.0
      %v1211 = vsel %vm1191, %v1196, 0.0
      %v1212 = vsel %vm1192, %v1196, 0.0
      %v1213 = vadd.f32 %v1157, %v1197
      %v1214 = vadd.f32 %v1158, %v1198
      %v1215 = vadd.f32 %v1159, %v1199
      %v1216 = vadd.f32 %v1160, %v1200
      %v1217 = vadd.f32 %v1161, %v1201
      %v1218 = vadd.f32 %v1162, %v1202
      %v1219 = vadd.f32 %v1163, %v1203
      %v1220 = vadd.f32 %v1164, %v1204
      %v1221 = vadd.f32 %v1165, %v1205
      %v1222 = vadd.f32 %v1166, %v1206
      %v1223 = vadd.f32 %v1167, %v1207
      %v1224 = vadd.f32 %v1168, %v1208
      %v1225 = vadd.f32 %v1169, %v1209
      %v1226 = vadd.f32 %v1170, %v1210
      %v1227 = vadd.f32 %v1171, %v1211
      %v1228 = vadd.f32 %v1172, %v1212
      %v1229 = vpack.c.bf16 %v1214, %v1213
      %v1230 = vpack.c.bf16 %v1216, %v1215
      %v1231 = vpack.c.bf16 %v1218, %v1217
      %v1232 = vpack.c.bf16 %v1220, %v1219
      %v1233 = vpack.c.bf16 %v1222, %v1221
      %v1234 = vpack.c.bf16 %v1224, %v1223
      %v1235 = vpack.c.bf16 %v1226, %v1225
      %v1236 = vpack.c.bf16 %v1228, %v1227
      %1237 = vmatprep.subr.bf16.mxu0 0
      %1238 = vmatpush1.bf16.msra.mxu0 %v1229
      %1239 = vmatprep.subr.bf16.mxu0 0
      %1240 = vmatpush1.bf16.msra.mxu0 %v1230
      %1241 = vmatprep.subr.bf16.mxu0 0
      %1242 = vmatpush1.bf16.msra.mxu0 %v1231
      %1243 = vmatprep.subr.bf16.mxu0 0
      %1244 = vmatpush1.bf16.msra.mxu0 %v1232
      %1245 = vmatprep.subr.bf16.mxu0 0
      %1246 = vmatpush1.bf16.msra.mxu0 %v1233
      %1247 = vmatprep.subr.bf16.mxu0 0
      %1248 = vmatpush1.bf16.msra.mxu0 %v1234
      %1249 = vmatprep.subr.bf16.mxu0 0
      %1250 = vmatpush1.bf16.msra.mxu0 %v1235
      %1251 = vmatprep.subr.bf16.mxu0 0
      %1252 = vmatpush1.bf16.msra.mxu0 %v1236
      %1253 = vmatprep.subr.bf16.mxu0 0
      %1254 = vmatpush1.bf16.msra.mxu0 0
      %1255 = vmatprep.subr.bf16.mxu0 0
      %1256 = vmatpush1.bf16.msra.mxu0 0
      %1257 = vmatprep.subr.bf16.mxu0 0
      %1258 = vmatpush1.bf16.msra.mxu0 0
      %1259 = vmatprep.subr.bf16.mxu0 0
      %1260 = vmatpush1.bf16.msra.mxu0 0
      %1261 = vmatprep.subr.bf16.mxu0 0
      %1262 = vmatpush1.bf16.msra.mxu0 0
      %1263 = vmatprep.subr.bf16.mxu0 0
      %1264 = vmatpush1.bf16.msra.mxu0 0
      %1265 = vmatprep.subr.bf16.mxu0 0
      %1266 = vmatpush1.bf16.msra.mxu0 0
      %1267 = vmatprep.subr.bf16.mxu0 0
      %1268 = vmatpush1.bf16.msra.mxu0 0
      %1269 = vmatprep.mubr.bf16.mxu0 0
      %1270 = vmatmul.mubr.bf16.gmra.mrb[0].mxu0 %v702
      %v1271 = vpop.f32.mrb[0].mxu0
      %v1272 = vadd.f32 0.0, %v1271
      %v1273 = vpop.f32.mrb[0].mxu0
      %v1274 = vpop.f32.mrb[0].mxu0
      %v1275 = vpop.f32.mrb[0].mxu0
      %1276 = vdwg.mxu0
      %v1277 = vadd.f32 %v647, %v1272
      %v1278 = vmax.f32 %v1277, 0.0
      %v1279 = vmul.f32 %v1278, %v996
      %v1280 = vrot.slane %v1279, 4
      %v1281 = vadd.f32 %v1279, %v1280
      %v1282 = vrot.slane %v1281, 2
      %v1283 = vadd.f32 %v1281, %v1282
      %v1284 = vrot.slane %v1283, 1
      %v1285 = vadd.f32 %v1283, %v1284
      %v1286 = vlaneseq
      %v1287 = vshrl.u32 %v1286, 7
      %v1288 = vsub.s32 2, %v1287
      %v1289 = vrot.slane %v570, %v1288
      %vm1290 = vcmp.eq.s32.totalorder %v704, %v1289
      %vm1291 = vcmp.eq.s32.totalorder %v705, %v1289
      %vm1292 = vcmp.eq.s32.totalorder %v706, %v1289
      %vm1293 = vcmp.eq.s32.totalorder %v707, %v1289
      %vm1294 = vcmp.eq.s32.totalorder %v708, %v1289
      %vm1295 = vcmp.eq.s32.totalorder %v709, %v1289
      %vm1296 = vcmp.eq.s32.totalorder %v710, %v1289
      %vm1297 = vcmp.eq.s32.totalorder %v711, %v1289
      %vm1298 = vcmp.eq.s32.totalorder %v712, %v1289
      %vm1299 = vcmp.eq.s32.totalorder %v713, %v1289
      %vm1300 = vcmp.eq.s32.totalorder %v714, %v1289
      %vm1301 = vcmp.eq.s32.totalorder %v715, %v1289
      %vm1302 = vcmp.eq.s32.totalorder %v716, %v1289
      %vm1303 = vcmp.eq.s32.totalorder %v717, %v1289
      %vm1304 = vcmp.eq.s32.totalorder %v718, %v1289
      %vm1305 = vcmp.eq.s32.totalorder %v719, %v1289
      %v1306 = vlaneseq
      %v1307 = vshrl.u32 %v1306, 7
      %v1308 = vsub.s32 2, %v1307
      %v1309 = vrot.slane %v571, %v1308
      %v1310 = vsel %vm1290, %v1309, 0.0
      %v1311 = vsel %vm1291, %v1309, 0.0
      %v1312 = vsel %vm1292, %v1309, 0.0
      %v1313 = vsel %vm1293, %v1309, 0.0
      %v1314 = vsel %vm1294, %v1309, 0.0
      %v1315 = vsel %vm1295, %v1309, 0.0
      %v1316 = vsel %vm1296, %v1309, 0.0
      %v1317 = vsel %vm1297, %v1309, 0.0
      %v1318 = vsel %vm1298, %v1309, 0.0
      %v1319 = vsel %vm1299, %v1309, 0.0
      %v1320 = vsel %vm1300, %v1309, 0.0
      %v1321 = vsel %vm1301, %v1309, 0.0
      %v1322 = vsel %vm1302, %v1309, 0.0
      %v1323 = vsel %vm1303, %v1309, 0.0
      %v1324 = vsel %vm1304, %v1309, 0.0
      %v1325 = vsel %vm1305, %v1309, 0.0
      %v1326 = vadd.f32 %v1310, 0.0
      %v1327 = vadd.f32 %v1311, 0.0
      %v1328 = vadd.f32 %v1312, 0.0
      %v1329 = vadd.f32 %v1313, 0.0
      %v1330 = vadd.f32 %v1314, 0.0
      %v1331 = vadd.f32 %v1315, 0.0
      %v1332 = vadd.f32 %v1316, 0.0
      %v1333 = vadd.f32 %v1317, 0.0
      %v1334 = vadd.f32 %v1318, 0.0
      %v1335 = vadd.f32 %v1319, 0.0
      %v1336 = vadd.f32 %v1320, 0.0
      %v1337 = vadd.f32 %v1321, 0.0
      %v1338 = vadd.f32 %v1322, 0.0
      %v1339 = vadd.f32 %v1323, 0.0
      %v1340 = vadd.f32 %v1324, 0.0
      %v1341 = vadd.f32 %v1325, 0.0
      %v1342 = vlaneseq
      %v1343 = vshrl.u32 %v1342, 7
      %v1344 = vsub.s32 2, %v1343
      %v1345 = vrot.slane %v580, %v1344
      %vm1346 = vcmp.eq.s32.totalorder %v704, %v1345
      %vm1347 = vcmp.eq.s32.totalorder %v705, %v1345
      %vm1348 = vcmp.eq.s32.totalorder %v706, %v1345
      %vm1349 = vcmp.eq.s32.totalorder %v707, %v1345
      %vm1350 = vcmp.eq.s32.totalorder %v708, %v1345
      %vm1351 = vcmp.eq.s32.totalorder %v709, %v1345
      %vm1352 = vcmp.eq.s32.totalorder %v710, %v1345
      %vm1353 = vcmp.eq.s32.totalorder %v711, %v1345
      %vm1354 = vcmp.eq.s32.totalorder %v712, %v1345
      %vm1355 = vcmp.eq.s32.totalorder %v713, %v1345
      %vm1356 = vcmp.eq.s32.totalorder %v714, %v1345
      %vm1357 = vcmp.eq.s32.totalorder %v715, %v1345
      %vm1358 = vcmp.eq.s32.totalorder %v716, %v1345
      %vm1359 = vcmp.eq.s32.totalorder %v717, %v1345
      %vm1360 = vcmp.eq.s32.totalorder %v718, %v1345
      %vm1361 = vcmp.eq.s32.totalorder %v719, %v1345
      %v1362 = vlaneseq
      %v1363 = vshrl.u32 %v1362, 7
      %v1364 = vsub.s32 2, %v1363
      %v1365 = vrot.slane %v581, %v1364
      %v1366 = vsel %vm1346, %v1365, 0.0
      %v1367 = vsel %vm1347, %v1365, 0.0
      %v1368 = vsel %vm1348, %v1365, 0.0
      %v1369 = vsel %vm1349, %v1365, 0.0
      %v1370 = vsel %vm1350, %v1365, 0.0
      %v1371 = vsel %vm1351, %v1365, 0.0
      %v1372 = vsel %vm1352, %v1365, 0.0
      %v1373 = vsel %vm1353, %v1365, 0.0
      %v1374 = vsel %vm1354, %v1365, 0.0
      %v1375 = vsel %vm1355, %v1365, 0.0
      %v1376 = vsel %vm1356, %v1365, 0.0
      %v1377 = vsel %vm1357, %v1365, 0.0
      %v1378 = vsel %vm1358, %v1365, 0.0
      %v1379 = vsel %vm1359, %v1365, 0.0
      %v1380 = vsel %vm1360, %v1365, 0.0
      %v1381 = vsel %vm1361, %v1365, 0.0
      %v1382 = vadd.f32 %v1326, %v1366
      %v1383 = vadd.f32 %v1327, %v1367
      %v1384 = vadd.f32 %v1328, %v1368
      %v1385 = vadd.f32 %v1329, %v1369
      %v1386 = vadd.f32 %v1330, %v1370
      %v1387 = vadd.f32 %v1331, %v1371
      %v1388 = vadd.f32 %v1332, %v1372
      %v1389 = vadd.f32 %v1333, %v1373
      %v1390 = vadd.f32 %v1334, %v1374
      %v1391 = vadd.f32 %v1335, %v1375
      %v1392 = vadd.f32 %v1336, %v1376
      %v1393 = vadd.f32 %v1337, %v1377
      %v1394 = vadd.f32 %v1338, %v1378
      %v1395 = vadd.f32 %v1339, %v1379
      %v1396 = vadd.f32 %v1340, %v1380
      %v1397 = vadd.f32 %v1341, %v1381
      %v1398 = vlaneseq
      %v1399 = vshrl.u32 %v1398, 7
      %v1400 = vsub.s32 2, %v1399
      %v1401 = vrot.slane %v590, %v1400
      %vm1402 = vcmp.eq.s32.totalorder %v704, %v1401
      %vm1403 = vcmp.eq.s32.totalorder %v705, %v1401
      %vm1404 = vcmp.eq.s32.totalorder %v706, %v1401
      %vm1405 = vcmp.eq.s32.totalorder %v707, %v1401
      %vm1406 = vcmp.eq.s32.totalorder %v708, %v1401
      %vm1407 = vcmp.eq.s32.totalorder %v709, %v1401
      %vm1408 = vcmp.eq.s32.totalorder %v710, %v1401
      %vm1409 = vcmp.eq.s32.totalorder %v711, %v1401
      %vm1410 = vcmp.eq.s32.totalorder %v712, %v1401
      %vm1411 = vcmp.eq.s32.totalorder %v713, %v1401
      %vm1412 = vcmp.eq.s32.totalorder %v714, %v1401
      %vm1413 = vcmp.eq.s32.totalorder %v715, %v1401
      %vm1414 = vcmp.eq.s32.totalorder %v716, %v1401
      %vm1415 = vcmp.eq.s32.totalorder %v717, %v1401
      %vm1416 = vcmp.eq.s32.totalorder %v718, %v1401
      %vm1417 = vcmp.eq.s32.totalorder %v719, %v1401
      %v1418 = vlaneseq
      %v1419 = vshrl.u32 %v1418, 7
      %v1420 = vsub.s32 2, %v1419
      %v1421 = vrot.slane %v591, %v1420
      %v1422 = vsel %vm1402, %v1421, 0.0
      %v1423 = vsel %vm1403, %v1421, 0.0
      %v1424 = vsel %vm1404, %v1421, 0.0
      %v1425 = vsel %vm1405, %v1421, 0.0
      %v1426 = vsel %vm1406, %v1421, 0.0
      %v1427 = vsel %vm1407, %v1421, 0.0
      %v1428 = vsel %vm1408, %v1421, 0.0
      %v1429 = vsel %vm1409, %v1421, 0.0
      %v1430 = vsel %vm1410, %v1421, 0.0
      %v1431 = vsel %vm1411, %v1421, 0.0
      %v1432 = vsel %vm1412, %v1421, 0.0
      %v1433 = vsel %vm1413, %v1421, 0.0
      %v1434 = vsel %vm1414, %v1421, 0.0
      %v1435 = vsel %vm1415, %v1421, 0.0
      %v1436 = vsel %vm1416, %v1421, 0.0
      %v1437 = vsel %vm1417, %v1421, 0.0
      %v1438 = vadd.f32 %v1382, %v1422
      %v1439 = vadd.f32 %v1383, %v1423
      %v1440 = vadd.f32 %v1384, %v1424
      %v1441 = vadd.f32 %v1385, %v1425
      %v1442 = vadd.f32 %v1386, %v1426
      %v1443 = vadd.f32 %v1387, %v1427
      %v1444 = vadd.f32 %v1388, %v1428
      %v1445 = vadd.f32 %v1389, %v1429
      %v1446 = vadd.f32 %v1390, %v1430
      %v1447 = vadd.f32 %v1391, %v1431
      %v1448 = vadd.f32 %v1392, %v1432
      %v1449 = vadd.f32 %v1393, %v1433
      %v1450 = vadd.f32 %v1394, %v1434
      %v1451 = vadd.f32 %v1395, %v1435
      %v1452 = vadd.f32 %v1396, %v1436
      %v1453 = vadd.f32 %v1397, %v1437
      %v1454 = vlaneseq
      %v1455 = vshrl.u32 %v1454, 7
      %v1456 = vsub.s32 2, %v1455
      %v1457 = vrot.slane %v594, %v1456
      %vm1458 = vcmp.eq.s32.totalorder %v704, %v1457
      %vm1459 = vcmp.eq.s32.totalorder %v705, %v1457
      %vm1460 = vcmp.eq.s32.totalorder %v706, %v1457
      %vm1461 = vcmp.eq.s32.totalorder %v707, %v1457
      %vm1462 = vcmp.eq.s32.totalorder %v708, %v1457
      %vm1463 = vcmp.eq.s32.totalorder %v709, %v1457
      %vm1464 = vcmp.eq.s32.totalorder %v710, %v1457
      %vm1465 = vcmp.eq.s32.totalorder %v711, %v1457
      %vm1466 = vcmp.eq.s32.totalorder %v712, %v1457
      %vm1467 = vcmp.eq.s32.totalorder %v713, %v1457
      %vm1468 = vcmp.eq.s32.totalorder %v714, %v1457
      %vm1469 = vcmp.eq.s32.totalorder %v715, %v1457
      %vm1470 = vcmp.eq.s32.totalorder %v716, %v1457
      %vm1471 = vcmp.eq.s32.totalorder %v717, %v1457
      %vm1472 = vcmp.eq.s32.totalorder %v718, %v1457
      %vm1473 = vcmp.eq.s32.totalorder %v719, %v1457
      %v1474 = vlaneseq
      %v1475 = vshrl.u32 %v1474, 7
      %v1476 = vsub.s32 2, %v1475
      %v1477 = vrot.slane %v595, %v1476
      %v1478 = vsel %vm1458, %v1477, 0.0
      %v1479 = vsel %vm1459, %v1477, 0.0
      %v1480 = vsel %vm1460, %v1477, 0.0
      %v1481 = vsel %vm1461, %v1477, 0.0
      %v1482 = vsel %vm1462, %v1477, 0.0
      %v1483 = vsel %vm1463, %v1477, 0.0
      %v1484 = vsel %vm1464, %v1477, 0.0
      %v1485 = vsel %vm1465, %v1477, 0.0
      %v1486 = vsel %vm1466, %v1477, 0.0
      %v1487 = vsel %vm1467, %v1477, 0.0
      %v1488 = vsel %vm1468, %v1477, 0.0
      %v1489 = vsel %vm1469, %v1477, 0.0
      %v1490 = vsel %vm1470, %v1477, 0.0
      %v1491 = vsel %vm1471, %v1477, 0.0
      %v1492 = vsel %vm1472, %v1477, 0.0
      %v1493 = vsel %vm1473, %v1477, 0.0
      %v1494 = vadd.f32 %v1438, %v1478
      %v1495 = vadd.f32 %v1439, %v1479
      %v1496 = vadd.f32 %v1440, %v1480
      %v1497 = vadd.f32 %v1441, %v1481
      %v1498 = vadd.f32 %v1442, %v1482
      %v1499 = vadd.f32 %v1443, %v1483
      %v1500 = vadd.f32 %v1444, %v1484
      %v1501 = vadd.f32 %v1445, %v1485
      %v1502 = vadd.f32 %v1446, %v1486
      %v1503 = vadd.f32 %v1447, %v1487
      %v1504 = vadd.f32 %v1448, %v1488
      %v1505 = vadd.f32 %v1449, %v1489
      %v1506 = vadd.f32 %v1450, %v1490
      %v1507 = vadd.f32 %v1451, %v1491
      %v1508 = vadd.f32 %v1452, %v1492
      %v1509 = vadd.f32 %v1453, %v1493
      %v1510 = vpack.c.bf16 %v1495, %v1494
      %v1511 = vpack.c.bf16 %v1497, %v1496
      %v1512 = vpack.c.bf16 %v1499, %v1498
      %v1513 = vpack.c.bf16 %v1501, %v1500
      %v1514 = vpack.c.bf16 %v1503, %v1502
      %v1515 = vpack.c.bf16 %v1505, %v1504
      %v1516 = vpack.c.bf16 %v1507, %v1506
      %v1517 = vpack.c.bf16 %v1509, %v1508
      %1518 = vmatprep.subr.bf16.mxu0 0
      %1519 = vmatpush1.bf16.msra.mxu0 %v1510
      %1520 = vmatprep.subr.bf16.mxu0 0
      %1521 = vmatpush1.bf16.msra.mxu0 %v1511
      %1522 = vmatprep.subr.bf16.mxu0 0
      %1523 = vmatpush1.bf16.msra.mxu0 %v1512
      %1524 = vmatprep.subr.bf16.mxu0 0
      %1525 = vmatpush1.bf16.msra.mxu0 %v1513
      %1526 = vmatprep.subr.bf16.mxu0 0
      %1527 = vmatpush1.bf16.msra.mxu0 %v1514
      %1528 = vmatprep.subr.bf16.mxu0 0
      %1529 = vmatpush1.bf16.msra.mxu0 %v1515
      %1530 = vmatprep.subr.bf16.mxu0 0
      %1531 = vmatpush1.bf16.msra.mxu0 %v1516
      %1532 = vmatprep.subr.bf16.mxu0 0
      %1533 = vmatpush1.bf16.msra.mxu0 %v1517
      %1534 = vmatprep.subr.bf16.mxu0 0
      %1535 = vmatpush1.bf16.msra.mxu0 0
      %1536 = vmatprep.subr.bf16.mxu0 0
      %1537 = vmatpush1.bf16.msra.mxu0 0
      %1538 = vmatprep.subr.bf16.mxu0 0
      %1539 = vmatpush1.bf16.msra.mxu0 0
      %1540 = vmatprep.subr.bf16.mxu0 0
      %1541 = vmatpush1.bf16.msra.mxu0 0
      %1542 = vmatprep.subr.bf16.mxu0 0
      %1543 = vmatpush1.bf16.msra.mxu0 0
      %1544 = vmatprep.subr.bf16.mxu0 0
      %1545 = vmatpush1.bf16.msra.mxu0 0
      %1546 = vmatprep.subr.bf16.mxu0 0
      %1547 = vmatpush1.bf16.msra.mxu0 0
      %1548 = vmatprep.subr.bf16.mxu0 0
      %1549 = vmatpush1.bf16.msra.mxu0 0
      %1550 = vmatprep.mubr.bf16.mxu0 0
      %1551 = vmatmul.mubr.bf16.gmra.mrb[0].mxu0 %v702
      %v1552 = vpop.f32.mrb[0].mxu0
      %v1553 = vadd.f32 0.0, %v1552
      %v1554 = vpop.f32.mrb[0].mxu0
      %v1555 = vpop.f32.mrb[0].mxu0
      %v1556 = vpop.f32.mrb[0].mxu0
      %1557 = vdwg.mxu0
      %v1558 = vadd.f32 %v647, %v1553
      %v1559 = vmax.f32 %v1558, 0.0
      %v1560 = vmul.f32 %v1559, %v996
      %v1561 = vrot.slane %v1560, 4
      %v1562 = vadd.f32 %v1560, %v1561
      %v1563 = vrot.slane %v1562, 2
      %v1564 = vadd.f32 %v1562, %v1563
      %v1565 = vrot.slane %v1564, 1
      %v1566 = vadd.f32 %v1564, %v1565
      %v1567 = vlaneseq
      %v1568 = vshrl.u32 %v1567, 7
      %v1569 = vsub.s32 3, %v1568
      %v1570 = vrot.slane %v570, %v1569
      %vm1571 = vcmp.eq.s32.totalorder %v704, %v1570
      %vm1572 = vcmp.eq.s32.totalorder %v705, %v1570
      %vm1573 = vcmp.eq.s32.totalorder %v706, %v1570
      %vm1574 = vcmp.eq.s32.totalorder %v707, %v1570
      %vm1575 = vcmp.eq.s32.totalorder %v708, %v1570
      %vm1576 = vcmp.eq.s32.totalorder %v709, %v1570
      %vm1577 = vcmp.eq.s32.totalorder %v710, %v1570
      %vm1578 = vcmp.eq.s32.totalorder %v711, %v1570
      %vm1579 = vcmp.eq.s32.totalorder %v712, %v1570
      %vm1580 = vcmp.eq.s32.totalorder %v713, %v1570
      %vm1581 = vcmp.eq.s32.totalorder %v714, %v1570
      %vm1582 = vcmp.eq.s32.totalorder %v715, %v1570
      %vm1583 = vcmp.eq.s32.totalorder %v716, %v1570
      %vm1584 = vcmp.eq.s32.totalorder %v717, %v1570
      %vm1585 = vcmp.eq.s32.totalorder %v718, %v1570
      %vm1586 = vcmp.eq.s32.totalorder %v719, %v1570
      %v1587 = vlaneseq
      %v1588 = vshrl.u32 %v1587, 7
      %v1589 = vsub.s32 3, %v1588
      %v1590 = vrot.slane %v571, %v1589
      %v1591 = vsel %vm1571, %v1590, 0.0
      %v1592 = vsel %vm1572, %v1590, 0.0
      %v1593 = vsel %vm1573, %v1590, 0.0
      %v1594 = vsel %vm1574, %v1590, 0.0
      %v1595 = vsel %vm1575, %v1590, 0.0
      %v1596 = vsel %vm1576, %v1590, 0.0
      %v1597 = vsel %vm1577, %v1590, 0.0
      %v1598 = vsel %vm1578, %v1590, 0.0
      %v1599 = vsel %vm1579, %v1590, 0.0
      %v1600 = vsel %vm1580, %v1590, 0.0
      %v1601 = vsel %vm1581, %v1590, 0.0
      %v1602 = vsel %vm1582, %v1590, 0.0
      %v1603 = vsel %vm1583, %v1590, 0.0
      %v1604 = vsel %vm1584, %v1590, 0.0
      %v1605 = vsel %vm1585, %v1590, 0.0
      %v1606 = vsel %vm1586, %v1590, 0.0
      %v1607 = vadd.f32 %v1591, 0.0
      %v1608 = vadd.f32 %v1592, 0.0
      %v1609 = vadd.f32 %v1593, 0.0
      %v1610 = vadd.f32 %v1594, 0.0
      %v1611 = vadd.f32 %v1595, 0.0
      %v1612 = vadd.f32 %v1596, 0.0
      %v1613 = vadd.f32 %v1597, 0.0
      %v1614 = vadd.f32 %v1598, 0.0
      %v1615 = vadd.f32 %v1599, 0.0
      %v1616 = vadd.f32 %v1600, 0.0
      %v1617 = vadd.f32 %v1601, 0.0
      %v1618 = vadd.f32 %v1602, 0.0
      %v1619 = vadd.f32 %v1603, 0.0
      %v1620 = vadd.f32 %v1604, 0.0
      %v1621 = vadd.f32 %v1605, 0.0
      %v1622 = vadd.f32 %v1606, 0.0
      %v1623 = vlaneseq
      %v1624 = vshrl.u32 %v1623, 7
      %v1625 = vsub.s32 3, %v1624
      %v1626 = vrot.slane %v580, %v1625
      %vm1627 = vcmp.eq.s32.totalorder %v704, %v1626
      %vm1628 = vcmp.eq.s32.totalorder %v705, %v1626
      %vm1629 = vcmp.eq.s32.totalorder %v706, %v1626
      %vm1630 = vcmp.eq.s32.totalorder %v707, %v1626
      %vm1631 = vcmp.eq.s32.totalorder %v708, %v1626
      %vm1632 = vcmp.eq.s32.totalorder %v709, %v1626
      %vm1633 = vcmp.eq.s32.totalorder %v710, %v1626
      %vm1634 = vcmp.eq.s32.totalorder %v711, %v1626
      %vm1635 = vcmp.eq.s32.totalorder %v712, %v1626
      %vm1636 = vcmp.eq.s32.totalorder %v713, %v1626
      %vm1637 = vcmp.eq.s32.totalorder %v714, %v1626
      %vm1638 = vcmp.eq.s32.totalorder %v715, %v1626
      %vm1639 = vcmp.eq.s32.totalorder %v716, %v1626
      %vm1640 = vcmp.eq.s32.totalorder %v717, %v1626
      %vm1641 = vcmp.eq.s32.totalorder %v718, %v1626
      %vm1642 = vcmp.eq.s32.totalorder %v719, %v1626
      %v1643 = vlaneseq
      %v1644 = vshrl.u32 %v1643, 7
      %v1645 = vsub.s32 3, %v1644
      %v1646 = vrot.slane %v581, %v1645
      %v1647 = vsel %vm1627, %v1646, 0.0
      %v1648 = vsel %vm1628, %v1646, 0.0
      %v1649 = vsel %vm1629, %v1646, 0.0
      %v1650 = vsel %vm1630, %v1646, 0.0
      %v1651 = vsel %vm1631, %v1646, 0.0
      %v1652 = vsel %vm1632, %v1646, 0.0
      %v1653 = vsel %vm1633, %v1646, 0.0
      %v1654 = vsel %vm1634, %v1646, 0.0
      %v1655 = vsel %vm1635, %v1646, 0.0
      %v1656 = vsel %vm1636, %v1646, 0.0
      %v1657 = vsel %vm1637, %v1646, 0.0
      %v1658 = vsel %vm1638, %v1646, 0.0
      %v1659 = vsel %vm1639, %v1646, 0.0
      %v1660 = vsel %vm1640, %v1646, 0.0
      %v1661 = vsel %vm1641, %v1646, 0.0
      %v1662 = vsel %vm1642, %v1646, 0.0
      %v1663 = vadd.f32 %v1607, %v1647
      %v1664 = vadd.f32 %v1608, %v1648
      %v1665 = vadd.f32 %v1609, %v1649
      %v1666 = vadd.f32 %v1610, %v1650
      %v1667 = vadd.f32 %v1611, %v1651
      %v1668 = vadd.f32 %v1612, %v1652
      %v1669 = vadd.f32 %v1613, %v1653
      %v1670 = vadd.f32 %v1614, %v1654
      %v1671 = vadd.f32 %v1615, %v1655
      %v1672 = vadd.f32 %v1616, %v1656
      %v1673 = vadd.f32 %v1617, %v1657
      %v1674 = vadd.f32 %v1618, %v1658
      %v1675 = vadd.f32 %v1619, %v1659
      %v1676 = vadd.f32 %v1620, %v1660
      %v1677 = vadd.f32 %v1621, %v1661
      %v1678 = vadd.f32 %v1622, %v1662
      %v1679 = vlaneseq
      %v1680 = vshrl.u32 %v1679, 7
      %v1681 = vsub.s32 3, %v1680
      %v1682 = vrot.slane %v590, %v1681
      %vm1683 = vcmp.eq.s32.totalorder %v704, %v1682
      %vm1684 = vcmp.eq.s32.totalorder %v705, %v1682
      %vm1685 = vcmp.eq.s32.totalorder %v706, %v1682
      %vm1686 = vcmp.eq.s32.totalorder %v707, %v1682
      %vm1687 = vcmp.eq.s32.totalorder %v708, %v1682
      %vm1688 = vcmp.eq.s32.totalorder %v709, %v1682
      %vm1689 = vcmp.eq.s32.totalorder %v710, %v1682
      %vm1690 = vcmp.eq.s32.totalorder %v711, %v1682
      %vm1691 = vcmp.eq.s32.totalorder %v712, %v1682
      %vm1692 = vcmp.eq.s32.totalorder %v713, %v1682
      %vm1693 = vcmp.eq.s32.totalorder %v714, %v1682
      %vm1694 = vcmp.eq.s32.totalorder %v715, %v1682
      %vm1695 = vcmp.eq.s32.totalorder %v716, %v1682
      %vm1696 = vcmp.eq.s32.totalorder %v717, %v1682
      %vm1697 = vcmp.eq.s32.totalorder %v718, %v1682
      %vm1698 = vcmp.eq.s32.totalorder %v719, %v1682
      %v1699 = vlaneseq
      %v1700 = vshrl.u32 %v1699, 7
      %v1701 = vsub.s32 3, %v1700
      %v1702 = vrot.slane %v591, %v1701
      %v1703 = vsel %vm1683, %v1702, 0.0
      %v1704 = vsel %vm1684, %v1702, 0.0
      %v1705 = vsel %vm1685, %v1702, 0.0
      %v1706 = vsel %vm1686, %v1702, 0.0
      %v1707 = vsel %vm1687, %v1702, 0.0
      %v1708 = vsel %vm1688, %v1702, 0.0
      %v1709 = vsel %vm1689, %v1702, 0.0
      %v1710 = vsel %vm1690, %v1702, 0.0
      %v1711 = vsel %vm1691, %v1702, 0.0
      %v1712 = vsel %vm1692, %v1702, 0.0
      %v1713 = vsel %vm1693, %v1702, 0.0
      %v1714 = vsel %vm1694, %v1702, 0.0
      %v1715 = vsel %vm1695, %v1702, 0.0
      %v1716 = vsel %vm1696, %v1702, 0.0
      %v1717 = vsel %vm1697, %v1702, 0.0
      %v1718 = vsel %vm1698, %v1702, 0.0
      %v1719 = vadd.f32 %v1663, %v1703
      %v1720 = vadd.f32 %v1664, %v1704
      %v1721 = vadd.f32 %v1665, %v1705
      %v1722 = vadd.f32 %v1666, %v1706
      %v1723 = vadd.f32 %v1667, %v1707
      %v1724 = vadd.f32 %v1668, %v1708
      %v1725 = vadd.f32 %v1669, %v1709
      %v1726 = vadd.f32 %v1670, %v1710
      %v1727 = vadd.f32 %v1671, %v1711
      %v1728 = vadd.f32 %v1672, %v1712
      %v1729 = vadd.f32 %v1673, %v1713
      %v1730 = vadd.f32 %v1674, %v1714
      %v1731 = vadd.f32 %v1675, %v1715
      %v1732 = vadd.f32 %v1676, %v1716
      %v1733 = vadd.f32 %v1677, %v1717
      %v1734 = vadd.f32 %v1678, %v1718
      %v1735 = vlaneseq
      %v1736 = vshrl.u32 %v1735, 7
      %v1737 = vsub.s32 3, %v1736
      %v1738 = vrot.slane %v594, %v1737
      %vm1739 = vcmp.eq.s32.totalorder %v704, %v1738
      %vm1740 = vcmp.eq.s32.totalorder %v705, %v1738
      %vm1741 = vcmp.eq.s32.totalorder %v706, %v1738
      %vm1742 = vcmp.eq.s32.totalorder %v707, %v1738
      %vm1743 = vcmp.eq.s32.totalorder %v708, %v1738
      %vm1744 = vcmp.eq.s32.totalorder %v709, %v1738
      %vm1745 = vcmp.eq.s32.totalorder %v710, %v1738
      %vm1746 = vcmp.eq.s32.totalorder %v711, %v1738
      %vm1747 = vcmp.eq.s32.totalorder %v712, %v1738
      %vm1748 = vcmp.eq.s32.totalorder %v713, %v1738
      %vm1749 = vcmp.eq.s32.totalorder %v714, %v1738
      %vm1750 = vcmp.eq.s32.totalorder %v715, %v1738
      %vm1751 = vcmp.eq.s32.totalorder %v716, %v1738
      %vm1752 = vcmp.eq.s32.totalorder %v717, %v1738
      %vm1753 = vcmp.eq.s32.totalorder %v718, %v1738
      %vm1754 = vcmp.eq.s32.totalorder %v719, %v1738
      %v1755 = vlaneseq
      %v1756 = vshrl.u32 %v1755, 7
      %v1757 = vsub.s32 3, %v1756
      %v1758 = vrot.slane %v595, %v1757
      %v1759 = vsel %vm1739, %v1758, 0.0
      %v1760 = vsel %vm1740, %v1758, 0.0
      %v1761 = vsel %vm1741, %v1758, 0.0
      %v1762 = vsel %vm1742, %v1758, 0.0
      %v1763 = vsel %vm1743, %v1758, 0.0
      %v1764 = vsel %vm1744, %v1758, 0.0
      %v1765 = vsel %vm1745, %v1758, 0.0
      %v1766 = vsel %vm1746, %v1758, 0.0
      %v1767 = vsel %vm1747, %v1758, 0.0
      %v1768 = vsel %vm1748, %v1758, 0.0
      %v1769 = vsel %vm1749, %v1758, 0.0
      %v1770 = vsel %vm1750, %v1758, 0.0
      %v1771 = vsel %vm1751, %v1758, 0.0
      %v1772 = vsel %vm1752, %v1758, 0.0
      %v1773 = vsel %vm1753, %v1758, 0.0
      %v1774 = vsel %vm1754, %v1758, 0.0
      %v1775 = vadd.f32 %v1719, %v1759
      %v1776 = vadd.f32 %v1720, %v1760
      %v1777 = vadd.f32 %v1721, %v1761
      %v1778 = vadd.f32 %v1722, %v1762
      %v1779 = vadd.f32 %v1723, %v1763
      %v1780 = vadd.f32 %v1724, %v1764
      %v1781 = vadd.f32 %v1725, %v1765
      %v1782 = vadd.f32 %v1726, %v1766
      %v1783 = vadd.f32 %v1727, %v1767
      %v1784 = vadd.f32 %v1728, %v1768
      %v1785 = vadd.f32 %v1729, %v1769
      %v1786 = vadd.f32 %v1730, %v1770
      %v1787 = vadd.f32 %v1731, %v1771
      %v1788 = vadd.f32 %v1732, %v1772
      %v1789 = vadd.f32 %v1733, %v1773
      %v1790 = vadd.f32 %v1734, %v1774
      %v1791 = vpack.c.bf16 %v1776, %v1775
      %v1792 = vpack.c.bf16 %v1778, %v1777
      %v1793 = vpack.c.bf16 %v1780, %v1779
      %v1794 = vpack.c.bf16 %v1782, %v1781
      %v1795 = vpack.c.bf16 %v1784, %v1783
      %v1796 = vpack.c.bf16 %v1786, %v1785
      %v1797 = vpack.c.bf16 %v1788, %v1787
      %v1798 = vpack.c.bf16 %v1790, %v1789
      %1799 = vmatprep.subr.bf16.mxu0 0
      %1800 = vmatpush1.bf16.msra.mxu0 %v1791
      %1801 = vmatprep.subr.bf16.mxu0 0
      %1802 = vmatpush1.bf16.msra.mxu0 %v1792
      %1803 = vmatprep.subr.bf16.mxu0 0
      %1804 = vmatpush1.bf16.msra.mxu0 %v1793
      %1805 = vmatprep.subr.bf16.mxu0 0
      %1806 = vmatpush1.bf16.msra.mxu0 %v1794
      %1807 = vmatprep.subr.bf16.mxu0 0
      %1808 = vmatpush1.bf16.msra.mxu0 %v1795
      %1809 = vmatprep.subr.bf16.mxu0 0
      %1810 = vmatpush1.bf16.msra.mxu0 %v1796
      %1811 = vmatprep.subr.bf16.mxu0 0
      %1812 = vmatpush1.bf16.msra.mxu0 %v1797
      %1813 = vmatprep.subr.bf16.mxu0 0
      %1814 = vmatpush1.bf16.msra.mxu0 %v1798
      %1815 = vmatprep.subr.bf16.mxu0 0
      %1816 = vmatpush1.bf16.msra.mxu0 0
      %1817 = vmatprep.subr.bf16.mxu0 0
      %1818 = vmatpush1.bf16.msra.mxu0 0
      %1819 = vmatprep.subr.bf16.mxu0 0
      %1820 = vmatpush1.bf16.msra.mxu0 0
      %1821 = vmatprep.subr.bf16.mxu0 0
      %1822 = vmatpush1.bf16.msra.mxu0 0
      %1823 = vmatprep.subr.bf16.mxu0 0
      %1824 = vmatpush1.bf16.msra.mxu0 0
      %1825 = vmatprep.subr.bf16.mxu0 0
      %1826 = vmatpush1.bf16.msra.mxu0 0
      %1827 = vmatprep.subr.bf16.mxu0 0
      %1828 = vmatpush1.bf16.msra.mxu0 0
      %1829 = vmatprep.subr.bf16.mxu0 0
      %1830 = vmatpush1.bf16.msra.mxu0 0
      %1831 = vmatprep.mubr.bf16.mxu0 0
      %1832 = vmatmul.mubr.bf16.gmra.mrb[0].mxu0 %v702
      %v1833 = vpop.f32.mrb[0].mxu0
      %v1834 = vadd.f32 0.0, %v1833
      %v1835 = vpop.f32.mrb[0].mxu0
      %v1836 = vpop.f32.mrb[0].mxu0
      %v1837 = vpop.f32.mrb[0].mxu0
      %1838 = vdwg.mxu0
      %v1839 = vadd.f32 %v647, %v1834
      %v1840 = vmax.f32 %v1839, 0.0
      %v1841 = vmul.f32 %v1840, %v996
      %v1842 = vrot.slane %v1841, 4
      %v1843 = vadd.f32 %v1841, %v1842
      %v1844 = vrot.slane %v1843, 2
      %v1845 = vadd.f32 %v1843, %v1844
      %v1846 = vrot.slane %v1845, 1
      %v1847 = vadd.f32 %v1845, %v1846
      %v1848 = vlaneseq
      %v1849 = vshrl.u32 %v1848, 7
      %v1850 = vsub.s32 4, %v1849
      %v1851 = vrot.slane %v570, %v1850
      %vm1852 = vcmp.eq.s32.totalorder %v704, %v1851
      %vm1853 = vcmp.eq.s32.totalorder %v705, %v1851
      %vm1854 = vcmp.eq.s32.totalorder %v706, %v1851
      %vm1855 = vcmp.eq.s32.totalorder %v707, %v1851
      %vm1856 = vcmp.eq.s32.totalorder %v708, %v1851
      %vm1857 = vcmp.eq.s32.totalorder %v709, %v1851
      %vm1858 = vcmp.eq.s32.totalorder %v710, %v1851
      %vm1859 = vcmp.eq.s32.totalorder %v711, %v1851
      %vm1860 = vcmp.eq.s32.totalorder %v712, %v1851
      %vm1861 = vcmp.eq.s32.totalorder %v713, %v1851
      %vm1862 = vcmp.eq.s32.totalorder %v714, %v1851
      %vm1863 = vcmp.eq.s32.totalorder %v715, %v1851
      %vm1864 = vcmp.eq.s32.totalorder %v716, %v1851
      %vm1865 = vcmp.eq.s32.totalorder %v717, %v1851
      %vm1866 = vcmp.eq.s32.totalorder %v718, %v1851
      %vm1867 = vcmp.eq.s32.totalorder %v719, %v1851
      %v1868 = vlaneseq
      %v1869 = vshrl.u32 %v1868, 7
      %v1870 = vsub.s32 4, %v1869
      %v1871 = vrot.slane %v571, %v1870
      %v1872 = vsel %vm1852, %v1871, 0.0
      %v1873 = vsel %vm1853, %v1871, 0.0
      %v1874 = vsel %vm1854, %v1871, 0.0
      %v1875 = vsel %vm1855, %v1871, 0.0
      %v1876 = vsel %vm1856, %v1871, 0.0
      %v1877 = vsel %vm1857, %v1871, 0.0
      %v1878 = vsel %vm1858, %v1871, 0.0
      %v1879 = vsel %vm1859, %v1871, 0.0
      %v1880 = vsel %vm1860, %v1871, 0.0
      %v1881 = vsel %vm1861, %v1871, 0.0
      %v1882 = vsel %vm1862, %v1871, 0.0
      %v1883 = vsel %vm1863, %v1871, 0.0
      %v1884 = vsel %vm1864, %v1871, 0.0
      %v1885 = vsel %vm1865, %v1871, 0.0
      %v1886 = vsel %vm1866, %v1871, 0.0
      %v1887 = vsel %vm1867, %v1871, 0.0
      %v1888 = vadd.f32 %v1872, 0.0
      %v1889 = vadd.f32 %v1873, 0.0
      %v1890 = vadd.f32 %v1874, 0.0
      %v1891 = vadd.f32 %v1875, 0.0
      %v1892 = vadd.f32 %v1876, 0.0
      %v1893 = vadd.f32 %v1877, 0.0
      %v1894 = vadd.f32 %v1878, 0.0
      %v1895 = vadd.f32 %v1879, 0.0
      %v1896 = vadd.f32 %v1880, 0.0
      %v1897 = vadd.f32 %v1881, 0.0
      %v1898 = vadd.f32 %v1882, 0.0
      %v1899 = vadd.f32 %v1883, 0.0
      %v1900 = vadd.f32 %v1884, 0.0
      %v1901 = vadd.f32 %v1885, 0.0
      %v1902 = vadd.f32 %v1886, 0.0
      %v1903 = vadd.f32 %v1887, 0.0
      %v1904 = vlaneseq
      %v1905 = vshrl.u32 %v1904, 7
      %v1906 = vsub.s32 4, %v1905
      %v1907 = vrot.slane %v580, %v1906
      %vm1908 = vcmp.eq.s32.totalorder %v704, %v1907
      %vm1909 = vcmp.eq.s32.totalorder %v705, %v1907
      %vm1910 = vcmp.eq.s32.totalorder %v706, %v1907
      %vm1911 = vcmp.eq.s32.totalorder %v707, %v1907
      %vm1912 = vcmp.eq.s32.totalorder %v708, %v1907
      %vm1913 = vcmp.eq.s32.totalorder %v709, %v1907
      %vm1914 = vcmp.eq.s32.totalorder %v710, %v1907
      %vm1915 = vcmp.eq.s32.totalorder %v711, %v1907
      %vm1916 = vcmp.eq.s32.totalorder %v712, %v1907
      %vm1917 = vcmp.eq.s32.totalorder %v713, %v1907
      %vm1918 = vcmp.eq.s32.totalorder %v714, %v1907
      %vm1919 = vcmp.eq.s32.totalorder %v715, %v1907
      %vm1920 = vcmp.eq.s32.totalorder %v716, %v1907
      %vm1921 = vcmp.eq.s32.totalorder %v717, %v1907
      %vm1922 = vcmp.eq.s32.totalorder %v718, %v1907
      %vm1923 = vcmp.eq.s32.totalorder %v719, %v1907
      %v1924 = vlaneseq
      %v1925 = vshrl.u32 %v1924, 7
      %v1926 = vsub.s32 4, %v1925
      %v1927 = vrot.slane %v581, %v1926
      %v1928 = vsel %vm1908, %v1927, 0.0
      %v1929 = vsel %vm1909, %v1927, 0.0
      %v1930 = vsel %vm1910, %v1927, 0.0
      %v1931 = vsel %vm1911, %v1927, 0.0
      %v1932 = vsel %vm1912, %v1927, 0.0
      %v1933 = vsel %vm1913, %v1927, 0.0
      %v1934 = vsel %vm1914, %v1927, 0.0
      %v1935 = vsel %vm1915, %v1927, 0.0
      %v1936 = vsel %vm1916, %v1927, 0.0
      %v1937 = vsel %vm1917, %v1927, 0.0
      %v1938 = vsel %vm1918, %v1927, 0.0
      %v1939 = vsel %vm1919, %v1927, 0.0
      %v1940 = vsel %vm1920, %v1927, 0.0
      %v1941 = vsel %vm1921, %v1927, 0.0
      %v1942 = vsel %vm1922, %v1927, 0.0
      %v1943 = vsel %vm1923, %v1927, 0.0
      %v1944 = vadd.f32 %v1888, %v1928
      %v1945 = vadd.f32 %v1889, %v1929
      %v1946 = vadd.f32 %v1890, %v1930
      %v1947 = vadd.f32 %v1891, %v1931
      %v1948 = vadd.f32 %v1892, %v1932
      %v1949 = vadd.f32 %v1893, %v1933
      %v1950 = vadd.f32 %v1894, %v1934
      %v1951 = vadd.f32 %v1895, %v1935
      %v1952 = vadd.f32 %v1896, %v1936
      %v1953 = vadd.f32 %v1897, %v1937
      %v1954 = vadd.f32 %v1898, %v1938
      %v1955 = vadd.f32 %v1899, %v1939
      %v1956 = vadd.f32 %v1900, %v1940
      %v1957 = vadd.f32 %v1901, %v1941
      %v1958 = vadd.f32 %v1902, %v1942
      %v1959 = vadd.f32 %v1903, %v1943
      %v1960 = vlaneseq
      %v1961 = vshrl.u32 %v1960, 7
      %v1962 = vsub.s32 4, %v1961
      %v1963 = vrot.slane %v590, %v1962
      %vm1964 = vcmp.eq.s32.totalorder %v704, %v1963
      %vm1965 = vcmp.eq.s32.totalorder %v705, %v1963
      %vm1966 = vcmp.eq.s32.totalorder %v706, %v1963
      %vm1967 = vcmp.eq.s32.totalorder %v707, %v1963
      %vm1968 = vcmp.eq.s32.totalorder %v708, %v1963
      %vm1969 = vcmp.eq.s32.totalorder %v709, %v1963
      %vm1970 = vcmp.eq.s32.totalorder %v710, %v1963
      %vm1971 = vcmp.eq.s32.totalorder %v711, %v1963
      %vm1972 = vcmp.eq.s32.totalorder %v712, %v1963
      %vm1973 = vcmp.eq.s32.totalorder %v713, %v1963
      %vm1974 = vcmp.eq.s32.totalorder %v714, %v1963
      %vm1975 = vcmp.eq.s32.totalorder %v715, %v1963
      %vm1976 = vcmp.eq.s32.totalorder %v716, %v1963
      %vm1977 = vcmp.eq.s32.totalorder %v717, %v1963
      %vm1978 = vcmp.eq.s32.totalorder %v718, %v1963
      %vm1979 = vcmp.eq.s32.totalorder %v719, %v1963
      %v1980 = vlaneseq
      %v1981 = vshrl.u32 %v1980, 7
      %v1982 = vsub.s32 4, %v1981
      %v1983 = vrot.slane %v591, %v1982
      %v1984 = vsel %vm1964, %v1983, 0.0
      %v1985 = vsel %vm1965, %v1983, 0.0
      %v1986 = vsel %vm1966, %v1983, 0.0
      %v1987 = vsel %vm1967, %v1983, 0.0
      %v1988 = vsel %vm1968, %v1983, 0.0
      %v1989 = vsel %vm1969, %v1983, 0.0
      %v1990 = vsel %vm1970, %v1983, 0.0
      %v1991 = vsel %vm1971, %v1983, 0.0
      %v1992 = vsel %vm1972, %v1983, 0.0
      %v1993 = vsel %vm1973, %v1983, 0.0
      %v1994 = vsel %vm1974, %v1983, 0.0
      %v1995 = vsel %vm1975, %v1983, 0.0
      %v1996 = vsel %vm1976, %v1983, 0.0
      %v1997 = vsel %vm1977, %v1983, 0.0
      %v1998 = vsel %vm1978, %v1983, 0.0
      %v1999 = vsel %vm1979, %v1983, 0.0
      %v2000 = vadd.f32 %v1944, %v1984
      %v2001 = vadd.f32 %v1945, %v1985
      %v2002 = vadd.f32 %v1946, %v1986
      %v2003 = vadd.f32 %v1947, %v1987
      %v2004 = vadd.f32 %v1948, %v1988
      %v2005 = vadd.f32 %v1949, %v1989
      %v2006 = vadd.f32 %v1950, %v1990
      %v2007 = vadd.f32 %v1951, %v1991
      %v2008 = vadd.f32 %v1952, %v1992
      %v2009 = vadd.f32 %v1953, %v1993
      %v2010 = vadd.f32 %v1954, %v1994
      %v2011 = vadd.f32 %v1955, %v1995
      %v2012 = vadd.f32 %v1956, %v1996
      %v2013 = vadd.f32 %v1957, %v1997
      %v2014 = vadd.f32 %v1958, %v1998
      %v2015 = vadd.f32 %v1959, %v1999
      %v2016 = vlaneseq
      %v2017 = vshrl.u32 %v2016, 7
      %v2018 = vsub.s32 4, %v2017
      %v2019 = vrot.slane %v594, %v2018
      %vm2020 = vcmp.eq.s32.totalorder %v704, %v2019
      %vm2021 = vcmp.eq.s32.totalorder %v705, %v2019
      %vm2022 = vcmp.eq.s32.totalorder %v706, %v2019
      %vm2023 = vcmp.eq.s32.totalorder %v707, %v2019
      %vm2024 = vcmp.eq.s32.totalorder %v708, %v2019
      %vm2025 = vcmp.eq.s32.totalorder %v709, %v2019
      %vm2026 = vcmp.eq.s32.totalorder %v710, %v2019
      %vm2027 = vcmp.eq.s32.totalorder %v711, %v2019
      %vm2028 = vcmp.eq.s32.totalorder %v712, %v2019
      %vm2029 = vcmp.eq.s32.totalorder %v713, %v2019
      %vm2030 = vcmp.eq.s32.totalorder %v714, %v2019
      %vm2031 = vcmp.eq.s32.totalorder %v715, %v2019
      %vm2032 = vcmp.eq.s32.totalorder %v716, %v2019
      %vm2033 = vcmp.eq.s32.totalorder %v717, %v2019
      %vm2034 = vcmp.eq.s32.totalorder %v718, %v2019
      %vm2035 = vcmp.eq.s32.totalorder %v719, %v2019
      %v2036 = vlaneseq
      %v2037 = vshrl.u32 %v2036, 7
      %v2038 = vsub.s32 4, %v2037
      %v2039 = vrot.slane %v595, %v2038
      %v2040 = vsel %vm2020, %v2039, 0.0
      %v2041 = vsel %vm2021, %v2039, 0.0
      %v2042 = vsel %vm2022, %v2039, 0.0
      %v2043 = vsel %vm2023, %v2039, 0.0
      %v2044 = vsel %vm2024, %v2039, 0.0
      %v2045 = vsel %vm2025, %v2039, 0.0
      %v2046 = vsel %vm2026, %v2039, 0.0
      %v2047 = vsel %vm2027, %v2039, 0.0
      %v2048 = vsel %vm2028, %v2039, 0.0
      %v2049 = vsel %vm2029, %v2039, 0.0
      %v2050 = vsel %vm2030, %v2039, 0.0
      %v2051 = vsel %vm2031, %v2039, 0.0
      %v2052 = vsel %vm2032, %v2039, 0.0
      %v2053 = vsel %vm2033, %v2039, 0.0
      %v2054 = vsel %vm2034, %v2039, 0.0
      %v2055 = vsel %vm2035, %v2039, 0.0
      %v2056 = vadd.f32 %v2000, %v2040
      %v2057 = vadd.f32 %v2001, %v2041
      %v2058 = vadd.f32 %v2002, %v2042
      %v2059 = vadd.f32 %v2003, %v2043
      %v2060 = vadd.f32 %v2004, %v2044
      %v2061 = vadd.f32 %v2005, %v2045
      %v2062 = vadd.f32 %v2006, %v2046
      %v2063 = vadd.f32 %v2007, %v2047
      %v2064 = vadd.f32 %v2008, %v2048
      %v2065 = vadd.f32 %v2009, %v2049
      %v2066 = vadd.f32 %v2010, %v2050
      %v2067 = vadd.f32 %v2011, %v2051
      %v2068 = vadd.f32 %v2012, %v2052
      %v2069 = vadd.f32 %v2013, %v2053
      %v2070 = vadd.f32 %v2014, %v2054
      %v2071 = vadd.f32 %v2015, %v2055
      %v2072 = vpack.c.bf16 %v2057, %v2056
      %v2073 = vpack.c.bf16 %v2059, %v2058
      %v2074 = vpack.c.bf16 %v2061, %v2060
      %v2075 = vpack.c.bf16 %v2063, %v2062
      %v2076 = vpack.c.bf16 %v2065, %v2064
      %v2077 = vpack.c.bf16 %v2067, %v2066
      %v2078 = vpack.c.bf16 %v2069, %v2068
      %v2079 = vpack.c.bf16 %v2071, %v2070
      %2080 = vmatprep.subr.bf16.mxu0 0
      %2081 = vmatpush1.bf16.msra.mxu0 %v2072
      %2082 = vmatprep.subr.bf16.mxu0 0
      %2083 = vmatpush1.bf16.msra.mxu0 %v2073
      %2084 = vmatprep.subr.bf16.mxu0 0
      %2085 = vmatpush1.bf16.msra.mxu0 %v2074
      %2086 = vmatprep.subr.bf16.mxu0 0
      %2087 = vmatpush1.bf16.msra.mxu0 %v2075
      %2088 = vmatprep.subr.bf16.mxu0 0
      %2089 = vmatpush1.bf16.msra.mxu0 %v2076
      %2090 = vmatprep.subr.bf16.mxu0 0
      %2091 = vmatpush1.bf16.msra.mxu0 %v2077
      %2092 = vmatprep.subr.bf16.mxu0 0
      %2093 = vmatpush1.bf16.msra.mxu0 %v2078
      %2094 = vmatprep.subr.bf16.mxu0 0
      %2095 = vmatpush1.bf16.msra.mxu0 %v2079
      %2096 = vmatprep.subr.bf16.mxu0 0
      %2097 = vmatpush1.bf16.msra.mxu0 0
      %2098 = vmatprep.subr.bf16.mxu0 0
      %2099 = vmatpush1.bf16.msra.mxu0 0
      %2100 = vmatprep.subr.bf16.mxu0 0
      %2101 = vmatpush1.bf16.msra.mxu0 0
      %2102 = vmatprep.subr.bf16.mxu0 0
      %2103 = vmatpush1.bf16.msra.mxu0 0
      %2104 = vmatprep.subr.bf16.mxu0 0
      %2105 = vmatpush1.bf16.msra.mxu0 0
      %2106 = vmatprep.subr.bf16.mxu0 0
      %2107 = vmatpush1.bf16.msra.mxu0 0
      %2108 = vmatprep.subr.bf16.mxu0 0
      %2109 = vmatpush1.bf16.msra.mxu0 0
      %2110 = vmatprep.subr.bf16.mxu0 0
      %2111 = vmatpush1.bf16.msra.mxu0 0
      %2112 = vmatprep.mubr.bf16.mxu0 0
      %2113 = vmatmul.mubr.bf16.gmra.mrb[0].mxu0 %v702
      %v2114 = vpop.f32.mrb[0].mxu0
      %v2115 = vadd.f32 0.0, %v2114
      %v2116 = vpop.f32.mrb[0].mxu0
      %v2117 = vpop.f32.mrb[0].mxu0
      %v2118 = vpop.f32.mrb[0].mxu0
      %2119 = vdwg.mxu0
      %v2120 = vadd.f32 %v647, %v2115
      %v2121 = vmax.f32 %v2120, 0.0
      %v2122 = vmul.f32 %v2121, %v996
      %v2123 = vrot.slane %v2122, 4
      %v2124 = vadd.f32 %v2122, %v2123
      %v2125 = vrot.slane %v2124, 2
      %v2126 = vadd.f32 %v2124, %v2125
      %v2127 = vrot.slane %v2126, 1
      %v2128 = vadd.f32 %v2126, %v2127
      %v2129 = vlaneseq
      %v2130 = vshrl.u32 %v2129, 7
      %v2131 = vsub.s32 5, %v2130
      %v2132 = vrot.slane %v570, %v2131
      %vm2133 = vcmp.eq.s32.totalorder %v704, %v2132
      %vm2134 = vcmp.eq.s32.totalorder %v705, %v2132
      %vm2135 = vcmp.eq.s32.totalorder %v706, %v2132
      %vm2136 = vcmp.eq.s32.totalorder %v707, %v2132
      %vm2137 = vcmp.eq.s32.totalorder %v708, %v2132
      %vm2138 = vcmp.eq.s32.totalorder %v709, %v2132
      %vm2139 = vcmp.eq.s32.totalorder %v710, %v2132
      %vm2140 = vcmp.eq.s32.totalorder %v711, %v2132
      %vm2141 = vcmp.eq.s32.totalorder %v712, %v2132
      %vm2142 = vcmp.eq.s32.totalorder %v713, %v2132
      %vm2143 = vcmp.eq.s32.totalorder %v714, %v2132
      %vm2144 = vcmp.eq.s32.totalorder %v715, %v2132
      %vm2145 = vcmp.eq.s32.totalorder %v716, %v2132
      %vm2146 = vcmp.eq.s32.totalorder %v717, %v2132
      %vm2147 = vcmp.eq.s32.totalorder %v718, %v2132
      %vm2148 = vcmp.eq.s32.totalorder %v719, %v2132
      %v2149 = vlaneseq
      %v2150 = vshrl.u32 %v2149, 7
      %v2151 = vsub.s32 5, %v2150
      %v2152 = vrot.slane %v571, %v2151
      %v2153 = vsel %vm2133, %v2152, 0.0
      %v2154 = vsel %vm2134, %v2152, 0.0
      %v2155 = vsel %vm2135, %v2152, 0.0
      %v2156 = vsel %vm2136, %v2152, 0.0
      %v2157 = vsel %vm2137, %v2152, 0.0
      %v2158 = vsel %vm2138, %v2152, 0.0
      %v2159 = vsel %vm2139, %v2152, 0.0
      %v2160 = vsel %vm2140, %v2152, 0.0
      %v2161 = vsel %vm2141, %v2152, 0.0
      %v2162 = vsel %vm2142, %v2152, 0.0
      %v2163 = vsel %vm2143, %v2152, 0.0
      %v2164 = vsel %vm2144, %v2152, 0.0
      %v2165 = vsel %vm2145, %v2152, 0.0
      %v2166 = vsel %vm2146, %v2152, 0.0
      %v2167 = vsel %vm2147, %v2152, 0.0
      %v2168 = vsel %vm2148, %v2152, 0.0
      %v2169 = vadd.f32 %v2153, 0.0
      %v2170 = vadd.f32 %v2154, 0.0
      %v2171 = vadd.f32 %v2155, 0.0
      %v2172 = vadd.f32 %v2156, 0.0
      %v2173 = vadd.f32 %v2157, 0.0
      %v2174 = vadd.f32 %v2158, 0.0
      %v2175 = vadd.f32 %v2159, 0.0
      %v2176 = vadd.f32 %v2160, 0.0
      %v2177 = vadd.f32 %v2161, 0.0
      %v2178 = vadd.f32 %v2162, 0.0
      %v2179 = vadd.f32 %v2163, 0.0
      %v2180 = vadd.f32 %v2164, 0.0
      %v2181 = vadd.f32 %v2165, 0.0
      %v2182 = vadd.f32 %v2166, 0.0
      %v2183 = vadd.f32 %v2167, 0.0
      %v2184 = vadd.f32 %v2168, 0.0
      %v2185 = vlaneseq
      %v2186 = vshrl.u32 %v2185, 7
      %v2187 = vsub.s32 5, %v2186
      %v2188 = vrot.slane %v580, %v2187
      %vm2189 = vcmp.eq.s32.totalorder %v704, %v2188
      %vm2190 = vcmp.eq.s32.totalorder %v705, %v2188
      %vm2191 = vcmp.eq.s32.totalorder %v706, %v2188
      %vm2192 = vcmp.eq.s32.totalorder %v707, %v2188
      %vm2193 = vcmp.eq.s32.totalorder %v708, %v2188
      %vm2194 = vcmp.eq.s32.totalorder %v709, %v2188
      %vm2195 = vcmp.eq.s32.totalorder %v710, %v2188
      %vm2196 = vcmp.eq.s32.totalorder %v711, %v2188
      %vm2197 = vcmp.eq.s32.totalorder %v712, %v2188
      %vm2198 = vcmp.eq.s32.totalorder %v713, %v2188
      %vm2199 = vcmp.eq.s32.totalorder %v714, %v2188
      %vm2200 = vcmp.eq.s32.totalorder %v715, %v2188
      %vm2201 = vcmp.eq.s32.totalorder %v716, %v2188
      %vm2202 = vcmp.eq.s32.totalorder %v717, %v2188
      %vm2203 = vcmp.eq.s32.totalorder %v718, %v2188
      %vm2204 = vcmp.eq.s32.totalorder %v719, %v2188
      %v2205 = vlaneseq
      %v2206 = vshrl.u32 %v2205, 7
      %v2207 = vsub.s32 5, %v2206
      %v2208 = vrot.slane %v581, %v2207
      %v2209 = vsel %vm2189, %v2208, 0.0
      %v2210 = vsel %vm2190, %v2208, 0.0
      %v2211 = vsel %vm2191, %v2208, 0.0
      %v2212 = vsel %vm2192, %v2208, 0.0
      %v2213 = vsel %vm2193, %v2208, 0.0
      %v2214 = vsel %vm2194, %v2208, 0.0
      %v2215 = vsel %vm2195, %v2208, 0.0
      %v2216 = vsel %vm2196, %v2208, 0.0
      %v2217 = vsel %vm2197, %v2208, 0.0
      %v2218 = vsel %vm2198, %v2208, 0.0
      %v2219 = vsel %vm2199, %v2208, 0.0
      %v2220 = vsel %vm2200, %v2208, 0.0
      %v2221 = vsel %vm2201, %v2208, 0.0
      %v2222 = vsel %vm2202, %v2208, 0.0
      %v2223 = vsel %vm2203, %v2208, 0.0
      %v2224 = vsel %vm2204, %v2208, 0.0
      %v2225 = vadd.f32 %v2169, %v2209
      %v2226 = vadd.f32 %v2170, %v2210
      %v2227 = vadd.f32 %v2171, %v2211
      %v2228 = vadd.f32 %v2172, %v2212
      %v2229 = vadd.f32 %v2173, %v2213
      %v2230 = vadd.f32 %v2174, %v2214
      %v2231 = vadd.f32 %v2175, %v2215
      %v2232 = vadd.f32 %v2176, %v2216
      %v2233 = vadd.f32 %v2177, %v2217
      %v2234 = vadd.f32 %v2178, %v2218
      %v2235 = vadd.f32 %v2179, %v2219
      %v2236 = vadd.f32 %v2180, %v2220
      %v2237 = vadd.f32 %v2181, %v2221
      %v2238 = vadd.f32 %v2182, %v2222
      %v2239 = vadd.f32 %v2183, %v2223
      %v2240 = vadd.f32 %v2184, %v2224
      %v2241 = vlaneseq
      %v2242 = vshrl.u32 %v2241, 7
      %v2243 = vsub.s32 5, %v2242
      %v2244 = vrot.slane %v590, %v2243
      %vm2245 = vcmp.eq.s32.totalorder %v704, %v2244
      %vm2246 = vcmp.eq.s32.totalorder %v705, %v2244
      %vm2247 = vcmp.eq.s32.totalorder %v706, %v2244
      %vm2248 = vcmp.eq.s32.totalorder %v707, %v2244
      %vm2249 = vcmp.eq.s32.totalorder %v708, %v2244
      %vm2250 = vcmp.eq.s32.totalorder %v709, %v2244
      %vm2251 = vcmp.eq.s32.totalorder %v710, %v2244
      %vm2252 = vcmp.eq.s32.totalorder %v711, %v2244
      %vm2253 = vcmp.eq.s32.totalorder %v712, %v2244
      %vm2254 = vcmp.eq.s32.totalorder %v713, %v2244
      %vm2255 = vcmp.eq.s32.totalorder %v714, %v2244
      %vm2256 = vcmp.eq.s32.totalorder %v715, %v2244
      %vm2257 = vcmp.eq.s32.totalorder %v716, %v2244
      %vm2258 = vcmp.eq.s32.totalorder %v717, %v2244
      %vm2259 = vcmp.eq.s32.totalorder %v718, %v2244
      %vm2260 = vcmp.eq.s32.totalorder %v719, %v2244
      %v2261 = vlaneseq
      %v2262 = vshrl.u32 %v2261, 7
      %v2263 = vsub.s32 5, %v2262
      %v2264 = vrot.slane %v591, %v2263
      %v2265 = vsel %vm2245, %v2264, 0.0
      %v2266 = vsel %vm2246, %v2264, 0.0
      %v2267 = vsel %vm2247, %v2264, 0.0
      %v2268 = vsel %vm2248, %v2264, 0.0
      %v2269 = vsel %vm2249, %v2264, 0.0
      %v2270 = vsel %vm2250, %v2264, 0.0
      %v2271 = vsel %vm2251, %v2264, 0.0
      %v2272 = vsel %vm2252, %v2264, 0.0
      %v2273 = vsel %vm2253, %v2264, 0.0
      %v2274 = vsel %vm2254, %v2264, 0.0
      %v2275 = vsel %vm2255, %v2264, 0.0
      %v2276 = vsel %vm2256, %v2264, 0.0
      %v2277 = vsel %vm2257, %v2264, 0.0
      %v2278 = vsel %vm2258, %v2264, 0.0
      %v2279 = vsel %vm2259, %v2264, 0.0
      %v2280 = vsel %vm2260, %v2264, 0.0
      %v2281 = vadd.f32 %v2225, %v2265
      %v2282 = vadd.f32 %v2226, %v2266
      %v2283 = vadd.f32 %v2227, %v2267
      %v2284 = vadd.f32 %v2228, %v2268
      %v2285 = vadd.f32 %v2229, %v2269
      %v2286 = vadd.f32 %v2230, %v2270
      %v2287 = vadd.f32 %v2231, %v2271
      %v2288 = vadd.f32 %v2232, %v2272
      %v2289 = vadd.f32 %v2233, %v2273
      %v2290 = vadd.f32 %v2234, %v2274
      %v2291 = vadd.f32 %v2235, %v2275
      %v2292 = vadd.f32 %v2236, %v2276
      %v2293 = vadd.f32 %v2237, %v2277
      %v2294 = vadd.f32 %v2238, %v2278
      %v2295 = vadd.f32 %v2239, %v2279
      %v2296 = vadd.f32 %v2240, %v2280
      %v2297 = vlaneseq
      %v2298 = vshrl.u32 %v2297, 7
      %v2299 = vsub.s32 5, %v2298
      %v2300 = vrot.slane %v594, %v2299
      %vm2301 = vcmp.eq.s32.totalorder %v704, %v2300
      %vm2302 = vcmp.eq.s32.totalorder %v705, %v2300
      %vm2303 = vcmp.eq.s32.totalorder %v706, %v2300
      %vm2304 = vcmp.eq.s32.totalorder %v707, %v2300
      %vm2305 = vcmp.eq.s32.totalorder %v708, %v2300
      %vm2306 = vcmp.eq.s32.totalorder %v709, %v2300
      %vm2307 = vcmp.eq.s32.totalorder %v710, %v2300
      %vm2308 = vcmp.eq.s32.totalorder %v711, %v2300
      %vm2309 = vcmp.eq.s32.totalorder %v712, %v2300
      %vm2310 = vcmp.eq.s32.totalorder %v713, %v2300
      %vm2311 = vcmp.eq.s32.totalorder %v714, %v2300
      %vm2312 = vcmp.eq.s32.totalorder %v715, %v2300
      %vm2313 = vcmp.eq.s32.totalorder %v716, %v2300
      %vm2314 = vcmp.eq.s32.totalorder %v717, %v2300
      %vm2315 = vcmp.eq.s32.totalorder %v718, %v2300
      %vm2316 = vcmp.eq.s32.totalorder %v719, %v2300
      %v2317 = vlaneseq
      %v2318 = vshrl.u32 %v2317, 7
      %v2319 = vsub.s32 5, %v2318
      %v2320 = vrot.slane %v595, %v2319
      %v2321 = vsel %vm2301, %v2320, 0.0
      %v2322 = vsel %vm2302, %v2320, 0.0
      %v2323 = vsel %vm2303, %v2320, 0.0
      %v2324 = vsel %vm2304, %v2320, 0.0
      %v2325 = vsel %vm2305, %v2320, 0.0
      %v2326 = vsel %vm2306, %v2320, 0.0
      %v2327 = vsel %vm2307, %v2320, 0.0
      %v2328 = vsel %vm2308, %v2320, 0.0
      %v2329 = vsel %vm2309, %v2320, 0.0
      %v2330 = vsel %vm2310, %v2320, 0.0
      %v2331 = vsel %vm2311, %v2320, 0.0
      %v2332 = vsel %vm2312, %v2320, 0.0
      %v2333 = vsel %vm2313, %v2320, 0.0
      %v2334 = vsel %vm2314, %v2320, 0.0
      %v2335 = vsel %vm2315, %v2320, 0.0
      %v2336 = vsel %vm2316, %v2320, 0.0
      %v2337 = vadd.f32 %v2281, %v2321
      %v2338 = vadd.f32 %v2282, %v2322
      %v2339 = vadd.f32 %v2283, %v2323
      %v2340 = vadd.f32 %v2284, %v2324
      %v2341 = vadd.f32 %v2285, %v2325
      %v2342 = vadd.f32 %v2286, %v2326
      %v2343 = vadd.f32 %v2287, %v2327
      %v2344 = vadd.f32 %v2288, %v2328
      %v2345 = vadd.f32 %v2289, %v2329
      %v2346 = vadd.f32 %v2290, %v2330
      %v2347 = vadd.f32 %v2291, %v2331
      %v2348 = vadd.f32 %v2292, %v2332
      %v2349 = vadd.f32 %v2293, %v2333
      %v2350 = vadd.f32 %v2294, %v2334
      %v2351 = vadd.f32 %v2295, %v2335
      %v2352 = vadd.f32 %v2296, %v2336
      %v2353 = vpack.c.bf16 %v2338, %v2337
      %v2354 = vpack.c.bf16 %v2340, %v2339
      %v2355 = vpack.c.bf16 %v2342, %v2341
      %v2356 = vpack.c.bf16 %v2344, %v2343
      %v2357 = vpack.c.bf16 %v2346, %v2345
      %v2358 = vpack.c.bf16 %v2348, %v2347
      %v2359 = vpack.c.bf16 %v2350, %v2349
      %v2360 = vpack.c.bf16 %v2352, %v2351
      %2361 = vmatprep.subr.bf16.mxu0 0
      %2362 = vmatpush1.bf16.msra.mxu0 %v2353
      %2363 = vmatprep.subr.bf16.mxu0 0
      %2364 = vmatpush1.bf16.msra.mxu0 %v2354
      %2365 = vmatprep.subr.bf16.mxu0 0
      %2366 = vmatpush1.bf16.msra.mxu0 %v2355
      %2367 = vmatprep.subr.bf16.mxu0 0
      %2368 = vmatpush1.bf16.msra.mxu0 %v2356
      %2369 = vmatprep.subr.bf16.mxu0 0
      %2370 = vmatpush1.bf16.msra.mxu0 %v2357
      %2371 = vmatprep.subr.bf16.mxu0 0
      %2372 = vmatpush1.bf16.msra.mxu0 %v2358
      %2373 = vmatprep.subr.bf16.mxu0 0
      %2374 = vmatpush1.bf16.msra.mxu0 %v2359
      %2375 = vmatprep.subr.bf16.mxu0 0
      %2376 = vmatpush1.bf16.msra.mxu0 %v2360
      %2377 = vmatprep.subr.bf16.mxu0 0
      %2378 = vmatpush1.bf16.msra.mxu0 0
      %2379 = vmatprep.subr.bf16.mxu0 0
      %2380 = vmatpush1.bf16.msra.mxu0 0
      %2381 = vmatprep.subr.bf16.mxu0 0
      %2382 = vmatpush1.bf16.msra.mxu0 0
      %2383 = vmatprep.subr.bf16.mxu0 0
      %2384 = vmatpush1.bf16.msra.mxu0 0
      %2385 = vmatprep.subr.bf16.mxu0 0
      %2386 = vmatpush1.bf16.msra.mxu0 0
      %2387 = vmatprep.subr.bf16.mxu0 0
      %2388 = vmatpush1.bf16.msra.mxu0 0
      %2389 = vmatprep.subr.bf16.mxu0 0
      %2390 = vmatpush1.bf16.msra.mxu0 0
      %2391 = vmatprep.subr.bf16.mxu0 0
      %2392 = vmatpush1.bf16.msra.mxu0 0
      %2393 = vmatprep.mubr.bf16.mxu0 0
      %2394 = vmatmul.mubr.bf16.gmra.mrb[0].mxu0 %v702
      %v2395 = vpop.f32.mrb[0].mxu0
      %v2396 = vadd.f32 0.0, %v2395
      %v2397 = vpop.f32.mrb[0].mxu0
      %v2398 = vpop.f32.mrb[0].mxu0
      %v2399 = vpop.f32.mrb[0].mxu0
      %2400 = vdwg.mxu0
      %v2401 = vadd.f32 %v647, %v2396
      %v2402 = vmax.f32 %v2401, 0.0
      %v2403 = vmul.f32 %v2402, %v996
      %v2404 = vrot.slane %v2403, 4
      %v2405 = vadd.f32 %v2403, %v2404
      %v2406 = vrot.slane %v2405, 2
      %v2407 = vadd.f32 %v2405, %v2406
      %v2408 = vrot.slane %v2407, 1
      %v2409 = vadd.f32 %v2407, %v2408
      %v2410 = vlaneseq
      %v2411 = vshrl.u32 %v2410, 7
      %v2412 = vsub.s32 6, %v2411
      %v2413 = vrot.slane %v570, %v2412
      %vm2414 = vcmp.eq.s32.totalorder %v704, %v2413
      %vm2415 = vcmp.eq.s32.totalorder %v705, %v2413
      %vm2416 = vcmp.eq.s32.totalorder %v706, %v2413
      %vm2417 = vcmp.eq.s32.totalorder %v707, %v2413
      %vm2418 = vcmp.eq.s32.totalorder %v708, %v2413
      %vm2419 = vcmp.eq.s32.totalorder %v709, %v2413
      %vm2420 = vcmp.eq.s32.totalorder %v710, %v2413
      %vm2421 = vcmp.eq.s32.totalorder %v711, %v2413
      %vm2422 = vcmp.eq.s32.totalorder %v712, %v2413
      %vm2423 = vcmp.eq.s32.totalorder %v713, %v2413
      %vm2424 = vcmp.eq.s32.totalorder %v714, %v2413
      %vm2425 = vcmp.eq.s32.totalorder %v715, %v2413
      %vm2426 = vcmp.eq.s32.totalorder %v716, %v2413
      %vm2427 = vcmp.eq.s32.totalorder %v717, %v2413
      %vm2428 = vcmp.eq.s32.totalorder %v718, %v2413
      %vm2429 = vcmp.eq.s32.totalorder %v719, %v2413
      %v2430 = vlaneseq
      %v2431 = vshrl.u32 %v2430, 7
      %v2432 = vsub.s32 6, %v2431
      %v2433 = vrot.slane %v571, %v2432
      %v2434 = vsel %vm2414, %v2433, 0.0
      %v2435 = vsel %vm2415, %v2433, 0.0
      %v2436 = vsel %vm2416, %v2433, 0.0
      %v2437 = vsel %vm2417, %v2433, 0.0
      %v2438 = vsel %vm2418, %v2433, 0.0
      %v2439 = vsel %vm2419, %v2433, 0.0
      %v2440 = vsel %vm2420, %v2433, 0.0
      %v2441 = vsel %vm2421, %v2433, 0.0
      %v2442 = vsel %vm2422, %v2433, 0.0
      %v2443 = vsel %vm2423, %v2433, 0.0
      %v2444 = vsel %vm2424, %v2433, 0.0
      %v2445 = vsel %vm2425, %v2433, 0.0
      %v2446 = vsel %vm2426, %v2433, 0.0
      %v2447 = vsel %vm2427, %v2433, 0.0
      %v2448 = vsel %vm2428, %v2433, 0.0
      %v2449 = vsel %vm2429, %v2433, 0.0
      %v2450 = vadd.f32 %v2434, 0.0
      %v2451 = vadd.f32 %v2435, 0.0
      %v2452 = vadd.f32 %v2436, 0.0
      %v2453 = vadd.f32 %v2437, 0.0
      %v2454 = vadd.f32 %v2438, 0.0
      %v2455 = vadd.f32 %v2439, 0.0
      %v2456 = vadd.f32 %v2440, 0.0
      %v2457 = vadd.f32 %v2441, 0.0
      %v2458 = vadd.f32 %v2442, 0.0
      %v2459 = vadd.f32 %v2443, 0.0
      %v2460 = vadd.f32 %v2444, 0.0
      %v2461 = vadd.f32 %v2445, 0.0
      %v2462 = vadd.f32 %v2446, 0.0
      %v2463 = vadd.f32 %v2447, 0.0
      %v2464 = vadd.f32 %v2448, 0.0
      %v2465 = vadd.f32 %v2449, 0.0
      %v2466 = vlaneseq
      %v2467 = vshrl.u32 %v2466, 7
      %v2468 = vsub.s32 6, %v2467
      %v2469 = vrot.slane %v580, %v2468
      %vm2470 = vcmp.eq.s32.totalorder %v704, %v2469
      %vm2471 = vcmp.eq.s32.totalorder %v705, %v2469
      %vm2472 = vcmp.eq.s32.totalorder %v706, %v2469
      %vm2473 = vcmp.eq.s32.totalorder %v707, %v2469
      %vm2474 = vcmp.eq.s32.totalorder %v708, %v2469
      %vm2475 = vcmp.eq.s32.totalorder %v709, %v2469
      %vm2476 = vcmp.eq.s32.totalorder %v710, %v2469
      %vm2477 = vcmp.eq.s32.totalorder %v711, %v2469
      %vm2478 = vcmp.eq.s32.totalorder %v712, %v2469
      %vm2479 = vcmp.eq.s32.totalorder %v713, %v2469
      %vm2480 = vcmp.eq.s32.totalorder %v714, %v2469
      %vm2481 = vcmp.eq.s32.totalorder %v715, %v2469
      %vm2482 = vcmp.eq.s32.totalorder %v716, %v2469
      %vm2483 = vcmp.eq.s32.totalorder %v717, %v2469
      %vm2484 = vcmp.eq.s32.totalorder %v718, %v2469
      %vm2485 = vcmp.eq.s32.totalorder %v719, %v2469
      %v2486 = vlaneseq
      %v2487 = vshrl.u32 %v2486, 7
      %v2488 = vsub.s32 6, %v2487
      %v2489 = vrot.slane %v581, %v2488
      %v2490 = vsel %vm2470, %v2489, 0.0
      %v2491 = vsel %vm2471, %v2489, 0.0
      %v2492 = vsel %vm2472, %v2489, 0.0
      %v2493 = vsel %vm2473, %v2489, 0.0
      %v2494 = vsel %vm2474, %v2489, 0.0
      %v2495 = vsel %vm2475, %v2489, 0.0
      %v2496 = vsel %vm2476, %v2489, 0.0
      %v2497 = vsel %vm2477, %v2489, 0.0
      %v2498 = vsel %vm2478, %v2489, 0.0
      %v2499 = vsel %vm2479, %v2489, 0.0
      %v2500 = vsel %vm2480, %v2489, 0.0
      %v2501 = vsel %vm2481, %v2489, 0.0
      %v2502 = vsel %vm2482, %v2489, 0.0
      %v2503 = vsel %vm2483, %v2489, 0.0
      %v2504 = vsel %vm2484, %v2489, 0.0
      %v2505 = vsel %vm2485, %v2489, 0.0
      %v2506 = vadd.f32 %v2450, %v2490
      %v2507 = vadd.f32 %v2451, %v2491
      %v2508 = vadd.f32 %v2452, %v2492
      %v2509 = vadd.f32 %v2453, %v2493
      %v2510 = vadd.f32 %v2454, %v2494
      %v2511 = vadd.f32 %v2455, %v2495
      %v2512 = vadd.f32 %v2456, %v2496
      %v2513 = vadd.f32 %v2457, %v2497
      %v2514 = vadd.f32 %v2458, %v2498
      %v2515 = vadd.f32 %v2459, %v2499
      %v2516 = vadd.f32 %v2460, %v2500
      %v2517 = vadd.f32 %v2461, %v2501
      %v2518 = vadd.f32 %v2462, %v2502
      %v2519 = vadd.f32 %v2463, %v2503
      %v2520 = vadd.f32 %v2464, %v2504
      %v2521 = vadd.f32 %v2465, %v2505
      %v2522 = vlaneseq
      %v2523 = vshrl.u32 %v2522, 7
      %v2524 = vsub.s32 6, %v2523
      %v2525 = vrot.slane %v590, %v2524
      %vm2526 = vcmp.eq.s32.totalorder %v704, %v2525
      %vm2527 = vcmp.eq.s32.totalorder %v705, %v2525
      %vm2528 = vcmp.eq.s32.totalorder %v706, %v2525
      %vm2529 = vcmp.eq.s32.totalorder %v707, %v2525
      %vm2530 = vcmp.eq.s32.totalorder %v708, %v2525
      %vm2531 = vcmp.eq.s32.totalorder %v709, %v2525
      %vm2532 = vcmp.eq.s32.totalorder %v710, %v2525
      %vm2533 = vcmp.eq.s32.totalorder %v711, %v2525
      %vm2534 = vcmp.eq.s32.totalorder %v712, %v2525
      %vm2535 = vcmp.eq.s32.totalorder %v713, %v2525
      %vm2536 = vcmp.eq.s32.totalorder %v714, %v2525
      %vm2537 = vcmp.eq.s32.totalorder %v715, %v2525
      %vm2538 = vcmp.eq.s32.totalorder %v716, %v2525
      %vm2539 = vcmp.eq.s32.totalorder %v717, %v2525
      %vm2540 = vcmp.eq.s32.totalorder %v718, %v2525
      %vm2541 = vcmp.eq.s32.totalorder %v719, %v2525
      %v2542 = vlaneseq
      %v2543 = vshrl.u32 %v2542, 7
      %v2544 = vsub.s32 6, %v2543
      %v2545 = vrot.slane %v591, %v2544
      %v2546 = vsel %vm2526, %v2545, 0.0
      %v2547 = vsel %vm2527, %v2545, 0.0
      %v2548 = vsel %vm2528, %v2545, 0.0
      %v2549 = vsel %vm2529, %v2545, 0.0
      %v2550 = vsel %vm2530, %v2545, 0.0
      %v2551 = vsel %vm2531, %v2545, 0.0
      %v2552 = vsel %vm2532, %v2545, 0.0
      %v2553 = vsel %vm2533, %v2545, 0.0
      %v2554 = vsel %vm2534, %v2545, 0.0
      %v2555 = vsel %vm2535, %v2545, 0.0
      %v2556 = vsel %vm2536, %v2545, 0.0
      %v2557 = vsel %vm2537, %v2545, 0.0
      %v2558 = vsel %vm2538, %v2545, 0.0
      %v2559 = vsel %vm2539, %v2545, 0.0
      %v2560 = vsel %vm2540, %v2545, 0.0
      %v2561 = vsel %vm2541, %v2545, 0.0
      %v2562 = vadd.f32 %v2506, %v2546
      %v2563 = vadd.f32 %v2507, %v2547
      %v2564 = vadd.f32 %v2508, %v2548
      %v2565 = vadd.f32 %v2509, %v2549
      %v2566 = vadd.f32 %v2510, %v2550
      %v2567 = vadd.f32 %v2511, %v2551
      %v2568 = vadd.f32 %v2512, %v2552
      %v2569 = vadd.f32 %v2513, %v2553
      %v2570 = vadd.f32 %v2514, %v2554
      %v2571 = vadd.f32 %v2515, %v2555
      %v2572 = vadd.f32 %v2516, %v2556
      %v2573 = vadd.f32 %v2517, %v2557
      %v2574 = vadd.f32 %v2518, %v2558
      %v2575 = vadd.f32 %v2519, %v2559
      %v2576 = vadd.f32 %v2520, %v2560
      %v2577 = vadd.f32 %v2521, %v2561
      %v2578 = vlaneseq
      %v2579 = vshrl.u32 %v2578, 7
      %v2580 = vsub.s32 6, %v2579
      %v2581 = vrot.slane %v594, %v2580
      %vm2582 = vcmp.eq.s32.totalorder %v704, %v2581
      %vm2583 = vcmp.eq.s32.totalorder %v705, %v2581
      %vm2584 = vcmp.eq.s32.totalorder %v706, %v2581
      %vm2585 = vcmp.eq.s32.totalorder %v707, %v2581
      %vm2586 = vcmp.eq.s32.totalorder %v708, %v2581
      %vm2587 = vcmp.eq.s32.totalorder %v709, %v2581
      %vm2588 = vcmp.eq.s32.totalorder %v710, %v2581
      %vm2589 = vcmp.eq.s32.totalorder %v711, %v2581
      %vm2590 = vcmp.eq.s32.totalorder %v712, %v2581
      %vm2591 = vcmp.eq.s32.totalorder %v713, %v2581
      %vm2592 = vcmp.eq.s32.totalorder %v714, %v2581
      %vm2593 = vcmp.eq.s32.totalorder %v715, %v2581
      %vm2594 = vcmp.eq.s32.totalorder %v716, %v2581
      %vm2595 = vcmp.eq.s32.totalorder %v717, %v2581
      %vm2596 = vcmp.eq.s32.totalorder %v718, %v2581
      %vm2597 = vcmp.eq.s32.totalorder %v719, %v2581
      %v2598 = vlaneseq
      %v2599 = vshrl.u32 %v2598, 7
      %v2600 = vsub.s32 6, %v2599
      %v2601 = vrot.slane %v595, %v2600
      %v2602 = vsel %vm2582, %v2601, 0.0
      %v2603 = vsel %vm2583, %v2601, 0.0
      %v2604 = vsel %vm2584, %v2601, 0.0
      %v2605 = vsel %vm2585, %v2601, 0.0
      %v2606 = vsel %vm2586, %v2601, 0.0
      %v2607 = vsel %vm2587, %v2601, 0.0
      %v2608 = vsel %vm2588, %v2601, 0.0
      %v2609 = vsel %vm2589, %v2601, 0.0
      %v2610 = vsel %vm2590, %v2601, 0.0
      %v2611 = vsel %vm2591, %v2601, 0.0
      %v2612 = vsel %vm2592, %v2601, 0.0
      %v2613 = vsel %vm2593, %v2601, 0.0
      %v2614 = vsel %vm2594, %v2601, 0.0
      %v2615 = vsel %vm2595, %v2601, 0.0
      %v2616 = vsel %vm2596, %v2601, 0.0
      %v2617 = vsel %vm2597, %v2601, 0.0
      %v2618 = vadd.f32 %v2562, %v2602
      %v2619 = vadd.f32 %v2563, %v2603
      %v2620 = vadd.f32 %v2564, %v2604
      %v2621 = vadd.f32 %v2565, %v2605
      %v2622 = vadd.f32 %v2566, %v2606
      %v2623 = vadd.f32 %v2567, %v2607
      %v2624 = vadd.f32 %v2568, %v2608
      %v2625 = vadd.f32 %v2569, %v2609
      %v2626 = vadd.f32 %v2570, %v2610
      %v2627 = vadd.f32 %v2571, %v2611
      %v2628 = vadd.f32 %v2572, %v2612
      %v2629 = vadd.f32 %v2573, %v2613
      %v2630 = vadd.f32 %v2574, %v2614
      %v2631 = vadd.f32 %v2575, %v2615
      %v2632 = vadd.f32 %v2576, %v2616
      %v2633 = vadd.f32 %v2577, %v2617
      %v2634 = vpack.c.bf16 %v2619, %v2618
      %v2635 = vpack.c.bf16 %v2621, %v2620
      %v2636 = vpack.c.bf16 %v2623, %v2622
      %v2637 = vpack.c.bf16 %v2625, %v2624
      %v2638 = vpack.c.bf16 %v2627, %v2626
      %v2639 = vpack.c.bf16 %v2629, %v2628
      %v2640 = vpack.c.bf16 %v2631, %v2630
      %v2641 = vpack.c.bf16 %v2633, %v2632
      %2642 = vmatprep.subr.bf16.mxu0 0
      %2643 = vmatpush1.bf16.msra.mxu0 %v2634
      %2644 = vmatprep.subr.bf16.mxu0 0
      %2645 = vmatpush1.bf16.msra.mxu0 %v2635
      %2646 = vmatprep.subr.bf16.mxu0 0
      %2647 = vmatpush1.bf16.msra.mxu0 %v2636
      %2648 = vmatprep.subr.bf16.mxu0 0
      %2649 = vmatpush1.bf16.msra.mxu0 %v2637
      %2650 = vmatprep.subr.bf16.mxu0 0
      %2651 = vmatpush1.bf16.msra.mxu0 %v2638
      %2652 = vmatprep.subr.bf16.mxu0 0
      %2653 = vmatpush1.bf16.msra.mxu0 %v2639
      %2654 = vmatprep.subr.bf16.mxu0 0
      %2655 = vmatpush1.bf16.msra.mxu0 %v2640
      %2656 = vmatprep.subr.bf16.mxu0 0
      %2657 = vmatpush1.bf16.msra.mxu0 %v2641
      %2658 = vmatprep.subr.bf16.mxu0 0
      %2659 = vmatpush1.bf16.msra.mxu0 0
      %2660 = vmatprep.subr.bf16.mxu0 0
      %2661 = vmatpush1.bf16.msra.mxu0 0
      %2662 = vmatprep.subr.bf16.mxu0 0
      %2663 = vmatpush1.bf16.msra.mxu0 0
      %2664 = vmatprep.subr.bf16.mxu0 0
      %2665 = vmatpush1.bf16.msra.mxu0 0
      %2666 = vmatprep.subr.bf16.mxu0 0
      %2667 = vmatpush1.bf16.msra.mxu0 0
      %2668 = vmatprep.subr.bf16.mxu0 0
      %2669 = vmatpush1.bf16.msra.mxu0 0
      %2670 = vmatprep.subr.bf16.mxu0 0
      %2671 = vmatpush1.bf16.msra.mxu0 0
      %2672 = vmatprep.subr.bf16.mxu0 0
      %2673 = vmatpush1.bf16.msra.mxu0 0
      %2674 = vmatprep.mubr.bf16.mxu0 0
      %2675 = vmatmul.mubr.bf16.gmra.mrb[0].mxu0 %v702
      %v2676 = vpop.f32.mrb[0].mxu0
      %v2677 = vadd.f32 0.0, %v2676
      %v2678 = vpop.f32.mrb[0].mxu0
      %v2679 = vpop.f32.mrb[0].mxu0
      %v2680 = vpop.f32.mrb[0].mxu0
      %2681 = vdwg.mxu0
      %v2682 = vadd.f32 %v647, %v2677
      %v2683 = vmax.f32 %v2682, 0.0
      %v2684 = vmul.f32 %v2683, %v996
      %v2685 = vrot.slane %v2684, 4
      %v2686 = vadd.f32 %v2684, %v2685
      %v2687 = vrot.slane %v2686, 2
      %v2688 = vadd.f32 %v2686, %v2687
      %v2689 = vrot.slane %v2688, 1
      %v2690 = vadd.f32 %v2688, %v2689
      %v2691 = vlaneseq
      %v2692 = vshrl.u32 %v2691, 7
      %v2693 = vsub.s32 7, %v2692
      %v2694 = vrot.slane %v570, %v2693
      %vm2695 = vcmp.eq.s32.totalorder %v704, %v2694
      %vm2696 = vcmp.eq.s32.totalorder %v705, %v2694
      %vm2697 = vcmp.eq.s32.totalorder %v706, %v2694
      %vm2698 = vcmp.eq.s32.totalorder %v707, %v2694
      %vm2699 = vcmp.eq.s32.totalorder %v708, %v2694
      %vm2700 = vcmp.eq.s32.totalorder %v709, %v2694
      %vm2701 = vcmp.eq.s32.totalorder %v710, %v2694
      %vm2702 = vcmp.eq.s32.totalorder %v711, %v2694
      %vm2703 = vcmp.eq.s32.totalorder %v712, %v2694
      %vm2704 = vcmp.eq.s32.totalorder %v713, %v2694
      %vm2705 = vcmp.eq.s32.totalorder %v714, %v2694
      %vm2706 = vcmp.eq.s32.totalorder %v715, %v2694
      %vm2707 = vcmp.eq.s32.totalorder %v716, %v2694
      %vm2708 = vcmp.eq.s32.totalorder %v717, %v2694
      %vm2709 = vcmp.eq.s32.totalorder %v718, %v2694
      %vm2710 = vcmp.eq.s32.totalorder %v719, %v2694
      %v2711 = vlaneseq
      %v2712 = vshrl.u32 %v2711, 7
      %v2713 = vsub.s32 7, %v2712
      %v2714 = vrot.slane %v571, %v2713
      %v2715 = vsel %vm2695, %v2714, 0.0
      %v2716 = vsel %vm2696, %v2714, 0.0
      %v2717 = vsel %vm2697, %v2714, 0.0
      %v2718 = vsel %vm2698, %v2714, 0.0
      %v2719 = vsel %vm2699, %v2714, 0.0
      %v2720 = vsel %vm2700, %v2714, 0.0
      %v2721 = vsel %vm2701, %v2714, 0.0
      %v2722 = vsel %vm2702, %v2714, 0.0
      %v2723 = vsel %vm2703, %v2714, 0.0
      %v2724 = vsel %vm2704, %v2714, 0.0
      %v2725 = vsel %vm2705, %v2714, 0.0
      %v2726 = vsel %vm2706, %v2714, 0.0
      %v2727 = vsel %vm2707, %v2714, 0.0
      %v2728 = vsel %vm2708, %v2714, 0.0
      %v2729 = vsel %vm2709, %v2714, 0.0
      %v2730 = vsel %vm2710, %v2714, 0.0
      %v2731 = vadd.f32 %v2715, 0.0
      %v2732 = vadd.f32 %v2716, 0.0
      %v2733 = vadd.f32 %v2717, 0.0
      %v2734 = vadd.f32 %v2718, 0.0
      %v2735 = vadd.f32 %v2719, 0.0
      %v2736 = vadd.f32 %v2720, 0.0
      %v2737 = vadd.f32 %v2721, 0.0
      %v2738 = vadd.f32 %v2722, 0.0
      %v2739 = vadd.f32 %v2723, 0.0
      %v2740 = vadd.f32 %v2724, 0.0
      %v2741 = vadd.f32 %v2725, 0.0
      %v2742 = vadd.f32 %v2726, 0.0
      %v2743 = vadd.f32 %v2727, 0.0
      %v2744 = vadd.f32 %v2728, 0.0
      %v2745 = vadd.f32 %v2729, 0.0
      %v2746 = vadd.f32 %v2730, 0.0
      %v2747 = vlaneseq
      %v2748 = vshrl.u32 %v2747, 7
      %v2749 = vsub.s32 7, %v2748
      %v2750 = vrot.slane %v580, %v2749
      %vm2751 = vcmp.eq.s32.totalorder %v704, %v2750
      %vm2752 = vcmp.eq.s32.totalorder %v705, %v2750
      %vm2753 = vcmp.eq.s32.totalorder %v706, %v2750
      %vm2754 = vcmp.eq.s32.totalorder %v707, %v2750
      %vm2755 = vcmp.eq.s32.totalorder %v708, %v2750
      %vm2756 = vcmp.eq.s32.totalorder %v709, %v2750
      %vm2757 = vcmp.eq.s32.totalorder %v710, %v2750
      %vm2758 = vcmp.eq.s32.totalorder %v711, %v2750
      %vm2759 = vcmp.eq.s32.totalorder %v712, %v2750
      %vm2760 = vcmp.eq.s32.totalorder %v713, %v2750
      %vm2761 = vcmp.eq.s32.totalorder %v714, %v2750
      %vm2762 = vcmp.eq.s32.totalorder %v715, %v2750
      %vm2763 = vcmp.eq.s32.totalorder %v716, %v2750
      %vm2764 = vcmp.eq.s32.totalorder %v717, %v2750
      %vm2765 = vcmp.eq.s32.totalorder %v718, %v2750
      %vm2766 = vcmp.eq.s32.totalorder %v719, %v2750
      %v2767 = vlaneseq
      %v2768 = vshrl.u32 %v2767, 7
      %v2769 = vsub.s32 7, %v2768
      %v2770 = vrot.slane %v581, %v2769
      %v2771 = vsel %vm2751, %v2770, 0.0
      %v2772 = vsel %vm2752, %v2770, 0.0
      %v2773 = vsel %vm2753, %v2770, 0.0
      %v2774 = vsel %vm2754, %v2770, 0.0
      %v2775 = vsel %vm2755, %v2770, 0.0
      %v2776 = vsel %vm2756, %v2770, 0.0
      %v2777 = vsel %vm2757, %v2770, 0.0
      %v2778 = vsel %vm2758, %v2770, 0.0
      %v2779 = vsel %vm2759, %v2770, 0.0
      %v2780 = vsel %vm2760, %v2770, 0.0
      %v2781 = vsel %vm2761, %v2770, 0.0
      %v2782 = vsel %vm2762, %v2770, 0.0
      %v2783 = vsel %vm2763, %v2770, 0.0
      %v2784 = vsel %vm2764, %v2770, 0.0
      %v2785 = vsel %vm2765, %v2770, 0.0
      %v2786 = vsel %vm2766, %v2770, 0.0
      %v2787 = vadd.f32 %v2731, %v2771
      %v2788 = vadd.f32 %v2732, %v2772
      %v2789 = vadd.f32 %v2733, %v2773
      %v2790 = vadd.f32 %v2734, %v2774
      %v2791 = vadd.f32 %v2735, %v2775
      %v2792 = vadd.f32 %v2736, %v2776
      %v2793 = vadd.f32 %v2737, %v2777
      %v2794 = vadd.f32 %v2738, %v2778
      %v2795 = vadd.f32 %v2739, %v2779
      %v2796 = vadd.f32 %v2740, %v2780
      %v2797 = vadd.f32 %v2741, %v2781
      %v2798 = vadd.f32 %v2742, %v2782
      %v2799 = vadd.f32 %v2743, %v2783
      %v2800 = vadd.f32 %v2744, %v2784
      %v2801 = vadd.f32 %v2745, %v2785
      %v2802 = vadd.f32 %v2746, %v2786
      %v2803 = vlaneseq
      %v2804 = vshrl.u32 %v2803, 7
      %v2805 = vsub.s32 7, %v2804
      %v2806 = vrot.slane %v590, %v2805
      %vm2807 = vcmp.eq.s32.totalorder %v704, %v2806
      %vm2808 = vcmp.eq.s32.totalorder %v705, %v2806
      %vm2809 = vcmp.eq.s32.totalorder %v706, %v2806
      %vm2810 = vcmp.eq.s32.totalorder %v707, %v2806
      %vm2811 = vcmp.eq.s32.totalorder %v708, %v2806
      %vm2812 = vcmp.eq.s32.totalorder %v709, %v2806
      %vm2813 = vcmp.eq.s32.totalorder %v710, %v2806
      %vm2814 = vcmp.eq.s32.totalorder %v711, %v2806
      %vm2815 = vcmp.eq.s32.totalorder %v712, %v2806
      %vm2816 = vcmp.eq.s32.totalorder %v713, %v2806
      %vm2817 = vcmp.eq.s32.totalorder %v714, %v2806
      %vm2818 = vcmp.eq.s32.totalorder %v715, %v2806
      %vm2819 = vcmp.eq.s32.totalorder %v716, %v2806
      %vm2820 = vcmp.eq.s32.totalorder %v717, %v2806
      %vm2821 = vcmp.eq.s32.totalorder %v718, %v2806
      %vm2822 = vcmp.eq.s32.totalorder %v719, %v2806
      %v2823 = vlaneseq
      %v2824 = vshrl.u32 %v2823, 7
      %v2825 = vsub.s32 7, %v2824
      %v2826 = vrot.slane %v591, %v2825
      %v2827 = vsel %vm2807, %v2826, 0.0
      %v2828 = vsel %vm2808, %v2826, 0.0
      %v2829 = vsel %vm2809, %v2826, 0.0
      %v2830 = vsel %vm2810, %v2826, 0.0
      %v2831 = vsel %vm2811, %v2826, 0.0
      %v2832 = vsel %vm2812, %v2826, 0.0
      %v2833 = vsel %vm2813, %v2826, 0.0
      %v2834 = vsel %vm2814, %v2826, 0.0
      %v2835 = vsel %vm2815, %v2826, 0.0
      %v2836 = vsel %vm2816, %v2826, 0.0
      %v2837 = vsel %vm2817, %v2826, 0.0
      %v2838 = vsel %vm2818, %v2826, 0.0
      %v2839 = vsel %vm2819, %v2826, 0.0
      %v2840 = vsel %vm2820, %v2826, 0.0
      %v2841 = vsel %vm2821, %v2826, 0.0
      %v2842 = vsel %vm2822, %v2826, 0.0
      %v2843 = vadd.f32 %v2787, %v2827
      %v2844 = vadd.f32 %v2788, %v2828
      %v2845 = vadd.f32 %v2789, %v2829
      %v2846 = vadd.f32 %v2790, %v2830
      %v2847 = vadd.f32 %v2791, %v2831
      %v2848 = vadd.f32 %v2792, %v2832
      %v2849 = vadd.f32 %v2793, %v2833
      %v2850 = vadd.f32 %v2794, %v2834
      %v2851 = vadd.f32 %v2795, %v2835
      %v2852 = vadd.f32 %v2796, %v2836
      %v2853 = vadd.f32 %v2797, %v2837
      %v2854 = vadd.f32 %v2798, %v2838
      %v2855 = vadd.f32 %v2799, %v2839
      %v2856 = vadd.f32 %v2800, %v2840
      %v2857 = vadd.f32 %v2801, %v2841
      %v2858 = vadd.f32 %v2802, %v2842
      %v2859 = vlaneseq
      %v2860 = vshrl.u32 %v2859, 7
      %v2861 = vsub.s32 7, %v2860
      %v2862 = vrot.slane %v594, %v2861
      %vm2863 = vcmp.eq.s32.totalorder %v704, %v2862
      %vm2864 = vcmp.eq.s32.totalorder %v705, %v2862
      %vm2865 = vcmp.eq.s32.totalorder %v706, %v2862
      %vm2866 = vcmp.eq.s32.totalorder %v707, %v2862
      %vm2867 = vcmp.eq.s32.totalorder %v708, %v2862
      %vm2868 = vcmp.eq.s32.totalorder %v709, %v2862
      %vm2869 = vcmp.eq.s32.totalorder %v710, %v2862
      %vm2870 = vcmp.eq.s32.totalorder %v711, %v2862
      %vm2871 = vcmp.eq.s32.totalorder %v712, %v2862
      %vm2872 = vcmp.eq.s32.totalorder %v713, %v2862
      %vm2873 = vcmp.eq.s32.totalorder %v714, %v2862
      %vm2874 = vcmp.eq.s32.totalorder %v715, %v2862
      %vm2875 = vcmp.eq.s32.totalorder %v716, %v2862
      %vm2876 = vcmp.eq.s32.totalorder %v717, %v2862
      %vm2877 = vcmp.eq.s32.totalorder %v718, %v2862
      %vm2878 = vcmp.eq.s32.totalorder %v719, %v2862
      %v2879 = vlaneseq
      %v2880 = vshrl.u32 %v2879, 7
      %v2881 = vsub.s32 7, %v2880
      %v2882 = vrot.slane %v595, %v2881
      %v2883 = vsel %vm2863, %v2882, 0.0
      %v2884 = vsel %vm2864, %v2882, 0.0
      %v2885 = vsel %vm2865, %v2882, 0.0
      %v2886 = vsel %vm2866, %v2882, 0.0
      %v2887 = vsel %vm2867, %v2882, 0.0
      %v2888 = vsel %vm2868, %v2882, 0.0
      %v2889 = vsel %vm2869, %v2882, 0.0
      %v2890 = vsel %vm2870, %v2882, 0.0
      %v2891 = vsel %vm2871, %v2882, 0.0
      %v2892 = vsel %vm2872, %v2882, 0.0
      %v2893 = vsel %vm2873, %v2882, 0.0
      %v2894 = vsel %vm2874, %v2882, 0.0
      %v2895 = vsel %vm2875, %v2882, 0.0
      %v2896 = vsel %vm2876, %v2882, 0.0
      %v2897 = vsel %vm2877, %v2882, 0.0
      %v2898 = vsel %vm2878, %v2882, 0.0
      %v2899 = vadd.f32 %v2843, %v2883
      %v2900 = vadd.f32 %v2844, %v2884
      %v2901 = vadd.f32 %v2845, %v2885
      %v2902 = vadd.f32 %v2846, %v2886
      %v2903 = vadd.f32 %v2847, %v2887
      %v2904 = vadd.f32 %v2848, %v2888
      %v2905 = vadd.f32 %v2849, %v2889
      %v2906 = vadd.f32 %v2850, %v2890
      %v2907 = vadd.f32 %v2851, %v2891
      %v2908 = vadd.f32 %v2852, %v2892
      %v2909 = vadd.f32 %v2853, %v2893
      %v2910 = vadd.f32 %v2854, %v2894
      %v2911 = vadd.f32 %v2855, %v2895
      %v2912 = vadd.f32 %v2856, %v2896
      %v2913 = vadd.f32 %v2857, %v2897
      %v2914 = vadd.f32 %v2858, %v2898
      %v2915 = vpack.c.bf16 %v2900, %v2899
      %v2916 = vpack.c.bf16 %v2902, %v2901
      %v2917 = vpack.c.bf16 %v2904, %v2903
      %v2918 = vpack.c.bf16 %v2906, %v2905
      %v2919 = vpack.c.bf16 %v2908, %v2907
      %v2920 = vpack.c.bf16 %v2910, %v2909
      %v2921 = vpack.c.bf16 %v2912, %v2911
      %v2922 = vpack.c.bf16 %v2914, %v2913
      %2923 = vmatprep.subr.bf16.mxu0 0
      %2924 = vmatpush1.bf16.msra.mxu0 %v2915
      %2925 = vmatprep.subr.bf16.mxu0 0
      %2926 = vmatpush1.bf16.msra.mxu0 %v2916
      %2927 = vmatprep.subr.bf16.mxu0 0
      %2928 = vmatpush1.bf16.msra.mxu0 %v2917
      %2929 = vmatprep.subr.bf16.mxu0 0
      %2930 = vmatpush1.bf16.msra.mxu0 %v2918
      %2931 = vmatprep.subr.bf16.mxu0 0
      %2932 = vmatpush1.bf16.msra.mxu0 %v2919
      %2933 = vmatprep.subr.bf16.mxu0 0
      %2934 = vmatpush1.bf16.msra.mxu0 %v2920
      %2935 = vmatprep.subr.bf16.mxu0 0
      %2936 = vmatpush1.bf16.msra.mxu0 %v2921
      %2937 = vmatprep.subr.bf16.mxu0 0
      %2938 = vmatpush1.bf16.msra.mxu0 %v2922
      %2939 = vmatprep.subr.bf16.mxu0 0
      %2940 = vmatpush1.bf16.msra.mxu0 0
      %2941 = vmatprep.subr.bf16.mxu0 0
      %2942 = vmatpush1.bf16.msra.mxu0 0
      %2943 = vmatprep.subr.bf16.mxu0 0
      %2944 = vmatpush1.bf16.msra.mxu0 0
      %2945 = vmatprep.subr.bf16.mxu0 0
      %2946 = vmatpush1.bf16.msra.mxu0 0
      %2947 = vmatprep.subr.bf16.mxu0 0
      %2948 = vmatpush1.bf16.msra.mxu0 0
      %2949 = vmatprep.subr.bf16.mxu0 0
      %2950 = vmatpush1.bf16.msra.mxu0 0
      %2951 = vmatprep.subr.bf16.mxu0 0
      %2952 = vmatpush1.bf16.msra.mxu0 0
      %2953 = vmatprep.subr.bf16.mxu0 0
      %2954 = vmatpush1.bf16.msra.mxu0 0
      %2955 = vmatprep.mubr.bf16.mxu0 0
      %2956 = vmatmul.mubr.bf16.gmra.mrb[0].mxu0 %v702
      %v2957 = vpop.f32.mrb[0].mxu0
      %v2958 = vadd.f32 0.0, %v2957
      %v2959 = vpop.f32.mrb[0].mxu0
      %v2960 = vpop.f32.mrb[0].mxu0
      %v2961 = vpop.f32.mrb[0].mxu0
      %2962 = vdwg.mxu0
      %v2963 = vadd.f32 %v647, %v2958
      %v2964 = vmax.f32 %v2963, 0.0
      %v2965 = vmul.f32 %v2964, %v996
      %v2966 = vrot.slane %v2965, 4
      %v2967 = vadd.f32 %v2965, %v2966
      %v2968 = vrot.slane %v2967, 2
      %v2969 = vadd.f32 %v2967, %v2968
      %v2970 = vrot.slane %v2969, 1
      %v2971 = vadd.f32 %v2969, %v2970
      %vm2972 = vcmask 1040384
      %v2973 = vsel %vm2972, %v1004, %v1285
      %v2974 = vsel %vm608, %v2973, %v1566
      %vm2975 = vcmask 1042432
      %v2976 = vsel %vm2975, %v2974, %v1847
      %vm2977 = vcmask 1043456
      %v2978 = vsel %vm2977, %v2976, %v2128
      %v2979 = vsel %vm343, %v2978, %v2409
      %v2980 = vsel %vm344, %v2979, %v2690
      %vm2981 = vcmask 1046528
      %v2982 = vsel %vm2981, %v2980, %v2971
      %2983 = vrot.lane.b32.xlu0 %v596, 118
      %v2984 = vpop.permute.xlu0 %2983
      %s2985 = vtos %v2984
      %v2986 = vstv %s2985
      %v2988 = vadd.f32 %v2982, %v2986
      %v2989 = vld [vmem:[%s6] sm:$0xff]
      %v2990 = vrot.slane %v2988, 4
      %v2991 = vmax.f32 %v2988, %v2990
      %v2992 = vrot.slane %v2991, 2
      %v2993 = vmax.f32 %v2991, %v2992
      %v2994 = vrot.slane %v2993, 1
      %v2995 = vmax.f32 %v2993, %v2994
      %v2996 = vsub.f32 %v2988, %v2995
      %v2997 = vmul.f32 %v2996, 1.442695
      %v2998 = vpow.pop %v2997
      %3000 = vset.pattern.permute.xlu0 0
      %3001 = vperm.xlu0 %3000, %v2989
      %v3002 = vpop.permute.xlu0 %3001
      %v3004 = vmul.f32 %v2998, %v3002
      %v3005 = vrot.slane %v3004, 4
      %v3006 = vadd.f32 %v3004, %v3005
      %v3007 = vrot.slane %v3006, 2
      %v3008 = vadd.f32 %v3006, %v3007
      %v3009 = vrot.slane %v3008, 1
      %v3010 = vadd.f32 %v3008, %v3009
      %v3011 = vrot.slane %v2998, 4
      %v3012 = vadd.f32 %v2998, %v3011
      %v3013 = vrot.slane %v3012, 2
      %v3014 = vadd.f32 %v3012, %v3013
      %v3015 = vrot.slane %v3014, 1
      %v3016 = vadd.f32 %v3014, %v3015
      %v3017 = vrcp.pop %v3016
      %v3018 = vmul.f32 %v3010, %v3017
      %3019 = vst [vmem:[%s308] sm:$0x1] %v3018
      %p3020 = scmp.lt.s32.totalorder %s18, 1
      %s3021 = scalar_select %p3020, %s18, 1
      %s3022 = scalar_lea.vmem %s7, %s3021
      // Predicated region
      $region49: #{forward.1} parent=47 // pred_check
        %p3023 = pneg %p198
      $region50: #{forward.1} parent=47 // pred_check_branch
        %3025 = sbr.rel (%p3023) target = $region52
      $region51: #{forward.1} parent=47 // pred_region
        _
      $region52: #{forward.1} parent=47 // pred_fallthru
        _
    $region48: #{forward.1} parent=5 // pred_fallthru
      _
    %p3026 = scmp.le.s32.totalorder 2, %s13
    // Predicated region
    $region53: #{forward.1} parent=5 // pred_check
      %p3027 = pneg %p3026
    $region54: #{forward.1} parent=5 // pred_check_branch
      %3029 = sbr.rel (%p3027) target = $region56
    $region55: #{forward.1} parent=5 // pred_region
      %s3030 = ssub.s32 %s13, 2
      // Predicated region
      $region57: #{forward.1} parent=55 // pred_check
        %p3031 = pneg %p204
      $region58: #{forward.1} parent=55 // pred_check_branch
        %3033 = sbr.rel (%p3031) target = $region60
      $region59: #{forward.1} parent=55 // pred_region
        %p3034 = scmp.lt.s32.totalorder %s19, 1
        %s3035 = scalar_select %p3034, %s19, 1
        %s3036 = scalar_lea.vmem %s7, %s3035
      $region60: #{forward.1} parent=55 // pred_fallthru
        _
    $region56: #{forward.1} parent=5 // pred_fallthru
      _
  $region6: #{forward.1} parent=0 // loop_footer
    %s17 = sadd.s32 1, %s13
  $region7: #{forward.1} parent=0 // loop_footer_branch
    %12 = sbr.rel target = $region3
  $region8: #{forward.1} parent=0 // loop_exit
    _

</llo_original>
